<compile_context>
chip_gen: v7x
topology: tpu7x:2x2x1
jax: 0.10.0
libtpu: 0.0.40
codegen_flags: <defaults>
</compile_context>

<pallas_src>
import functools

import jax
import jax.numpy as jnp
from jax.experimental import pallas as pl
from jax.experimental.pallas import tpu as pltpu  # noqa: F401  (kept for clarity)

IN_DIM = 64            # in_dim == out_dim so the type classifier (built with
OUT_DIM = 64           # input_dim=in_dim) can consume the out_dim-sized tokens.
FOURIER_FREQS = 8
MAX_INTERACTIONS = 30
POSITION_DIM = FOURIER_FREQS * 2 * 4     # 64
D_IN = IN_DIM + POSITION_DIM             # 128
HIDDEN = 512
CLS_HIDDEN = 64

# Row offsets inside the packed slabs (per branch; branch 0 = shared
# `linears`/O_cls, branch 1 = `linear_action`/A_cls).
_WIDE_ROWS = D_IN + HIDDEN               # 640  rows of [w1; w2]
_NARROW_ROWS = HIDDEN + 2 * CLS_HIDDEN   # 640  rows of [w3; cls_w1; cls_w2(pad)]
_BIAS_ROWS = 5                           # [b1, b2, b3, cls_b1, cls_b2]
_POS_ROW0 = 2 * _BIAS_ROWS               # consts row index of position_emb[0]


# ---------------------------------------------------------------------------
# Fused kernel
# ---------------------------------------------------------------------------
def _fused_kernel(x_ref, e_ref, ww_ref, wn_ref, c_ref, out_ref, *, mp):
    """Fused 3-layer MLP (+embedding add) + O_cls classifier + label-gated
    position-embedding add, for all three token categories in one shot.

    Row layout (each segment zero-padded to `mp` rows):
      [0     ,   mp)  subject rows   (shared `linears` / O_cls weights)
      [mp    , 2*mp)  object  rows   (shared `linears` / O_cls weights)
      [2*mp  , 3*mp)  action  rows   (`linear_action` weights)
    """
    f32 = jnp.float32
    bf16 = jnp.bfloat16

    def silu(h):  # f32 VPU/EUP math (v5e has no bf16 VPU/EUP)
        return h * (0.5 * (jnp.tanh(0.5 * h) + 1.0))

    def mlp(x, w_off, n_off, b_off):
        h = jnp.dot(x, ww_ref[w_off:w_off + D_IN, :], preferred_element_type=f32)
        h = silu(h + c_ref[b_off:b_off + 1, :]).astype(bf16)
        h = jnp.dot(h, ww_ref[w_off + D_IN:w_off + D_IN + HIDDEN, :],
                    preferred_element_type=f32)
        h = silu(h + c_ref[b_off + 1:b_off + 2, :]).astype(bf16)
        o = jnp.dot(h, wn_ref[n_off:n_off + HIDDEN, :], preferred_element_type=f32)
        return o + c_ref[b_off + 2:b_off + 3, 0:OUT_DIM]

    pos0 = c_ref[_POS_ROW0 + 0:_POS_ROW0 + 1, 0:OUT_DIM]
    pos1 = c_ref[_POS_ROW0 + 1:_POS_ROW0 + 2, 0:OUT_DIM]
    pos2 = c_ref[_POS_ROW0 + 2:_POS_ROW0 + 3, 0:OUT_DIM]

    # ---------------- shared-weight branch: subject + object rows ------------
    r_so = 2 * mp
    o = mlp(x_ref[0:r_so, :], 0, 0, 0) + e_ref[0:r_so, :]

    # O_cls classifier (logits live in lanes 0:2 of the zero-padded head).
    cl = jnp.dot(o.astype(bf16), wn_ref[HIDDEN:HIDDEN + CLS_HIDDEN, :],
                 preferred_element_type=f32) + c_ref[3:4, 0:CLS_HIDDEN]
    cl = jnp.maximum(cl, 0.0).astype(bf16)
    cl = jnp.dot(cl, wn_ref[HIDDEN + CLS_HIDDEN:_NARROW_ROWS, :],
                 preferred_element_type=f32) + c_ref[4:5, 0:CLS_HIDDEN]

    # Label-gated position add (reference semantics require N == 2):
    # row (b, n) receives position_emb[argmax_k logit[b, k, n]].
    # The partner row (b, 1-n) is fetched with an exact pair-swap permutation
    # matmul (tiny, MXU; avoids awkward cross-sublane ops).
    ri = jax.lax.broadcasted_iota(jnp.int32, (r_so, r_so), 0)
    ci = jax.lax.broadcasted_iota(jnp.int32, (r_so, r_so), 1)
    partner = ri + 1 - 2 * (ri % 2)
    swap = (ci == partner).astype(f32)
    other = jnp.dot(swap, cl, preferred_element_type=f32)     # partner-row logits

    odd = (jax.lax.broadcasted_iota(jnp.int32, (r_so, OUT_DIM), 0)[:, 0:1] % 2) == 1
    this_n = jnp.where(odd, cl[:, 1:2], cl[:, 0:1])           # logit[b, n,   n]
    other_n = jnp.where(odd, other[:, 1:2], other[:, 0:1])    # logit[b, 1-n, n]
    hi = jnp.where(odd, this_n, other_n)                      # logit[b, 1, n]
    lo = jnp.where(odd, other_n, this_n)                      # logit[b, 0, n]
    o = o + jnp.where(hi > lo, pos1, pos0)
    out_ref[0:r_so, :] = o

    # ---------------- action branch ------------------------------------------
    oa = (mlp(x_ref[r_so:3 * mp, :], _WIDE_ROWS, _NARROW_ROWS, _BIAS_ROWS)
          + e_ref[r_so:3 * mp, :])
    # TODO(synk): the reference adds position_emb[argmax(A_cls)+2]; index 3 is
    # out of range for the size-3 table (PyTorch would raise, JAX clamps), so
    # under clamp semantics this is always +position_emb[2] and the A_cls
    # logits cannot affect the output; the classifier compute is skipped here
    # (its weights are still packed for layout symmetry).
    out_ref[r_so:3 * mp, :] = oa + pos2


def _call_fused_kernel(x, e, w_wide, w_narrow, consts):
    """x: [3, M, D_IN] f32, e: [3, M, OUT_DIM] f32.  Returns ([3*mp, 64] f32, mp)."""
    _, m, _ = x.shape
    mp = max(16, -(-m // 16) * 16)         # bf16 sublane packing: 16 rows / vreg
    pad = mp - m
    xp = jnp.pad(x, ((0, 0), (0, pad), (0, 0))).astype(jnp.bfloat16).reshape(3 * mp, D_IN)
    ep = jnp.pad(e, ((0, 0), (0, pad), (0, 0))).astype(jnp.float32).reshape(3 * mp, OUT_DIM)

    r_so, r_a = 2 * mp, mp
    mm = D_IN * HIDDEN + HIDDEN * HIDDEN + HIDDEN * OUT_DIM
    flops = 2 * ((r_so + r_a) * mm
                 + r_so * (OUT_DIM * CLS_HIDDEN + CLS_HIDDEN * CLS_HIDDEN)
                 + r_so * r_so * CLS_HIDDEN)
    transcendentals = (r_so + r_a) * HIDDEN * 2
    operands = (xp, ep, w_wide, w_narrow, consts)
    bytes_accessed = int(sum(int(a.size) * a.dtype.itemsize for a in operands)
                         + 3 * mp * OUT_DIM * 4)

    out = pl.pallas_call(
        functools.partial(_fused_kernel, mp=mp),
        out_shape=jax.ShapeDtypeStruct((3 * mp, OUT_DIM), jnp.float32),
        cost_estimate=pl.CostEstimate(flops=int(flops),
                                      transcendentals=int(transcendentals),
                                      bytes_accessed=bytes_accessed),
    )(*operands)
    return out, mp


# ---------------------------------------------------------------------------
# One-time parameter packing (outside the hot path)
# ---------------------------------------------------------------------------
def _pad_cols(a, width):
    out = jnp.zeros(a.shape[:-1] + (width,), a.dtype)
    return out.at[..., :a.shape[-1]].set(a)


def pack_params(params):
    """Pack module parameters into the kernel's slab layout: bf16 matmul
    weights, f32 biases/consts.  Called once; nothing here runs per forward."""
    def branch(lin, cls):
        w1, b1, w2, b2, w3, b3 = lin
        cw1, cb1, cw2, cb2 = cls
        wide = jnp.concatenate([w1, w2], axis=0).astype(jnp.bfloat16)            # [640, 512]
        narrow = jnp.concatenate(
            [w3, cw1, _pad_cols(cw2, CLS_HIDDEN)], axis=0).astype(jnp.bfloat16)  # [640, 64]
        bias = jnp.stack([
            b1.astype(jnp.float32),
            b2.astype(jnp.float32),
            _pad_cols(b3.astype(jnp.float32), HIDDEN),
            _pad_cols(cb1.astype(jnp.float32), HIDDEN),
            _pad_cols(cb2.astype(jnp.float32), HIDDEN),
        ], axis=0)                                                               # [5, 512]
        return wide, narrow, bias

    wide_o, nar_o, bias_o = branch(params["linears"], params["O_cls"])
    wide_a, nar_a, bias_a = branch(params["linear_action"], params["A_cls"])
    pos = _pad_cols(params["position_emb"].astype(jnp.float32), HIDDEN)          # [3, 512]
    consts = jnp.concatenate(
        [bias_o, bias_a, pos, jnp.zeros((3, HIDDEN), jnp.float32)], axis=0)      # [16, 512]
    return {
        "w_wide": jnp.concatenate([wide_o, wide_a], axis=0),     # [1280, 512] bf16
        "w_narrow": jnp.concatenate([nar_o, nar_a], axis=0),     # [1280,  64] bf16
        "consts": consts,                                        # [  16, 512] f32
        "interaction_emb": params["interaction_emb"].astype(jnp.float32),
        "position_emb": params["position_emb"].astype(jnp.float32),
        "null_positive": params["null_positive"].astype(jnp.float32),
        "null_action": params["null_action"].astype(jnp.float32),
        "null_position": params["null_position"].astype(jnp.float32),
    }


# ---------------------------------------------------------------------------
# Plain-JAX glue reproducing the PyTorch forward semantics (batched over the
# three token categories to keep XLA op count low).
# ---------------------------------------------------------------------------
def fourier_embed(x, num_freqs=FOURIER_FREQS, temperature=100.0):
    # GLIGEN FourierEmbedder: cat over freqs of [sin(f*x), cos(f*x)] on dim=-1.
    freqs = temperature ** (jnp.arange(num_freqs, dtype=jnp.float32) / num_freqs)
    ang = x[..., None, :] * freqs[:, None]                    # [..., nf, 4]
    emb = jnp.stack([jnp.sin(ang), jnp.cos(ang)], axis=-2)    # [..., nf, 2, 4]
    return emb.reshape(*x.shape[:-1], num_freqs * 2 * x.shape[-1])


def get_between_box(b1, b2):
    all_x = jnp.concatenate([b1[..., 0::2], b2[..., 0::2]], axis=-1)
    all_y = jnp.concatenate([b1[..., 1::2], b2[..., 1::2]], axis=-1)
    all_x = jnp.sort(all_x, axis=-1)
    all_y = jnp.sort(all_y, axis=-1)
    return jnp.stack([all_x[..., 1], all_y[..., 1],
                      all_x[..., 2], all_y[..., 2]], axis=-1)


def hoi_position_net_v5(packed, subject_boxes, object_boxes, masks,
                        subject_pos_emb, object_pos_emb, action_pos_emb):
    B, N, _ = subject_boxes.shape
    assert N == 2, "reference epilogue (argmax-over-N label broadcast) requires N == 2"
    M = B * N
    m = masks[..., None].astype(jnp.float32)                               # [B, N, 1]

    # ---- prologue: category order [subject, object, action] ----
    action_boxes = get_between_box(subject_boxes, object_boxes)
    boxes = jnp.stack([subject_boxes, object_boxes, action_boxes], axis=0)  # [3,B,N,4]
    xyxy = fourier_embed(boxes)                                             # [3,B,N,64]
    xyxy = xyxy * m + (1.0 - m) * packed["null_position"]

    feats = jnp.stack([subject_pos_emb, object_pos_emb, action_pos_emb], 0)  # [3,B,N,64]
    nulls = jnp.stack([packed["null_positive"], packed["null_positive"],
                       packed["null_action"]], axis=0)[:, None, None, :]
    feats = feats * m + (1.0 - m) * nulls

    x = jnp.concatenate([feats, xyxy], axis=-1).reshape(3, M, D_IN)

    # interaction embedding + per-category position embedding (indices 0,1,2);
    # AbsolutePositionalEmbedding treated as a plain nn.Embedding lookup.
    e = (packed["interaction_emb"][:N][None, None]
         + packed["position_emb"][:, None, None, :])                        # [3,1,N,64]
    e = jnp.broadcast_to(e, (3, B, N, OUT_DIM)).reshape(3, M, OUT_DIM)

    out, mp = _call_fused_kernel(x, e, packed["w_wide"], packed["w_narrow"],
                                 packed["consts"])

    # ---- epilogue: classifier/label/position add already done in-kernel ----
    objs_sub = out[0:M].reshape(B, N, OUT_DIM)
    objs_obj = out[mp:mp + M].reshape(B, N, OUT_DIM)
    objs_act = out[2 * mp:2 * mp + M].reshape(B, N, OUT_DIM)
    objs = jnp.concatenate([objs_sub, objs_act, objs_obj], axis=1)
    assert objs.shape == (B, N * 3, OUT_DIM)
    return objs


# ---------------------------------------------------------------------------
# Deterministic synthetic parameters (raw, module-like, f32).
# ---------------------------------------------------------------------------
def init_params(key):
    ks = iter(jax.random.split(key, 32))

    def lin(fan_in, fan_out):
        w = jax.random.normal(next(ks), (fan_in, fan_out), jnp.float32) * 0.02
        b = jax.random.normal(next(ks), (fan_out,), jnp.float32) * 0.02
        return w, b

    def mlp3():
        w1, b1 = lin(D_IN, HIDDEN)
        w2, b2 = lin(HIDDEN, HIDDEN)
        w3, b3 = lin(HIDDEN, OUT_DIM)
        return (w1, b1, w2, b2, w3, b3)

    def cls():
        w1, b1 = lin(OUT_DIM, CLS_HIDDEN)   # classifier input_dim = in_dim (= out_dim)
        w2, b2 = lin(CLS_HIDDEN, 2)
        return (w1, b1, w2, b2)

    return {
        "linears": mlp3(),
        "linear_action": mlp3(),
        "O_cls": cls(),
        "A_cls": cls(),
        "interaction_emb": jax.random.normal(next(ks), (MAX_INTERACTIONS, OUT_DIM),
                                             jnp.float32) * 0.02,
        "position_emb": jax.random.normal(next(ks), (3, OUT_DIM), jnp.float32) * 0.02,
        "null_positive": jnp.zeros((IN_DIM,), jnp.float32),
        "null_action": jnp.zeros((IN_DIM,), jnp.float32),
        "null_position": jnp.zeros((POSITION_DIM,), jnp.float32),
    }


if __name__ == "__main__":
    key = jax.random.PRNGKey(0)
    kp, k1, k2, k3, k4, k5, k6 = jax.random.split(key, 7)

    B, N = 2, 2   # N must be 2 for the reference module's broadcast to be valid
    raw_params = init_params(kp)
    packed = pack_params(raw_params)   # one-time weight packing (not in the hot path)

    subject_boxes = jax.random.uniform(k1, (B, N, 4), jnp.float32)
    object_boxes = jax.random.uniform(k2, (B, N, 4), jnp.float32)
    masks = (jax.random.uniform(k3, (B, N)) > 0.3).astype(jnp.float32)
    subject_pos_emb = jax.random.normal(k4, (B, N, IN_DIM), jnp.float32)
    object_pos_emb = jax.random.normal(k5, (B, N, IN_DIM), jnp.float32)
    action_pos_emb = jax.random.normal(k6, (B, N, IN_DIM), jnp.float32)

    fwd = jax.jit(hoi_position_net_v5)
    objs = fwd(packed, subject_boxes, object_boxes, masks,
               subject_pos_emb, object_pos_emb, action_pos_emb)
    jax.block_until_ready(objs)
    assert objs.shape == (B, N * 3, OUT_DIM)
    print("KERNEL_OK")
</pallas_src>

<mosaic_0001>
module attributes {stable_mosaic.version = 11 : i64} {
  func.func @_fused_kernel(%arg0: memref<48x128xbf16, #tpu.memory_space<vmem>>, %arg1: memref<48x64xf32, #tpu.memory_space<vmem>>, %arg2: memref<1280x512xbf16, #tpu.memory_space<vmem>>, %arg3: memref<1280x64xbf16, #tpu.memory_space<vmem>>, %arg4: memref<16x512xf32, #tpu.memory_space<vmem>>, %arg5: memref<48x64xf32, #tpu.memory_space<vmem>>) attributes {dimension_semantics = [], scalar_prefetch = 0 : i64, scratch_operands = 0 : i64, tpu.core_type = #tpu.core_type<tc>} {
    %c10 = arith.constant 10 : index
    %c0 = arith.constant 0 : index
    %0 = vector.load %arg4[%c10, %c0] : memref<16x512xf32, #tpu.memory_space<vmem>>, vector<1x64xf32>
    %c11 = arith.constant 11 : index
    %c0_0 = arith.constant 0 : index
    %1 = vector.load %arg4[%c11, %c0_0] : memref<16x512xf32, #tpu.memory_space<vmem>>, vector<1x64xf32>
    %c12 = arith.constant 12 : index
    %c0_1 = arith.constant 0 : index
    %2 = vector.load %arg4[%c12, %c0_1] : memref<16x512xf32, #tpu.memory_space<vmem>>, vector<1x64xf32>
    %c0_2 = arith.constant 0 : index
    %c0_3 = arith.constant 0 : index
    %3 = vector.load %arg0[%c0_2, %c0_3] : memref<48x128xbf16, #tpu.memory_space<vmem>>, vector<32x128xbf16>
    %c0_4 = arith.constant 0 : index
    %c0_5 = arith.constant 0 : index
    %4 = vector.load %arg2[%c0_4, %c0_5] : memref<1280x512xbf16, #tpu.memory_space<vmem>>, vector<128x512xbf16>
    %cst = arith.constant dense<0.000000e+00> : vector<32x512xf32>
    %5 = tpu.matmul %3, %4, %cst {dimension_numbers = #tpu.dot_dimension_numbers<[1], [0], [0], [1], [0, 0, 1, 1], [], []>} : vector<32x128xbf16>, vector<128x512xbf16>, vector<32x512xf32> -> vector<32x512xf32>
    %c0_6 = arith.constant 0 : index
    %c0_7 = arith.constant 0 : index
    %6 = vector.load %arg4[%c0_6, %c0_7] : memref<16x512xf32, #tpu.memory_space<vmem>>, vector<1x512xf32>
    %7 = vector.broadcast %6 : vector<1x512xf32> to vector<32x512xf32>
    %8 = arith.addf %5, %7 : vector<32x512xf32>
    %cst_8 = arith.constant 5.000000e-01 : f32
    %9 = vector.broadcast %cst_8 : f32 to vector<32x512xf32>
    %10 = arith.mulf %9, %8 : vector<32x512xf32>
    %11 = math.tanh %10 : vector<32x512xf32>
    %cst_9 = arith.constant 1.000000e+00 : f32
    %12 = vector.broadcast %cst_9 : f32 to vector<32x512xf32>
    %13 = arith.addf %11, %12 : vector<32x512xf32>
    %cst_10 = arith.constant 5.000000e-01 : f32
    %14 = vector.broadcast %cst_10 : f32 to vector<32x512xf32>
    %15 = arith.mulf %14, %13 : vector<32x512xf32>
    %16 = arith.mulf %8, %15 : vector<32x512xf32>
    %17 = arith.truncf %16 : vector<32x512xf32> to vector<32x512xbf16>
    %c128 = arith.constant 128 : index
    %c0_11 = arith.constant 0 : index
    %18 = vector.load %arg2[%c128, %c0_11] : memref<1280x512xbf16, #tpu.memory_space<vmem>>, vector<512x512xbf16>
    %cst_12 = arith.constant dense<0.000000e+00> : vector<32x512xf32>
    %19 = tpu.matmul %17, %18, %cst_12 {dimension_numbers = #tpu.dot_dimension_numbers<[1], [0], [0], [1], [0, 0, 1, 1], [], []>} : vector<32x512xbf16>, vector<512x512xbf16>, vector<32x512xf32> -> vector<32x512xf32>
    %c1 = arith.constant 1 : index
    %c0_13 = arith.constant 0 : index
    %20 = vector.load %arg4[%c1, %c0_13] : memref<16x512xf32, #tpu.memory_space<vmem>>, vector<1x512xf32>
    %21 = vector.broadcast %20 : vector<1x512xf32> to vector<32x512xf32>
    %22 = arith.addf %19, %21 : vector<32x512xf32>
    %cst_14 = arith.constant 5.000000e-01 : f32
    %23 = vector.broadcast %cst_14 : f32 to vector<32x512xf32>
    %24 = arith.mulf %23, %22 : vector<32x512xf32>
    %25 = math.tanh %24 : vector<32x512xf32>
    %cst_15 = arith.constant 1.000000e+00 : f32
    %26 = vector.broadcast %cst_15 : f32 to vector<32x512xf32>
    %27 = arith.addf %25, %26 : vector<32x512xf32>
    %cst_16 = arith.constant 5.000000e-01 : f32
    %28 = vector.broadcast %cst_16 : f32 to vector<32x512xf32>
    %29 = arith.mulf %28, %27 : vector<32x512xf32>
    %30 = arith.mulf %22, %29 : vector<32x512xf32>
    %31 = arith.truncf %30 : vector<32x512xf32> to vector<32x512xbf16>
    %c0_17 = arith.constant 0 : index
    %c0_18 = arith.constant 0 : index
    %32 = vector.load %arg3[%c0_17, %c0_18] : memref<1280x64xbf16, #tpu.memory_space<vmem>>, vector<512x64xbf16>
    %cst_19 = arith.constant dense<0.000000e+00> : vector<32x64xf32>
    %33 = tpu.matmul %31, %32, %cst_19 {dimension_numbers = #tpu.dot_dimension_numbers<[1], [0], [0], [1], [0, 0, 1, 1], [], []>} : vector<32x512xbf16>, vector<512x64xbf16>, vector<32x64xf32> -> vector<32x64xf32>
    %c2 = arith.constant 2 : index
    %c0_20 = arith.constant 0 : index
    %34 = vector.load %arg4[%c2, %c0_20] : memref<16x512xf32, #tpu.memory_space<vmem>>, vector<1x64xf32>
    %35 = vector.broadcast %34 : vector<1x64xf32> to vector<32x64xf32>
    %36 = arith.addf %33, %35 : vector<32x64xf32>
    %c0_21 = arith.constant 0 : index
    %c0_22 = arith.constant 0 : index
    %37 = vector.load %arg1[%c0_21, %c0_22] : memref<48x64xf32, #tpu.memory_space<vmem>>, vector<32x64xf32>
    %38 = arith.addf %36, %37 : vector<32x64xf32>
    %39 = arith.truncf %38 : vector<32x64xf32> to vector<32x64xbf16>
    %c512 = arith.constant 512 : index
    %c0_23 = arith.constant 0 : index
    %40 = vector.load %arg3[%c512, %c0_23] : memref<1280x64xbf16, #tpu.memory_space<vmem>>, vector<64x64xbf16>
    %cst_24 = arith.constant dense<0.000000e+00> : vector<32x64xf32>
    %41 = tpu.matmul %39, %40, %cst_24 {dimension_numbers = #tpu.dot_dimension_numbers<[1], [0], [0], [1], [0, 0, 1, 1], [], []>} : vector<32x64xbf16>, vector<64x64xbf16>, vector<32x64xf32> -> vector<32x64xf32>
    %c3 = arith.constant 3 : index
    %c0_25 = arith.constant 0 : index
    %42 = vector.load %arg4[%c3, %c0_25] : memref<16x512xf32, #tpu.memory_space<vmem>>, vector<1x64xf32>
    %43 = vector.broadcast %42 : vector<1x64xf32> to vector<32x64xf32>
    %44 = arith.addf %41, %43 : vector<32x64xf32>
    %cst_26 = arith.constant 0.000000e+00 : f32
    %45 = vector.broadcast %cst_26 : f32 to vector<32x64xf32>
    %46 = arith.maximumf %44, %45 : vector<32x64xf32>
    %47 = arith.truncf %46 : vector<32x64xf32> to vector<32x64xbf16>
    %c576 = arith.constant 576 : index
    %c0_27 = arith.constant 0 : index
    %48 = vector.load %arg3[%c576, %c0_27] : memref<1280x64xbf16, #tpu.memory_space<vmem>>, vector<64x64xbf16>
    %cst_28 = arith.constant dense<0.000000e+00> : vector<32x64xf32>
    %49 = tpu.matmul %47, %48, %cst_28 {dimension_numbers = #tpu.dot_dimension_numbers<[1], [0], [0], [1], [0, 0, 1, 1], [], []>} : vector<32x64xbf16>, vector<64x64xbf16>, vector<32x64xf32> -> vector<32x64xf32>
    %c4 = arith.constant 4 : index
    %c0_29 = arith.constant 0 : index
    %50 = vector.load %arg4[%c4, %c0_29] : memref<16x512xf32, #tpu.memory_space<vmem>>, vector<1x64xf32>
    %51 = vector.broadcast %50 : vector<1x64xf32> to vector<32x64xf32>
    %52 = arith.addf %49, %51 : vector<32x64xf32>
    %53 = tpu.iota {dimensions = array<i32: 0>} : vector<32x32xi32>
    %54 = tpu.iota {dimensions = array<i32: 1>} : vector<32x32xi32>
    %c1_i32 = arith.constant 1 : i32
    %55 = vector.broadcast %c1_i32 : i32 to vector<32x32xi32>
    %56 = arith.addi %53, %55 : vector<32x32xi32>
    %c2_i32 = arith.constant 2 : i32
    %c0_i32 = arith.constant 0 : i32
    %57 = arith.cmpi eq, %c2_i32, %c0_i32 : i32
    %c1_i32_30 = arith.constant 1 : i32
    %58 = arith.select %57, %c1_i32_30, %c2_i32 : i32
    %59 = vector.broadcast %58 : i32 to vector<32x32xi32>
    %60 = arith.remsi %53, %59 : vector<32x32xi32>
    %c0_i32_31 = arith.constant 0 : i32
    %61 = vector.broadcast %c0_i32_31 : i32 to vector<32x32xi32>
    %62 = arith.cmpi ne, %60, %61 : vector<32x32xi32>
    %c0_i32_32 = arith.constant 0 : i32
    %63 = vector.broadcast %c0_i32_32 : i32 to vector<32x32xi32>
    %64 = arith.cmpi slt, %60, %63 : vector<32x32xi32>
    %c0_i32_33 = arith.constant 0 : i32
    %65 = arith.cmpi slt, %58, %c0_i32_33 : i32
    %66 = vector.broadcast %65 : i1 to vector<32x32xi1>
    %67 = vector.broadcast %66 : vector<32x32xi1> to vector<32x32xi1>
    %68 = arith.xori %64, %67 : vector<32x32xi1>
    %69 = arith.andi %68, %62 : vector<32x32xi1>
    %70 = vector.broadcast %58 : i32 to vector<32x32xi32>
    %71 = arith.addi %60, %70 : vector<32x32xi32>
    %72 = arith.select %69, %71, %60 : vector<32x32xi1>, vector<32x32xi32>
    %c2_i32_34 = arith.constant 2 : i32
    %73 = vector.broadcast %c2_i32_34 : i32 to vector<32x32xi32>
    %74 = arith.muli %73, %72 : vector<32x32xi32>
    %75 = arith.subi %56, %74 : vector<32x32xi32>
    %76 = arith.cmpi eq, %54, %75 : vector<32x32xi32>
    %77 = arith.extui %76 : vector<32x32xi1> to vector<32x32xi32>
    %78 = arith.sitofp %77 : vector<32x32xi32> to vector<32x32xf32>
    %cst_35 = arith.constant dense<0.000000e+00> : vector<32x64xf32>
    %79 = tpu.matmul %78, %52, %cst_35 {dimension_numbers = #tpu.dot_dimension_numbers<[1], [0], [0], [1], [0, 0, 1, 1], [], []>} : vector<32x32xf32>, vector<32x64xf32>, vector<32x64xf32> -> vector<32x64xf32>
    %80 = tpu.iota {dimensions = array<i32: 0>} : vector<32x64xi32>
    %81 = vector.extract_strided_slice %80 {offsets = [0, 0], sizes = [32, 1], strides = [1, 1]} : vector<32x64xi32> to vector<32x1xi32>
    %c2_i32_36 = arith.constant 2 : i32
    %c0_i32_37 = arith.constant 0 : i32
    %82 = arith.cmpi eq, %c2_i32_36, %c0_i32_37 : i32
    %c1_i32_38 = arith.constant 1 : i32
    %83 = arith.select %82, %c1_i32_38, %c2_i32_36 : i32
    %84 = vector.broadcast %83 : i32 to vector<32x1xi32>
    %85 = arith.remsi %81, %84 : vector<32x1xi32>
    %c0_i32_39 = arith.constant 0 : i32
    %86 = vector.broadcast %c0_i32_39 : i32 to vector<32x1xi32>
    %87 = arith.cmpi ne, %85, %86 : vector<32x1xi32>
    %c0_i32_40 = arith.constant 0 : i32
    %88 = vector.broadcast %c0_i32_40 : i32 to vector<32x1xi32>
    %89 = arith.cmpi slt, %85, %88 : vector<32x1xi32>
    %c0_i32_41 = arith.constant 0 : i32
    %90 = arith.cmpi slt, %83, %c0_i32_41 : i32
    %91 = vector.broadcast %90 : i1 to vector<32x1xi1>
    %92 = vector.broadcast %91 : vector<32x1xi1> to vector<32x1xi1>
    %93 = arith.xori %89, %92 : vector<32x1xi1>
    %94 = arith.andi %93, %87 : vector<32x1xi1>
    %95 = vector.broadcast %83 : i32 to vector<32x1xi32>
    %96 = arith.addi %85, %95 : vector<32x1xi32>
    %97 = arith.select %94, %96, %85 : vector<32x1xi1>, vector<32x1xi32>
    %c1_i32_42 = arith.constant 1 : i32
    %98 = vector.broadcast %c1_i32_42 : i32 to vector<32x1xi32>
    %99 = arith.cmpi eq, %97, %98 : vector<32x1xi32>
    %100 = vector.extract_strided_slice %52 {offsets = [0, 1], sizes = [32, 1], strides = [1, 1]} : vector<32x64xf32> to vector<32x1xf32>
    %101 = vector.extract_strided_slice %52 {offsets = [0, 0], sizes = [32, 1], strides = [1, 1]} : vector<32x64xf32> to vector<32x1xf32>
    %102 = arith.select %99, %100, %101 : vector<32x1xi1>, vector<32x1xf32>
    %103 = vector.extract_strided_slice %79 {offsets = [0, 1], sizes = [32, 1], strides = [1, 1]} : vector<32x64xf32> to vector<32x1xf32>
    %104 = vector.extract_strided_slice %79 {offsets = [0, 0], sizes = [32, 1], strides = [1, 1]} : vector<32x64xf32> to vector<32x1xf32>
    %105 = arith.select %99, %103, %104 : vector<32x1xi1>, vector<32x1xf32>
    %106 = arith.select %99, %102, %105 : vector<32x1xi1>, vector<32x1xf32>
    %107 = arith.select %99, %105, %102 : vector<32x1xi1>, vector<32x1xf32>
    %108 = arith.cmpf ogt, %106, %107 : vector<32x1xf32>
    %109 = vector.shape_cast %108 : vector<32x1xi1> to vector<32x1xi1>
    %110 = vector.broadcast %109 : vector<32x1xi1> to vector<32x64xi1>
    %111 = vector.shape_cast %1 : vector<1x64xf32> to vector<1x64xf32>
    %112 = vector.broadcast %111 : vector<1x64xf32> to vector<32x64xf32>
    %113 = vector.shape_cast %0 : vector<1x64xf32> to vector<1x64xf32>
    %114 = vector.broadcast %113 : vector<1x64xf32> to vector<32x64xf32>
    %115 = arith.select %110, %112, %114 : vector<32x64xi1>, vector<32x64xf32>
    %116 = arith.addf %38, %115 : vector<32x64xf32>
    %c0_43 = arith.constant 0 : index
    %c0_44 = arith.constant 0 : index
    %117 = vector.load %arg5[%c0_43, %c0_44] : memref<48x64xf32, #tpu.memory_space<vmem>>, vector<32x64xf32>
    tpu.vector_store %arg5[%c0_43, %c0_44], %116 {strides = array<i32>} : memref<48x64xf32, #tpu.memory_space<vmem>>, vector<32x64xf32>,
    %c32 = arith.constant 32 : index
    %c0_45 = arith.constant 0 : index
    %118 = vector.load %arg0[%c32, %c0_45] : memref<48x128xbf16, #tpu.memory_space<vmem>>, vector<16x128xbf16>
    %c640 = arith.constant 640 : index
    %c0_46 = arith.constant 0 : index
    %119 = vector.load %arg2[%c640, %c0_46] : memref<1280x512xbf16, #tpu.memory_space<vmem>>, vector<128x512xbf16>
    %cst_47 = arith.constant dense<0.000000e+00> : vector<16x512xf32>
    %120 = tpu.matmul %118, %119, %cst_47 {dimension_numbers = #tpu.dot_dimension_numbers<[1], [0], [0], [1], [0, 0, 1, 1], [], []>} : vector<16x128xbf16>, vector<128x512xbf16>, vector<16x512xf32> -> vector<16x512xf32>
    %c5 = arith.constant 5 : index
    %c0_48 = arith.constant 0 : index
    %121 = vector.load %arg4[%c5, %c0_48] : memref<16x512xf32, #tpu.memory_space<vmem>>, vector<1x512xf32>
    %122 = vector.broadcast %121 : vector<1x512xf32> to vector<16x512xf32>
    %123 = arith.addf %120, %122 : vector<16x512xf32>
    %cst_49 = arith.constant 5.000000e-01 : f32
    %124 = vector.broadcast %cst_49 : f32 to vector<16x512xf32>
    %125 = arith.mulf %124, %123 : vector<16x512xf32>
    %126 = math.tanh %125 : vector<16x512xf32>
    %cst_50 = arith.constant 1.000000e+00 : f32
    %127 = vector.broadcast %cst_50 : f32 to vector<16x512xf32>
    %128 = arith.addf %126, %127 : vector<16x512xf32>
    %cst_51 = arith.constant 5.000000e-01 : f32
    %129 = vector.broadcast %cst_51 : f32 to vector<16x512xf32>
    %130 = arith.mulf %129, %128 : vector<16x512xf32>
    %131 = arith.mulf %123, %130 : vector<16x512xf32>
    %132 = arith.truncf %131 : vector<16x512xf32> to vector<16x512xbf16>
    %c768 = arith.constant 768 : index
    %c0_52 = arith.constant 0 : index
    %133 = vector.load %arg2[%c768, %c0_52] : memref<1280x512xbf16, #tpu.memory_space<vmem>>, vector<512x512xbf16>
    %cst_53 = arith.constant dense<0.000000e+00> : vector<16x512xf32>
    %134 = tpu.matmul %132, %133, %cst_53 {dimension_numbers = #tpu.dot_dimension_numbers<[1], [0], [0], [1], [0, 0, 1, 1], [], []>} : vector<16x512xbf16>, vector<512x512xbf16>, vector<16x512xf32> -> vector<16x512xf32>
    %c6 = arith.constant 6 : index
    %c0_54 = arith.constant 0 : index
    %135 = vector.load %arg4[%c6, %c0_54] : memref<16x512xf32, #tpu.memory_space<vmem>>, vector<1x512xf32>
    %136 = vector.broadcast %135 : vector<1x512xf32> to vector<16x512xf32>
    %137 = arith.addf %134, %136 : vector<16x512xf32>
    %cst_55 = arith.constant 5.000000e-01 : f32
    %138 = vector.broadcast %cst_55 : f32 to vector<16x512xf32>
    %139 = arith.mulf %138, %137 : vector<16x512xf32>
    %140 = math.tanh %139 : vector<16x512xf32>
    %cst_56 = arith.constant 1.000000e+00 : f32
    %141 = vector.broadcast %cst_56 : f32 to vector<16x512xf32>
    %142 = arith.addf %140, %141 : vector<16x512xf32>
    %cst_57 = arith.constant 5.000000e-01 : f32
    %143 = vector.broadcast %cst_57 : f32 to vector<16x512xf32>
    %144 = arith.mulf %143, %142 : vector<16x512xf32>
    %145 = arith.mulf %137, %144 : vector<16x512xf32>
    %146 = arith.truncf %145 : vector<16x512xf32> to vector<16x512xbf16>
    %c640_58 = arith.constant 640 : index
    %c0_59 = arith.constant 0 : index
    %147 = vector.load %arg3[%c640_58, %c0_59] : memref<1280x64xbf16, #tpu.memory_space<vmem>>, vector<512x64xbf16>
    %cst_60 = arith.constant dense<0.000000e+00> : vector<16x64xf32>
    %148 = tpu.matmul %146, %147, %cst_60 {dimension_numbers = #tpu.dot_dimension_numbers<[1], [0], [0], [1], [0, 0, 1, 1], [], []>} : vector<16x512xbf16>, vector<512x64xbf16>, vector<16x64xf32> -> vector<16x64xf32>
    %c7 = arith.constant 7 : index
    %c0_61 = arith.constant 0 : index
    %149 = vector.load %arg4[%c7, %c0_61] : memref<16x512xf32, #tpu.memory_space<vmem>>, vector<1x64xf32>
    %150 = vector.broadcast %149 : vector<1x64xf32> to vector<16x64xf32>
    %151 = arith.addf %148, %150 : vector<16x64xf32>
    %c32_62 = arith.constant 32 : index
    %c0_63 = arith.constant 0 : index
    %152 = vector.load %arg1[%c32_62, %c0_63] : memref<48x64xf32, #tpu.memory_space<vmem>>, vector<16x64xf32>
    %153 = arith.addf %151, %152 : vector<16x64xf32>
    %154 = vector.broadcast %2 : vector<1x64xf32> to vector<16x64xf32>
    %155 = arith.addf %153, %154 : vector<16x64xf32>
    %c32_64 = arith.constant 32 : index
    %c0_65 = arith.constant 0 : index
    %156 = vector.load %arg5[%c32_64, %c0_65] : memref<48x64xf32, #tpu.memory_space<vmem>>, vector<16x64xf32>
    tpu.vector_store %arg5[%c32_64, %c0_65], %155 {strides = array<i32>} : memref<48x64xf32, #tpu.memory_space<vmem>>, vector<16x64xf32>,
    return
  }
}

</mosaic_0001>

<llo_original>
// kernel: hoi_position_net_v5.1
$region0: #{hoi_position_net_v5.1}
  #allocation0 [shape = 'u32[]', space=smem, size = 0x4, offset = 0x4, fixed_abs, tag = 'smem constant byte address 0x4 - core index']
  #allocation1 [shape = 'u32[144,128]{1,0:T(1,128)}', space=vmem, size = 0x12000, scoped, tag = 'internal scratch']
  %s0 = inlined_call_operand.vmem [shape: bf16[48,128], index: 0, kind: input, shape index: {}]
  %s1 = inlined_call_operand.vmem [shape: f32[48,64], index: 1, kind: input, shape index: {}]
  %s2 = inlined_call_operand.hbm [shape: bf16[1280,512], index: 2, kind: input, shape index: {}]
  %s3 = inlined_call_operand.vmem [shape: bf16[1280,64], index: 3, kind: input, shape index: {}]
  %s4 = inlined_call_operand.hbm [shape: f32[16,512], index: 4, kind: input, shape index: {}]
  %s5 = inlined_call_operand.vmem [shape: f32[48,64], index: 5, kind: output, shape index: {}]
  %s6 = sld [smem:[#allocation0]]
  $region38: #{hoi_position_net_v5.1} parent=0
    _
  %s8 = ssub.s32 1, %s6
  %s9 = scalar_select 0, %s8, %s6
  $region1: #{hoi_position_net_v5.1} parent=0
    #allocation2 [shape = 'u8[1310720]{0}', space=vmem, size = 0x140000, scoped, tag = 'input window, operand 2, single buffered']
    #allocation3 [shape = 's32[1]{0}', space=sflag, size = 0x4, scoped, tag = 'scoped memory for hoi_position_net_v5.1']
    #allocation4 [shape = 'u8[32768]{0}', space=vmem, size = 0x8000, scoped, tag = 'input window, operand 4, single buffered']
    #allocation5 [shape = 's32[1]{0}', space=sflag, size = 0x4, scoped, tag = 'scoped memory for hoi_position_net_v5.1']
    %10 = vsyncpa [#allocation3], 0
    %11 = vsyncpa [#allocation5], 0
    // Predicated region
    $region2: #{hoi_position_net_v5.1} parent=1 // pred_check
      _
    $region3: #{hoi_position_net_v5.1} parent=1 // pred_check_branch
      %13 = sbr.rel (0) target = $region5
    $region4: #{hoi_position_net_v5.1} parent=1 // pred_region
      _
    $region5: #{hoi_position_net_v5.1} parent=1 // pred_fallthru
      _
    // Predicated region
    $region6: #{hoi_position_net_v5.1} parent=1 // pred_check
      _
    $region7: #{hoi_position_net_v5.1} parent=1 // pred_check_branch
      %15 = sbr.rel (0) target = $region9
    $region8: #{hoi_position_net_v5.1} parent=1 // pred_region
      _
    $region9: #{hoi_position_net_v5.1} parent=1 // pred_fallthru
      _
    // Predicated region
    $region10: #{hoi_position_net_v5.1} parent=1 // pred_check
      _
    $region11: #{hoi_position_net_v5.1} parent=1 // pred_check_branch
      %17 = sbr.rel (0) target = $region13
    $region12: #{hoi_position_net_v5.1} parent=1 // pred_region
      %s19 = ssub.s32 40960, 40960
      %20 = vsyncadd [#allocation3], %s19
      %s21 = sshll.u32 [#allocation2], 4
      %s22 = int_to_ptr.vmem [resolvable:$true] %s21
      %27 = dma.hbm_to_vmem [thread:$0]  %s2, 40960, %s22, [#allocation3], 256, 256, 16
    $region13: #{hoi_position_net_v5.1} parent=1 // pred_fallthru
      _
    // Predicated region
    $region14: #{hoi_position_net_v5.1} parent=1 // pred_check
      _
    $region15: #{hoi_position_net_v5.1} parent=1 // pred_check_branch
      %29 = sbr.rel (0) target = $region17
    $region16: #{hoi_position_net_v5.1} parent=1 // pred_region
      _
    $region17: #{hoi_position_net_v5.1} parent=1 // pred_fallthru
      _
    // Predicated region
    $region18: #{hoi_position_net_v5.1} parent=1 // pred_check
      _
    $region19: #{hoi_position_net_v5.1} parent=1 // pred_check_branch
      %31 = sbr.rel (0) target = $region21
    $region20: #{hoi_position_net_v5.1} parent=1 // pred_region
      %s33 = ssub.s32 1024, 1024
      %34 = vsyncadd [#allocation5], %s33
      %s35 = sshll.u32 [#allocation4], 4
      %s36 = int_to_ptr.vmem [resolvable:$true] %s35
      %41 = dma.hbm_to_vmem [thread:$0]  %s4, 1024, %s36, [#allocation5], 512, 512, 32
    $region21: #{hoi_position_net_v5.1} parent=1 // pred_fallthru
      _
    // Predicated region
    $region22: #{hoi_position_net_v5.1} parent=1 // pred_check
      _
    $region23: #{hoi_position_net_v5.1} parent=1 // pred_check_branch
      %43 = sbr.rel (0) target = $region25
    $region24: #{hoi_position_net_v5.1} parent=1 // pred_region
      %44 = dma.done [#allocation3], 40960
    $region25: #{hoi_position_net_v5.1} parent=1 // pred_fallthru
      _
    // Predicated region
    $region26: #{hoi_position_net_v5.1} parent=1 // pred_check
      _
    $region27: #{hoi_position_net_v5.1} parent=1 // pred_check_branch
      %46 = sbr.rel (0) target = $region29
    $region28: #{hoi_position_net_v5.1} parent=1 // pred_region
      %47 = dma.done [#allocation5], 1024
    $region29: #{hoi_position_net_v5.1} parent=1 // pred_fallthru
      _
    %v49 = vld [vmem:[#allocation4 + $0x22] ss:$0 sm:$0xff]
    %v50 = vld [vmem:[#allocation4 + $0x23] ss:$0 sm:$0xff]
    %v51 = vld [vmem:[#allocation4 + $0x24] ss:$0 sm:$0xff]
    %v52 = vld [vmem:[%s0] sm:$0xf]
    %v53 = vld [vmem:[%s0 + $0x4] sm:$0xf]
    %v54 = vld [vmem:[%s0 + $0x8] sm:$0xf]
    %v55 = vld [vmem:[%s0 + $0xc] sm:$0xf]
    %v56 = vld [vmem:[#allocation2] sm:$0xff]
    %v57 = vld [vmem:[#allocation2 + $0x8] sm:$0xff]
    %v58 = vld [vmem:[#allocation2 + $0x10] sm:$0xff]
    %v59 = vld [vmem:[#allocation2 + $0x18] sm:$0xff]
    %v60 = vld [vmem:[#allocation2 + $0x20] sm:$0xff]
    %v61 = vld [vmem:[#allocation2 + $0x28] sm:$0xff]
    %v62 = vld [vmem:[#allocation2 + $0x30] sm:$0xff]
    %v63 = vld [vmem:[#allocation2 + $0x38] sm:$0xff]
    %v64 = vld [vmem:[#allocation2 + $0x40] sm:$0xff]
    %v65 = vld [vmem:[#allocation2 + $0x48] sm:$0xff]
    %v66 = vld [vmem:[#allocation2 + $0x50] sm:$0xff]
    %v67 = vld [vmem:[#allocation2 + $0x58] sm:$0xff]
    %v68 = vld [vmem:[#allocation2 + $0x60] sm:$0xff]
    %v69 = vld [vmem:[#allocation2 + $0x68] sm:$0xff]
    %v70 = vld [vmem:[#allocation2 + $0x70] sm:$0xff]
    %v71 = vld [vmem:[#allocation2 + $0x78] sm:$0xff]
    %v72 = vld [vmem:[#allocation2 + $0x80] sm:$0xff]
    %v73 = vld [vmem:[#allocation2 + $0x88] sm:$0xff]
    %v74 = vld [vmem:[#allocation2 + $0x90] sm:$0xff]
    %v75 = vld [vmem:[#allocation2 + $0x98] sm:$0xff]
    %v76 = vld [vmem:[#allocation2 + $0xa0] sm:$0xff]
    %v77 = vld [vmem:[#allocation2 + $0xa8] sm:$0xff]
    %v78 = vld [vmem:[#allocation2 + $0xb0] sm:$0xff]
    %v79 = vld [vmem:[#allocation2 + $0xb8] sm:$0xff]
    %v80 = vld [vmem:[#allocation2 + $0xc0] sm:$0xff]
    %v81 = vld [vmem:[#allocation2 + $0xc8] sm:$0xff]
    %v82 = vld [vmem:[#allocation2 + $0xd0] sm:$0xff]
    %v83 = vld [vmem:[#allocation2 + $0xd8] sm:$0xff]
    %v84 = vld [vmem:[#allocation2 + $0xe0] sm:$0xff]
    %v85 = vld [vmem:[#allocation2 + $0xe8] sm:$0xff]
    %v86 = vld [vmem:[#allocation2 + $0xf0] sm:$0xff]
    %v87 = vld [vmem:[#allocation2 + $0xf8] sm:$0xff]
    %v88 = vld [vmem:[#allocation4] ss:$8 sm:$0xf]
    %v90 = vlaneseq
    %v91 = vshrl.u32 %v90, 7
    %v92 = vsub.s32 0, %v91
    %v93 = vrot.slane %v88, %v92
    %v94 = vlaneseq
    %v95 = vshrl.u32 %v94, 7
    %v96 = vsub.s32 1, %v95
    %v97 = vrot.slane %v88, %v96
    %v98 = vlaneseq
    %v99 = vshrl.u32 %v98, 7
    %v100 = vsub.s32 2, %v99
    %v101 = vrot.slane %v88, %v100
    %v102 = vlaneseq
    %v103 = vshrl.u32 %v102, 7
    %v104 = vsub.s32 3, %v103
    %v105 = vrot.slane %v88, %v104
    %v114 = vunpack.c.l.b16 %v52
    %v115 = vunpack.c.l.b16 %v53
    %v116 = vunpack.c.l.b16 %v54
    %v117 = vunpack.c.l.b16 %v55
    %v118 = vpack.c.b16 %v115, %v114
    %v119 = vpack.c.b16 %v117, %v116
    %v154 = vunpack.c.l.b16 %v56
    %v155 = vunpack.c.h.b16 %v56
    %v156 = vunpack.c.l.b16 %v57
    %v157 = vunpack.c.h.b16 %v57
    %v158 = vunpack.c.l.b16 %v58
    %v159 = vunpack.c.h.b16 %v58
    %v160 = vunpack.c.l.b16 %v59
    %v161 = vunpack.c.h.b16 %v59
    %v162 = vunpack.c.l.b16 %v60
    %v163 = vunpack.c.h.b16 %v60
    %v164 = vunpack.c.l.b16 %v61
    %v165 = vunpack.c.h.b16 %v61
    %v166 = vunpack.c.l.b16 %v62
    %v167 = vunpack.c.h.b16 %v62
    %v168 = vunpack.c.l.b16 %v63
    %v169 = vunpack.c.h.b16 %v63
    %v170 = vunpack.c.l.b16 %v64
    %v171 = vunpack.c.h.b16 %v64
    %v172 = vunpack.c.l.b16 %v65
    %v173 = vunpack.c.h.b16 %v65
    %v174 = vunpack.c.l.b16 %v66
    %v175 = vunpack.c.h.b16 %v66
    %v176 = vunpack.c.l.b16 %v67
    %v177 = vunpack.c.h.b16 %v67
    %v178 = vunpack.c.l.b16 %v68
    %v179 = vunpack.c.h.b16 %v68
    %v180 = vunpack.c.l.b16 %v69
    %v181 = vunpack.c.h.b16 %v69
    %v182 = vunpack.c.l.b16 %v70
    %v183 = vunpack.c.h.b16 %v70
    %v184 = vunpack.c.l.b16 %v71
    %v185 = vunpack.c.h.b16 %v71
    %v186 = vunpack.c.l.b16 %v72
    %v187 = vunpack.c.h.b16 %v72
    %v188 = vunpack.c.l.b16 %v73
    %v189 = vunpack.c.h.b16 %v73
    %v190 = vunpack.c.l.b16 %v74
    %v191 = vunpack.c.h.b16 %v74
    %v192 = vunpack.c.l.b16 %v75
    %v193 = vunpack.c.h.b16 %v75
    %v194 = vunpack.c.l.b16 %v76
    %v195 = vunpack.c.h.b16 %v76
    %v196 = vunpack.c.l.b16 %v77
    %v197 = vunpack.c.h.b16 %v77
    %v198 = vunpack.c.l.b16 %v78
    %v199 = vunpack.c.h.b16 %v78
    %v200 = vunpack.c.l.b16 %v79
    %v201 = vunpack.c.h.b16 %v79
    %v202 = vunpack.c.l.b16 %v80
    %v203 = vunpack.c.h.b16 %v80
    %v204 = vunpack.c.l.b16 %v81
    %v205 = vunpack.c.h.b16 %v81
    %v206 = vunpack.c.l.b16 %v82
    %v207 = vunpack.c.h.b16 %v82
    %v208 = vunpack.c.l.b16 %v83
    %v209 = vunpack.c.h.b16 %v83
    %v210 = vunpack.c.l.b16 %v84
    %v211 = vunpack.c.h.b16 %v84
    %v212 = vunpack.c.l.b16 %v85
    %v213 = vunpack.c.h.b16 %v85
    %v214 = vunpack.c.l.b16 %v86
    %v215 = vunpack.c.h.b16 %v86
    %v216 = vunpack.c.l.b16 %v87
    %v217 = vunpack.c.h.b16 %v87
    %v218 = vpack.c.b16 %v158, %v154
    %v219 = vpack.c.b16 %v159, %v155
    %v220 = vpack.c.b16 %v160, %v156
    %v221 = vpack.c.b16 %v161, %v157
    %v222 = vpack.c.b16 %v166, %v162
    %v223 = vpack.c.b16 %v167, %v163
    %v224 = vpack.c.b16 %v168, %v164
    %v225 = vpack.c.b16 %v169, %v165
    %v226 = vpack.c.b16 %v174, %v170
    %v227 = vpack.c.b16 %v175, %v171
    %v228 = vpack.c.b16 %v176, %v172
    %v229 = vpack.c.b16 %v177, %v173
    %v230 = vpack.c.b16 %v182, %v178
    %v231 = vpack.c.b16 %v183, %v179
    %v232 = vpack.c.b16 %v184, %v180
    %v233 = vpack.c.b16 %v185, %v181
    %v234 = vpack.c.b16 %v190, %v186
    %v235 = vpack.c.b16 %v191, %v187
    %v236 = vpack.c.b16 %v192, %v188
    %v237 = vpack.c.b16 %v193, %v189
    %v238 = vpack.c.b16 %v198, %v194
    %v239 = vpack.c.b16 %v199, %v195
    %v240 = vpack.c.b16 %v200, %v196
    %v241 = vpack.c.b16 %v201, %v197
    %v242 = vpack.c.b16 %v206, %v202
    %v243 = vpack.c.b16 %v207, %v203
    %v244 = vpack.c.b16 %v208, %v204
    %v245 = vpack.c.b16 %v209, %v205
    %v246 = vpack.c.b16 %v214, %v210
    %v247 = vpack.c.b16 %v215, %v211
    %v248 = vpack.c.b16 %v216, %v212
    %v249 = vpack.c.b16 %v217, %v213
    %282 = vmatprep.subr.bf16.mxu0 %v219
    %283 = vmatpush1.bf16.msra.mxu0 %v218
    %284 = vmatprep.subr.bf16.mxu0 %v223
    %285 = vmatpush1.bf16.msra.mxu0 %v222
    %286 = vmatprep.subr.bf16.mxu0 %v227
    %287 = vmatpush1.bf16.msra.mxu0 %v226
    %288 = vmatprep.subr.bf16.mxu0 %v231
    %289 = vmatpush1.bf16.msra.mxu0 %v230
    %290 = vmatprep.subr.bf16.mxu0 %v235
    %291 = vmatpush1.bf16.msra.mxu0 %v234
    %292 = vmatprep.subr.bf16.mxu0 %v239
    %293 = vmatpush1.bf16.msra.mxu0 %v238
    %294 = vmatprep.subr.bf16.mxu0 %v243
    %295 = vmatpush1.bf16.msra.mxu0 %v242
    %296 = vmatprep.subr.bf16.mxu0 %v247
    %297 = vmatpush1.bf16.msra.mxu0 %v246
    %298 = vmatprep.subr.bf16.mxu0 0
    %299 = vmatpush1.bf16.msra.mxu0 0
    %300 = vmatprep.subr.bf16.mxu0 0
    %301 = vmatpush1.bf16.msra.mxu0 0
    %302 = vmatprep.subr.bf16.mxu0 0
    %303 = vmatpush1.bf16.msra.mxu0 0
    %304 = vmatprep.subr.bf16.mxu0 0
    %305 = vmatpush1.bf16.msra.mxu0 0
    %306 = vmatprep.subr.bf16.mxu0 0
    %307 = vmatpush1.bf16.msra.mxu0 0
    %308 = vmatprep.subr.bf16.mxu0 0
    %309 = vmatpush1.bf16.msra.mxu0 0
    %310 = vmatprep.subr.bf16.mxu0 0
    %311 = vmatpush1.bf16.msra.mxu0 0
    %312 = vmatprep.subr.bf16.mxu0 0
    %313 = vmatpush1.bf16.msra.mxu0 0
    %314 = vmatprep.mubr.bf16.mxu0 0
    %315 = vmatmul.mubr.bf16.gmra.mrb[0].mxu0 %v118
    %v316 = vpop.f32.mrb[0].mxu0
    %v317 = vadd.f32 %v93, %v316
    %v318 = vpop.f32.mrb[0].mxu0
    %v319 = vadd.f32 %v97, %v318
    %v320 = vpop.f32.mrb[0].mxu0
    %v321 = vadd.f32 %v93, %v320
    %v322 = vpop.f32.mrb[0].mxu0
    %v323 = vadd.f32 %v97, %v322
    %324 = vmatprep.mubr.bf16.mxu0 0
    %325 = vmatmul.mubr.bf16.gmra.mrb[0].mxu0 %v119
    %v326 = vpop.f32.mrb[0].mxu0
    %v327 = vadd.f32 %v93, %v326
    %v328 = vpop.f32.mrb[0].mxu0
    %v329 = vadd.f32 %v97, %v328
    %v330 = vpop.f32.mrb[0].mxu0
    %v331 = vadd.f32 %v93, %v330
    %v332 = vpop.f32.mrb[0].mxu0
    %v333 = vadd.f32 %v97, %v332
    %334 = vdwg.mxu0
    %335 = vmatprep.subr.bf16.mxu0 %v221
    %336 = vmatpush1.bf16.msra.mxu0 %v220
    %337 = vmatprep.subr.bf16.mxu0 %v225
    %338 = vmatpush1.bf16.msra.mxu0 %v224
    %339 = vmatprep.subr.bf16.mxu0 %v229
    %340 = vmatpush1.bf16.msra.mxu0 %v228
    %341 = vmatprep.subr.bf16.mxu0 %v233
    %342 = vmatpush1.bf16.msra.mxu0 %v232
    %343 = vmatprep.subr.bf16.mxu0 %v237
    %344 = vmatpush1.bf16.msra.mxu0 %v236
    %345 = vmatprep.subr.bf16.mxu0 %v241
    %346 = vmatpush1.bf16.msra.mxu0 %v240
    %347 = vmatprep.subr.bf16.mxu0 %v245
    %348 = vmatpush1.bf16.msra.mxu0 %v244
    %349 = vmatprep.subr.bf16.mxu0 %v249
    %350 = vmatpush1.bf16.msra.mxu0 %v248
    %351 = vmatprep.subr.bf16.mxu0 0
    %352 = vmatpush1.bf16.msra.mxu0 0
    %353 = vmatprep.subr.bf16.mxu0 0
    %354 = vmatpush1.bf16.msra.mxu0 0
    %355 = vmatprep.subr.bf16.mxu0 0
    %356 = vmatpush1.bf16.msra.mxu0 0
    %357 = vmatprep.subr.bf16.mxu0 0
    %358 = vmatpush1.bf16.msra.mxu0 0
    %359 = vmatprep.subr.bf16.mxu0 0
    %360 = vmatpush1.bf16.msra.mxu0 0
    %361 = vmatprep.subr.bf16.mxu0 0
    %362 = vmatpush1.bf16.msra.mxu0 0
    %363 = vmatprep.subr.bf16.mxu0 0
    %364 = vmatpush1.bf16.msra.mxu0 0
    %365 = vmatprep.subr.bf16.mxu0 0
    %366 = vmatpush1.bf16.msra.mxu0 0
    %367 = vmatprep.mubr.bf16.mxu0 0
    %368 = vmatmul.mubr.bf16.gmra.mrb[0].mxu0 %v118
    %v369 = vpop.f32.mrb[0].mxu0
    %v370 = vadd.f32 %v101, %v369
    %v371 = vpop.f32.mrb[0].mxu0
    %v372 = vadd.f32 %v105, %v371
    %v373 = vpop.f32.mrb[0].mxu0
    %v374 = vadd.f32 %v101, %v373
    %v375 = vpop.f32.mrb[0].mxu0
    %v376 = vadd.f32 %v105, %v375
    %377 = vmatprep.mubr.bf16.mxu0 0
    %378 = vmatmul.mubr.bf16.gmra.mrb[0].mxu0 %v119
    %v379 = vpop.f32.mrb[0].mxu0
    %v380 = vadd.f32 %v101, %v379
    %v381 = vpop.f32.mrb[0].mxu0
    %v382 = vadd.f32 %v105, %v381
    %v383 = vpop.f32.mrb[0].mxu0
    %v384 = vadd.f32 %v101, %v383
    %v385 = vpop.f32.mrb[0].mxu0
    %v386 = vadd.f32 %v105, %v385
    %387 = vdwg.mxu0
    %v388 = vmul.f32 %v317, 0.5
    %v389 = vmul.f32 %v319, 0.5
    %v390 = vmul.f32 %v370, 0.5
    %v391 = vmul.f32 %v372, 0.5
    %v392 = vmul.f32 %v321, 0.5
    %v393 = vmul.f32 %v323, 0.5
    %v394 = vmul.f32 %v374, 0.5
    %v395 = vmul.f32 %v376, 0.5
    %v396 = vmul.f32 %v327, 0.5
    %v397 = vmul.f32 %v329, 0.5
    %v398 = vmul.f32 %v380, 0.5
    %v399 = vmul.f32 %v382, 0.5
    %v400 = vmul.f32 %v331, 0.5
    %v401 = vmul.f32 %v333, 0.5
    %v402 = vmul.f32 %v384, 0.5
    %v403 = vmul.f32 %v386, 0.5
    %v404 = vtanh.pop %v388
    %v405 = vtanh.pop %v389
    %v406 = vtanh.pop %v390
    %v407 = vtanh.pop %v391
    %v408 = vtanh.pop %v392
    %v409 = vtanh.pop %v393
    %v410 = vtanh.pop %v394
    %v411 = vtanh.pop %v395
    %v412 = vtanh.pop %v396
    %v413 = vtanh.pop %v397
    %v414 = vtanh.pop %v398
    %v415 = vtanh.pop %v399
    %v416 = vtanh.pop %v400
    %v417 = vtanh.pop %v401
    %v418 = vtanh.pop %v402
    %v419 = vtanh.pop %v403
    %v420 = vadd.f32 %v404, 1.0
    %v421 = vadd.f32 %v405, 1.0
    %v422 = vadd.f32 %v406, 1.0
    %v423 = vadd.f32 %v407, 1.0
    %v424 = vadd.f32 %v408, 1.0
    %v425 = vadd.f32 %v409, 1.0
    %v426 = vadd.f32 %v410, 1.0
    %v427 = vadd.f32 %v411, 1.0
    %v428 = vadd.f32 %v412, 1.0
    %v429 = vadd.f32 %v413, 1.0
    %v430 = vadd.f32 %v414, 1.0
    %v431 = vadd.f32 %v415, 1.0
    %v432 = vadd.f32 %v416, 1.0
    %v433 = vadd.f32 %v417, 1.0
    %v434 = vadd.f32 %v418, 1.0
    %v435 = vadd.f32 %v419, 1.0
    %v436 = vmul.f32 %v420, 0.5
    %v437 = vmul.f32 %v421, 0.5
    %v438 = vmul.f32 %v422, 0.5
    %v439 = vmul.f32 %v423, 0.5
    %v440 = vmul.f32 %v424, 0.5
    %v441 = vmul.f32 %v425, 0.5
    %v442 = vmul.f32 %v426, 0.5
    %v443 = vmul.f32 %v427, 0.5
    %v444 = vmul.f32 %v428, 0.5
    %v445 = vmul.f32 %v429, 0.5
    %v446 = vmul.f32 %v430, 0.5
    %v447 = vmul.f32 %v431, 0.5
    %v448 = vmul.f32 %v432, 0.5
    %v449 = vmul.f32 %v433, 0.5
    %v450 = vmul.f32 %v434, 0.5
    %v451 = vmul.f32 %v435, 0.5
    %v452 = vmul.f32 %v317, %v436
    %v453 = vmul.f32 %v319, %v437
    %v454 = vmul.f32 %v370, %v438
    %v455 = vmul.f32 %v372, %v439
    %v456 = vmul.f32 %v321, %v440
    %v457 = vmul.f32 %v323, %v441
    %v458 = vmul.f32 %v374, %v442
    %v459 = vmul.f32 %v376, %v443
    %v460 = vmul.f32 %v327, %v444
    %v461 = vmul.f32 %v329, %v445
    %v462 = vmul.f32 %v380, %v446
    %v463 = vmul.f32 %v382, %v447
    %v464 = vmul.f32 %v331, %v448
    %v465 = vmul.f32 %v333, %v449
    %v466 = vmul.f32 %v384, %v450
    %v467 = vmul.f32 %v386, %v451
    %v468 = vpack.c.bf16 %v456, %v452
    %v469 = vpack.c.bf16 %v457, %v453
    %v470 = vpack.c.bf16 %v458, %v454
    %v471 = vpack.c.bf16 %v459, %v455
    %v472 = vpack.c.bf16 %v464, %v460
    %v473 = vpack.c.bf16 %v465, %v461
    %v474 = vpack.c.bf16 %v466, %v462
    %v475 = vpack.c.bf16 %v467, %v463
    %v476 = vld [vmem:[#allocation2 + $0x100] sm:$0xff]
    %v477 = vld [vmem:[#allocation2 + $0x108] sm:$0xff]
    %v478 = vld [vmem:[#allocation2 + $0x110] sm:$0xff]
    %v479 = vld [vmem:[#allocation2 + $0x118] sm:$0xff]
    %v480 = vld [vmem:[#allocation2 + $0x120] sm:$0xff]
    %v481 = vld [vmem:[#allocation2 + $0x128] sm:$0xff]
    %v482 = vld [vmem:[#allocation2 + $0x130] sm:$0xff]
    %v483 = vld [vmem:[#allocation2 + $0x138] sm:$0xff]
    %v484 = vld [vmem:[#allocation2 + $0x140] sm:$0xff]
    %v485 = vld [vmem:[#allocation2 + $0x148] sm:$0xff]
    %v486 = vld [vmem:[#allocation2 + $0x150] sm:$0xff]
    %v487 = vld [vmem:[#allocation2 + $0x158] sm:$0xff]
    %v488 = vld [vmem:[#allocation2 + $0x160] sm:$0xff]
    %v489 = vld [vmem:[#allocation2 + $0x168] sm:$0xff]
    %v490 = vld [vmem:[#allocation2 + $0x170] sm:$0xff]
    %v491 = vld [vmem:[#allocation2 + $0x178] sm:$0xff]
    %v492 = vld [vmem:[#allocation2 + $0x180] sm:$0xff]
    %v493 = vld [vmem:[#allocation2 + $0x188] sm:$0xff]
    %v494 = vld [vmem:[#allocation2 + $0x190] sm:$0xff]
    %v495 = vld [vmem:[#allocation2 + $0x198] sm:$0xff]
    %v496 = vld [vmem:[#allocation2 + $0x1a0] sm:$0xff]
    %v497 = vld [vmem:[#allocation2 + $0x1a8] sm:$0xff]
    %v498 = vld [vmem:[#allocation2 + $0x1b0] sm:$0xff]
    %v499 = vld [vmem:[#allocation2 + $0x1b8] sm:$0xff]
    %v500 = vld [vmem:[#allocation2 + $0x1c0] sm:$0xff]
    %v501 = vld [vmem:[#allocation2 + $0x1c8] sm:$0xff]
    %v502 = vld [vmem:[#allocation2 + $0x1d0] sm:$0xff]
    %v503 = vld [vmem:[#allocation2 + $0x1d8] sm:$0xff]
    %v504 = vld [vmem:[#allocation2 + $0x1e0] sm:$0xff]
    %v505 = vld [vmem:[#allocation2 + $0x1e8] sm:$0xff]
    %v506 = vld [vmem:[#allocation2 + $0x1f0] sm:$0xff]
    %v507 = vld [vmem:[#allocation2 + $0x1f8] sm:$0xff]
    %v508 = vld [vmem:[#allocation2 + $0x200] sm:$0xff]
    %v509 = vld [vmem:[#allocation2 + $0x208] sm:$0xff]
    %v510 = vld [vmem:[#allocation2 + $0x210] sm:$0xff]
    %v511 = vld [vmem:[#allocation2 + $0x218] sm:$0xff]
    %v512 = vld [vmem:[#allocation2 + $0x220] sm:$0xff]
    %v513 = vld [vmem:[#allocation2 + $0x228] sm:$0xff]
    %v514 = vld [vmem:[#allocation2 + $0x230] sm:$0xff]
    %v515 = vld [vmem:[#allocation2 + $0x238] sm:$0xff]
    %v516 = vld [vmem:[#allocation2 + $0x240] sm:$0xff]
    %v517 = vld [vmem:[#allocation2 + $0x248] sm:$0xff]
    %v518 = vld [vmem:[#allocation2 + $0x250] sm:$0xff]
    %v519 = vld [vmem:[#allocation2 + $0x258] sm:$0xff]
    %v520 = vld [vmem:[#allocation2 + $0x260] sm:$0xff]
    %v521 = vld [vmem:[#allocation2 + $0x268] sm:$0xff]
    %v522 = vld [vmem:[#allocation2 + $0x270] sm:$0xff]
    %v523 = vld [vmem:[#allocation2 + $0x278] sm:$0xff]
    %v524 = vld [vmem:[#allocation2 + $0x280] sm:$0xff]
    %v525 = vld [vmem:[#allocation2 + $0x288] sm:$0xff]
    %v526 = vld [vmem:[#allocation2 + $0x290] sm:$0xff]
    %v527 = vld [vmem:[#allocation2 + $0x298] sm:$0xff]
    %v528 = vld [vmem:[#allocation2 + $0x2a0] sm:$0xff]
    %v529 = vld [vmem:[#allocation2 + $0x2a8] sm:$0xff]
    %v530 = vld [vmem:[#allocation2 + $0x2b0] sm:$0xff]
    %v531 = vld [vmem:[#allocation2 + $0x2b8] sm:$0xff]
    %v532 = vld [vmem:[#allocation2 + $0x2c0] sm:$0xff]
    %v533 = vld [vmem:[#allocation2 + $0x2c8] sm:$0xff]
    %v534 = vld [vmem:[#allocation2 + $0x2d0] sm:$0xff]
    %v535 = vld [vmem:[#allocation2 + $0x2d8] sm:$0xff]
    %v536 = vld [vmem:[#allocation2 + $0x2e0] sm:$0xff]
    %v537 = vld [vmem:[#allocation2 + $0x2e8] sm:$0xff]
    %v538 = vld [vmem:[#allocation2 + $0x2f0] sm:$0xff]
    %v539 = vld [vmem:[#allocation2 + $0x2f8] sm:$0xff]
    %v540 = vld [vmem:[#allocation2 + $0x300] sm:$0xff]
    %v541 = vld [vmem:[#allocation2 + $0x308] sm:$0xff]
    %v542 = vld [vmem:[#allocation2 + $0x310] sm:$0xff]
    %v543 = vld [vmem:[#allocation2 + $0x318] sm:$0xff]
    %v544 = vld [vmem:[#allocation2 + $0x320] sm:$0xff]
    %v545 = vld [vmem:[#allocation2 + $0x328] sm:$0xff]
    %v546 = vld [vmem:[#allocation2 + $0x330] sm:$0xff]
    %v547 = vld [vmem:[#allocation2 + $0x338] sm:$0xff]
    %v548 = vld [vmem:[#allocation2 + $0x340] sm:$0xff]
    %v549 = vld [vmem:[#allocation2 + $0x348] sm:$0xff]
    %v550 = vld [vmem:[#allocation2 + $0x350] sm:$0xff]
    %v551 = vld [vmem:[#allocation2 + $0x358] sm:$0xff]
    %v552 = vld [vmem:[#allocation2 + $0x360] sm:$0xff]
    %v553 = vld [vmem:[#allocation2 + $0x368] sm:$0xff]
    %v554 = vld [vmem:[#allocation2 + $0x370] sm:$0xff]
    %v555 = vld [vmem:[#allocation2 + $0x378] sm:$0xff]
    %v556 = vld [vmem:[#allocation2 + $0x380] sm:$0xff]
    %v557 = vld [vmem:[#allocation2 + $0x388] sm:$0xff]
    %v558 = vld [vmem:[#allocation2 + $0x390] sm:$0xff]
    %v559 = vld [vmem:[#allocation2 + $0x398] sm:$0xff]
    %v560 = vld [vmem:[#allocation2 + $0x3a0] sm:$0xff]
    %v561 = vld [vmem:[#allocation2 + $0x3a8] sm:$0xff]
    %v562 = vld [vmem:[#allocation2 + $0x3b0] sm:$0xff]
    %v563 = vld [vmem:[#allocation2 + $0x3b8] sm:$0xff]
    %v564 = vld [vmem:[#allocation2 + $0x3c0] sm:$0xff]
    %v565 = vld [vmem:[#allocation2 + $0x3c8] sm:$0xff]
    %v566 = vld [vmem:[#allocation2 + $0x3d0] sm:$0xff]
    %v567 = vld [vmem:[#allocation2 + $0x3d8] sm:$0xff]
    %v568 = vld [vmem:[#allocation2 + $0x3e0] sm:$0xff]
    %v569 = vld [vmem:[#allocation2 + $0x3e8] sm:$0xff]
    %v570 = vld [vmem:[#allocation2 + $0x3f0] sm:$0xff]
    %v571 = vld [vmem:[#allocation2 + $0x3f8] sm:$0xff]
    %v572 = vld [vmem:[#allocation2 + $0x400] sm:$0xff]
    %v573 = vld [vmem:[#allocation2 + $0x408] sm:$0xff]
    %v574 = vld [vmem:[#allocation2 + $0x410] sm:$0xff]
    %v575 = vld [vmem:[#allocation2 + $0x418] sm:$0xff]
    %v576 = vld [vmem:[#allocation2 + $0x420] sm:$0xff]
    %v577 = vld [vmem:[#allocation2 + $0x428] sm:$0xff]
    %v578 = vld [vmem:[#allocation2 + $0x430] sm:$0xff]
    %v579 = vld [vmem:[#allocation2 + $0x438] sm:$0xff]
    %v580 = vld [vmem:[#allocation2 + $0x440] sm:$0xff]
    %v581 = vld [vmem:[#allocation2 + $0x448] sm:$0xff]
    %v582 = vld [vmem:[#allocation2 + $0x450] sm:$0xff]
    %v583 = vld [vmem:[#allocation2 + $0x458] sm:$0xff]
    %v584 = vld [vmem:[#allocation2 + $0x460] sm:$0xff]
    %v585 = vld [vmem:[#allocation2 + $0x468] sm:$0xff]
    %v586 = vld [vmem:[#allocation2 + $0x470] sm:$0xff]
    %v587 = vld [vmem:[#allocation2 + $0x478] sm:$0xff]
    %v588 = vld [vmem:[#allocation2 + $0x480] sm:$0xff]
    %v589 = vld [vmem:[#allocation2 + $0x488] sm:$0xff]
    %v590 = vld [vmem:[#allocation2 + $0x490] sm:$0xff]
    %v591 = vld [vmem:[#allocation2 + $0x498] sm:$0xff]
    %v592 = vld [vmem:[#allocation2 + $0x4a0] sm:$0xff]
    %v593 = vld [vmem:[#allocation2 + $0x4a8] sm:$0xff]
    %v594 = vld [vmem:[#allocation2 + $0x4b0] sm:$0xff]
    %v595 = vld [vmem:[#allocation2 + $0x4b8] sm:$0xff]
    %v596 = vld [vmem:[#allocation2 + $0x4c0] sm:$0xff]
    %v597 = vld [vmem:[#allocation2 + $0x4c8] sm:$0xff]
    %v598 = vld [vmem:[#allocation2 + $0x4d0] sm:$0xff]
    %v599 = vld [vmem:[#allocation2 + $0x4d8] sm:$0xff]
    %v600 = vld [vmem:[#allocation2 + $0x4e0] sm:$0xff]
    %v601 = vld [vmem:[#allocation2 + $0x4e8] sm:$0xff]
    %v602 = vld [vmem:[#allocation2 + $0x4f0] sm:$0xff]
    %v603 = vld [vmem:[#allocation2 + $0x4f8] sm:$0xff]
    %s604 = scalar_lea.vmem [#allocation4], 1
    %v605 = vld [vmem:[%s604] ss:$8 sm:$0xf]
    %v607 = vlaneseq
    %v608 = vshrl.u32 %v607, 7
    %v609 = vsub.s32 0, %v608
    %v610 = vrot.slane %v605, %v609
    %v611 = vlaneseq
    %v612 = vshrl.u32 %v611, 7
    %v613 = vsub.s32 1, %v612
    %v614 = vrot.slane %v605, %v613
    %v615 = vlaneseq
    %v616 = vshrl.u32 %v615, 7
    %v617 = vsub.s32 2, %v616
    %v618 = vrot.slane %v605, %v617
    %v619 = vlaneseq
    %v620 = vshrl.u32 %v619, 7
    %v621 = vsub.s32 3, %v620
    %v622 = vrot.slane %v605, %v621
    %v755 = vunpack.c.l.b16 %v476
    %v756 = vunpack.c.h.b16 %v476
    %v757 = vunpack.c.l.b16 %v477
    %v758 = vunpack.c.h.b16 %v477
    %v759 = vunpack.c.l.b16 %v478
    %v760 = vunpack.c.h.b16 %v478
    %v761 = vunpack.c.l.b16 %v479
    %v762 = vunpack.c.h.b16 %v479
    %v763 = vunpack.c.l.b16 %v480
    %v764 = vunpack.c.h.b16 %v480
    %v765 = vunpack.c.l.b16 %v481
    %v766 = vunpack.c.h.b16 %v481
    %v767 = vunpack.c.l.b16 %v482
    %v768 = vunpack.c.h.b16 %v482
    %v769 = vunpack.c.l.b16 %v483
    %v770 = vunpack.c.h.b16 %v483
    %v771 = vunpack.c.l.b16 %v484
    %v772 = vunpack.c.h.b16 %v484
    %v773 = vunpack.c.l.b16 %v485
    %v774 = vunpack.c.h.b16 %v485
    %v775 = vunpack.c.l.b16 %v486
    %v776 = vunpack.c.h.b16 %v486
    %v777 = vunpack.c.l.b16 %v487
    %v778 = vunpack.c.h.b16 %v487
    %v779 = vunpack.c.l.b16 %v488
    %v780 = vunpack.c.h.b16 %v488
    %v781 = vunpack.c.l.b16 %v489
    %v782 = vunpack.c.h.b16 %v489
    %v783 = vunpack.c.l.b16 %v490
    %v784 = vunpack.c.h.b16 %v490
    %v785 = vunpack.c.l.b16 %v491
    %v786 = vunpack.c.h.b16 %v491
    %v787 = vunpack.c.l.b16 %v492
    %v788 = vunpack.c.h.b16 %v492
    %v789 = vunpack.c.l.b16 %v493
    %v790 = vunpack.c.h.b16 %v493
    %v791 = vunpack.c.l.b16 %v494
    %v792 = vunpack.c.h.b16 %v494
    %v793 = vunpack.c.l.b16 %v495
    %v794 = vunpack.c.h.b16 %v495
    %v795 = vunpack.c.l.b16 %v496
    %v796 = vunpack.c.h.b16 %v496
    %v797 = vunpack.c.l.b16 %v497
    %v798 = vunpack.c.h.b16 %v497
    %v799 = vunpack.c.l.b16 %v498
    %v800 = vunpack.c.h.b16 %v498
    %v801 = vunpack.c.l.b16 %v499
    %v802 = vunpack.c.h.b16 %v499
    %v803 = vunpack.c.l.b16 %v500
    %v804 = vunpack.c.h.b16 %v500
    %v805 = vunpack.c.l.b16 %v501
    %v806 = vunpack.c.h.b16 %v501
    %v807 = vunpack.c.l.b16 %v502
    %v808 = vunpack.c.h.b16 %v502
    %v809 = vunpack.c.l.b16 %v503
    %v810 = vunpack.c.h.b16 %v503
    %v811 = vunpack.c.l.b16 %v504
    %v812 = vunpack.c.h.b16 %v504
    %v813 = vunpack.c.l.b16 %v505
    %v814 = vunpack.c.h.b16 %v505
    %v815 = vunpack.c.l.b16 %v506
    %v816 = vunpack.c.h.b16 %v506
    %v817 = vunpack.c.l.b16 %v507
    %v818 = vunpack.c.h.b16 %v507
    %v819 = vunpack.c.l.b16 %v508
    %v820 = vunpack.c.h.b16 %v508
    %v821 = vunpack.c.l.b16 %v509
    %v822 = vunpack.c.h.b16 %v509
    %v823 = vunpack.c.l.b16 %v510
    %v824 = vunpack.c.h.b16 %v510
    %v825 = vunpack.c.l.b16 %v511
    %v826 = vunpack.c.h.b16 %v511
    %v827 = vunpack.c.l.b16 %v512
    %v828 = vunpack.c.h.b16 %v512
    %v829 = vunpack.c.l.b16 %v513
    %v830 = vunpack.c.h.b16 %v513
    %v831 = vunpack.c.l.b16 %v514
    %v832 = vunpack.c.h.b16 %v514
    %v833 = vunpack.c.l.b16 %v515
    %v834 = vunpack.c.h.b16 %v515
    %v835 = vunpack.c.l.b16 %v516
    %v836 = vunpack.c.h.b16 %v516
    %v837 = vunpack.c.l.b16 %v517
    %v838 = vunpack.c.h.b16 %v517
    %v839 = vunpack.c.l.b16 %v518
    %v840 = vunpack.c.h.b16 %v518
    %v841 = vunpack.c.l.b16 %v519
    %v842 = vunpack.c.h.b16 %v519
    %v843 = vunpack.c.l.b16 %v520
    %v844 = vunpack.c.h.b16 %v520
    %v845 = vunpack.c.l.b16 %v521
    %v846 = vunpack.c.h.b16 %v521
    %v847 = vunpack.c.l.b16 %v522
    %v848 = vunpack.c.h.b16 %v522
    %v849 = vunpack.c.l.b16 %v523
    %v850 = vunpack.c.h.b16 %v523
    %v851 = vunpack.c.l.b16 %v524
    %v852 = vunpack.c.h.b16 %v524
    %v853 = vunpack.c.l.b16 %v525
    %v854 = vunpack.c.h.b16 %v525
    %v855 = vunpack.c.l.b16 %v526
    %v856 = vunpack.c.h.b16 %v526
    %v857 = vunpack.c.l.b16 %v527
    %v858 = vunpack.c.h.b16 %v527
    %v859 = vunpack.c.l.b16 %v528
    %v860 = vunpack.c.h.b16 %v528
    %v861 = vunpack.c.l.b16 %v529
    %v862 = vunpack.c.h.b16 %v529
    %v863 = vunpack.c.l.b16 %v530
    %v864 = vunpack.c.h.b16 %v530
    %v865 = vunpack.c.l.b16 %v531
    %v866 = vunpack.c.h.b16 %v531
    %v867 = vunpack.c.l.b16 %v532
    %v868 = vunpack.c.h.b16 %v532
    %v869 = vunpack.c.l.b16 %v533
    %v870 = vunpack.c.h.b16 %v533
    %v871 = vunpack.c.l.b16 %v534
    %v872 = vunpack.c.h.b16 %v534
    %v873 = vunpack.c.l.b16 %v535
    %v874 = vunpack.c.h.b16 %v535
    %v875 = vunpack.c.l.b16 %v536
    %v876 = vunpack.c.h.b16 %v536
    %v877 = vunpack.c.l.b16 %v537
    %v878 = vunpack.c.h.b16 %v537
    %v879 = vunpack.c.l.b16 %v538
    %v880 = vunpack.c.h.b16 %v538
    %v881 = vunpack.c.l.b16 %v539
    %v882 = vunpack.c.h.b16 %v539
    %v883 = vunpack.c.l.b16 %v540
    %v884 = vunpack.c.h.b16 %v540
    %v885 = vunpack.c.l.b16 %v541
    %v886 = vunpack.c.h.b16 %v541
    %v887 = vunpack.c.l.b16 %v542
    %v888 = vunpack.c.h.b16 %v542
    %v889 = vunpack.c.l.b16 %v543
    %v890 = vunpack.c.h.b16 %v543
    %v891 = vunpack.c.l.b16 %v544
    %v892 = vunpack.c.h.b16 %v544
    %v893 = vunpack.c.l.b16 %v545
    %v894 = vunpack.c.h.b16 %v545
    %v895 = vunpack.c.l.b16 %v546
    %v896 = vunpack.c.h.b16 %v546
    %v897 = vunpack.c.l.b16 %v547
    %v898 = vunpack.c.h.b16 %v547
    %v899 = vunpack.c.l.b16 %v548
    %v900 = vunpack.c.h.b16 %v548
    %v901 = vunpack.c.l.b16 %v549
    %v902 = vunpack.c.h.b16 %v549
    %v903 = vunpack.c.l.b16 %v550
    %v904 = vunpack.c.h.b16 %v550
    %v905 = vunpack.c.l.b16 %v551
    %v906 = vunpack.c.h.b16 %v551
    %v907 = vunpack.c.l.b16 %v552
    %v908 = vunpack.c.h.b16 %v552
    %v909 = vunpack.c.l.b16 %v553
    %v910 = vunpack.c.h.b16 %v553
    %v911 = vunpack.c.l.b16 %v554
    %v912 = vunpack.c.h.b16 %v554
    %v913 = vunpack.c.l.b16 %v555
    %v914 = vunpack.c.h.b16 %v555
    %v915 = vunpack.c.l.b16 %v556
    %v916 = vunpack.c.h.b16 %v556
    %v917 = vunpack.c.l.b16 %v557
    %v918 = vunpack.c.h.b16 %v557
    %v919 = vunpack.c.l.b16 %v558
    %v920 = vunpack.c.h.b16 %v558
    %v921 = vunpack.c.l.b16 %v559
    %v922 = vunpack.c.h.b16 %v559
    %v923 = vunpack.c.l.b16 %v560
    %v924 = vunpack.c.h.b16 %v560
    %v925 = vunpack.c.l.b16 %v561
    %v926 = vunpack.c.h.b16 %v561
    %v927 = vunpack.c.l.b16 %v562
    %v928 = vunpack.c.h.b16 %v562
    %v929 = vunpack.c.l.b16 %v563
    %v930 = vunpack.c.h.b16 %v563
    %v931 = vunpack.c.l.b16 %v564
    %v932 = vunpack.c.h.b16 %v564
    %v933 = vunpack.c.l.b16 %v565
    %v934 = vunpack.c.h.b16 %v565
    %v935 = vunpack.c.l.b16 %v566
    %v936 = vunpack.c.h.b16 %v566
    %v937 = vunpack.c.l.b16 %v567
    %v938 = vunpack.c.h.b16 %v567
    %v939 = vunpack.c.l.b16 %v568
    %v940 = vunpack.c.h.b16 %v568
    %v941 = vunpack.c.l.b16 %v569
    %v942 = vunpack.c.h.b16 %v569
    %v943 = vunpack.c.l.b16 %v570
    %v944 = vunpack.c.h.b16 %v570
    %v945 = vunpack.c.l.b16 %v571
    %v946 = vunpack.c.h.b16 %v571
    %v947 = vunpack.c.l.b16 %v572
    %v948 = vunpack.c.h.b16 %v572
    %v949 = vunpack.c.l.b16 %v573
    %v950 = vunpack.c.h.b16 %v573
    %v951 = vunpack.c.l.b16 %v574
    %v952 = vunpack.c.h.b16 %v574
    %v953 = vunpack.c.l.b16 %v575
    %v954 = vunpack.c.h.b16 %v575
    %v955 = vunpack.c.l.b16 %v576
    %v956 = vunpack.c.h.b16 %v576
    %v957 = vunpack.c.l.b16 %v577
    %v958 = vunpack.c.h.b16 %v577
    %v959 = vunpack.c.l.b16 %v578
    %v960 = vunpack.c.h.b16 %v578
    %v961 = vunpack.c.l.b16 %v579
    %v962 = vunpack.c.h.b16 %v579
    %v963 = vunpack.c.l.b16 %v580
    %v964 = vunpack.c.h.b16 %v580
    %v965 = vunpack.c.l.b16 %v581
    %v966 = vunpack.c.h.b16 %v581
    %v967 = vunpack.c.l.b16 %v582
    %v968 = vunpack.c.h.b16 %v582
    %v969 = vunpack.c.l.b16 %v583
    %v970 = vunpack.c.h.b16 %v583
    %v971 = vunpack.c.l.b16 %v584
    %v972 = vunpack.c.h.b16 %v584
    %v973 = vunpack.c.l.b16 %v585
    %v974 = vunpack.c.h.b16 %v585
    %v975 = vunpack.c.l.b16 %v586
    %v976 = vunpack.c.h.b16 %v586
    %v977 = vunpack.c.l.b16 %v587
    %v978 = vunpack.c.h.b16 %v587
    %v979 = vunpack.c.l.b16 %v588
    %v980 = vunpack.c.h.b16 %v588
    %v981 = vunpack.c.l.b16 %v589
    %v982 = vunpack.c.h.b16 %v589
    %v983 = vunpack.c.l.b16 %v590
    %v984 = vunpack.c.h.b16 %v590
    %v985 = vunpack.c.l.b16 %v591
    %v986 = vunpack.c.h.b16 %v591
    %v987 = vunpack.c.l.b16 %v592
    %v988 = vunpack.c.h.b16 %v592
    %v989 = vunpack.c.l.b16 %v593
    %v990 = vunpack.c.h.b16 %v593
    %v991 = vunpack.c.l.b16 %v594
    %v992 = vunpack.c.h.b16 %v594
    %v993 = vunpack.c.l.b16 %v595
    %v994 = vunpack.c.h.b16 %v595
    %v995 = vunpack.c.l.b16 %v596
    %v996 = vunpack.c.h.b16 %v596
    %v997 = vunpack.c.l.b16 %v597
    %v998 = vunpack.c.h.b16 %v597
    %v999 = vunpack.c.l.b16 %v598
    %v1000 = vunpack.c.h.b16 %v598
    %v1001 = vunpack.c.l.b16 %v599
    %v1002 = vunpack.c.h.b16 %v599
    %v1003 = vunpack.c.l.b16 %v600
    %v1004 = vunpack.c.h.b16 %v600
    %v1005 = vunpack.c.l.b16 %v601
    %v1006 = vunpack.c.h.b16 %v601
    %v1007 = vunpack.c.l.b16 %v602
    %v1008 = vunpack.c.h.b16 %v602
    %v1009 = vunpack.c.l.b16 %v603
    %v1010 = vunpack.c.h.b16 %v603
    %v1011 = vpack.c.b16 %v759, %v755
    %v1012 = vpack.c.b16 %v760, %v756
    %v1013 = vpack.c.b16 %v761, %v757
    %v1014 = vpack.c.b16 %v762, %v758
    %v1015 = vpack.c.b16 %v767, %v763
    %v1016 = vpack.c.b16 %v768, %v764
    %v1017 = vpack.c.b16 %v769, %v765
    %v1018 = vpack.c.b16 %v770, %v766
    %v1019 = vpack.c.b16 %v775, %v771
    %v1020 = vpack.c.b16 %v776, %v772
    %v1021 = vpack.c.b16 %v777, %v773
    %v1022 = vpack.c.b16 %v778, %v774
    %v1023 = vpack.c.b16 %v783, %v779
    %v1024 = vpack.c.b16 %v784, %v780
    %v1025 = vpack.c.b16 %v785, %v781
    %v1026 = vpack.c.b16 %v786, %v782
    %v1027 = vpack.c.b16 %v791, %v787
    %v1028 = vpack.c.b16 %v792, %v788
    %v1029 = vpack.c.b16 %v793, %v789
    %v1030 = vpack.c.b16 %v794, %v790
    %v1031 = vpack.c.b16 %v799, %v795
    %v1032 = vpack.c.b16 %v800, %v796
    %v1033 = vpack.c.b16 %v801, %v797
    %v1034 = vpack.c.b16 %v802, %v798
    %v1035 = vpack.c.b16 %v807, %v803
    %v1036 = vpack.c.b16 %v808, %v804
    %v1037 = vpack.c.b16 %v809, %v805
    %v1038 = vpack.c.b16 %v810, %v806
    %v1039 = vpack.c.b16 %v815, %v811
    %v1040 = vpack.c.b16 %v816, %v812
    %v1041 = vpack.c.b16 %v817, %v813
    %v1042 = vpack.c.b16 %v818, %v814
    %v1043 = vpack.c.b16 %v823, %v819
    %v1044 = vpack.c.b16 %v824, %v820
    %v1045 = vpack.c.b16 %v825, %v821
    %v1046 = vpack.c.b16 %v826, %v822
    %v1047 = vpack.c.b16 %v831, %v827
    %v1048 = vpack.c.b16 %v832, %v828
    %v1049 = vpack.c.b16 %v833, %v829
    %v1050 = vpack.c.b16 %v834, %v830
    %v1051 = vpack.c.b16 %v839, %v835
    %v1052 = vpack.c.b16 %v840, %v836
    %v1053 = vpack.c.b16 %v841, %v837
    %v1054 = vpack.c.b16 %v842, %v838
    %v1055 = vpack.c.b16 %v847, %v843
    %v1056 = vpack.c.b16 %v848, %v844
    %v1057 = vpack.c.b16 %v849, %v845
    %v1058 = vpack.c.b16 %v850, %v846
    %v1059 = vpack.c.b16 %v855, %v851
    %v1060 = vpack.c.b16 %v856, %v852
    %v1061 = vpack.c.b16 %v857, %v853
    %v1062 = vpack.c.b16 %v858, %v854
    %v1063 = vpack.c.b16 %v863, %v859
    %v1064 = vpack.c.b16 %v864, %v860
    %v1065 = vpack.c.b16 %v865, %v861
    %v1066 = vpack.c.b16 %v866, %v862
    %v1067 = vpack.c.b16 %v871, %v867
    %v1068 = vpack.c.b16 %v872, %v868
    %v1069 = vpack.c.b16 %v873, %v869
    %v1070 = vpack.c.b16 %v874, %v870
    %v1071 = vpack.c.b16 %v879, %v875
    %v1072 = vpack.c.b16 %v880, %v876
    %v1073 = vpack.c.b16 %v881, %v877
    %v1074 = vpack.c.b16 %v882, %v878
    %v1075 = vpack.c.b16 %v887, %v883
    %v1076 = vpack.c.b16 %v888, %v884
    %v1077 = vpack.c.b16 %v889, %v885
    %v1078 = vpack.c.b16 %v890, %v886
    %v1079 = vpack.c.b16 %v895, %v891
    %v1080 = vpack.c.b16 %v896, %v892
    %v1081 = vpack.c.b16 %v897, %v893
    %v1082 = vpack.c.b16 %v898, %v894
    %v1083 = vpack.c.b16 %v903, %v899
    %v1084 = vpack.c.b16 %v904, %v900
    %v1085 = vpack.c.b16 %v905, %v901
    %v1086 = vpack.c.b16 %v906, %v902
    %v1087 = vpack.c.b16 %v911, %v907
    %v1088 = vpack.c.b16 %v912, %v908
    %v1089 = vpack.c.b16 %v913, %v909
    %v1090 = vpack.c.b16 %v914, %v910
    %v1091 = vpack.c.b16 %v919, %v915
    %v1092 = vpack.c.b16 %v920, %v916
    %v1093 = vpack.c.b16 %v921, %v917
    %v1094 = vpack.c.b16 %v922, %v918
    %v1095 = vpack.c.b16 %v927, %v923
    %v1096 = vpack.c.b16 %v928, %v924
    %v1097 = vpack.c.b16 %v929, %v925
    %v1098 = vpack.c.b16 %v930, %v926
    %v1099 = vpack.c.b16 %v935, %v931
    %v1100 = vpack.c.b16 %v936, %v932
    %v1101 = vpack.c.b16 %v937, %v933
    %v1102 = vpack.c.b16 %v938, %v934
    %v1103 = vpack.c.b16 %v943, %v939
    %v1104 = vpack.c.b16 %v944, %v940
    %v1105 = vpack.c.b16 %v945, %v941
    %v1106 = vpack.c.b16 %v946, %v942
    %v1107 = vpack.c.b16 %v951, %v947
    %v1108 = vpack.c.b16 %v952, %v948
    %v1109 = vpack.c.b16 %v953, %v949
    %v1110 = vpack.c.b16 %v954, %v950
    %v1111 = vpack.c.b16 %v959, %v955
    %v1112 = vpack.c.b16 %v960, %v956
    %v1113 = vpack.c.b16 %v961, %v957
    %v1114 = vpack.c.b16 %v962, %v958
    %v1115 = vpack.c.b16 %v967, %v963
    %v1116 = vpack.c.b16 %v968, %v964
    %v1117 = vpack.c.b16 %v969, %v965
    %v1118 = vpack.c.b16 %v970, %v966
    %v1119 = vpack.c.b16 %v975, %v971
    %v1120 = vpack.c.b16 %v976, %v972
    %v1121 = vpack.c.b16 %v977, %v973
    %v1122 = vpack.c.b16 %v978, %v974
    %v1123 = vpack.c.b16 %v983, %v979
    %v1124 = vpack.c.b16 %v984, %v980
    %v1125 = vpack.c.b16 %v985, %v981
    %v1126 = vpack.c.b16 %v986, %v982
    %v1127 = vpack.c.b16 %v991, %v987
    %v1128 = vpack.c.b16 %v992, %v988
    %v1129 = vpack.c.b16 %v993, %v989
    %v1130 = vpack.c.b16 %v994, %v990
    %v1131 = vpack.c.b16 %v999, %v995
    %v1132 = vpack.c.b16 %v1000, %v996
    %v1133 = vpack.c.b16 %v1001, %v997
    %v1134 = vpack.c.b16 %v1002, %v998
    %v1135 = vpack.c.b16 %v1007, %v1003
    %v1136 = vpack.c.b16 %v1008, %v1004
    %v1137 = vpack.c.b16 %v1009, %v1005
    %v1138 = vpack.c.b16 %v1010, %v1006
    %1267 = vmatprep.subr.bf16.mxu0 %v1012
    %1268 = vmatpush1.bf16.msra.mxu0 %v1011
    %1269 = vmatprep.subr.bf16.mxu0 %v1016
    %1270 = vmatpush1.bf16.msra.mxu0 %v1015
    %1271 = vmatprep.subr.bf16.mxu0 %v1020
    %1272 = vmatpush1.bf16.msra.mxu0 %v1019
    %1273 = vmatprep.subr.bf16.mxu0 %v1024
    %1274 = vmatpush1.bf16.msra.mxu0 %v1023
    %1275 = vmatprep.subr.bf16.mxu0 %v1028
    %1276 = vmatpush1.bf16.msra.mxu0 %v1027
    %1277 = vmatprep.subr.bf16.mxu0 %v1032
    %1278 = vmatpush1.bf16.msra.mxu0 %v1031
    %1279 = vmatprep.subr.bf16.mxu0 %v1036
    %1280 = vmatpush1.bf16.msra.mxu0 %v1035
    %1281 = vmatprep.subr.bf16.mxu0 %v1040
    %1282 = vmatpush1.bf16.msra.mxu0 %v1039
    %1283 = vmatprep.subr.bf16.mxu0 %v1044
    %1284 = vmatpush1.bf16.msra.mxu0 %v1043
    %1285 = vmatprep.subr.bf16.mxu0 %v1048
    %1286 = vmatpush1.bf16.msra.mxu0 %v1047
    %1287 = vmatprep.subr.bf16.mxu0 %v1052
    %1288 = vmatpush1.bf16.msra.mxu0 %v1051
    %1289 = vmatprep.subr.bf16.mxu0 %v1056
    %1290 = vmatpush1.bf16.msra.mxu0 %v1055
    %1291 = vmatprep.subr.bf16.mxu0 %v1060
    %1292 = vmatpush1.bf16.msra.mxu0 %v1059
    %1293 = vmatprep.subr.bf16.mxu0 %v1064
    %1294 = vmatpush1.bf16.msra.mxu0 %v1063
    %1295 = vmatprep.subr.bf16.mxu0 %v1068
    %1296 = vmatpush1.bf16.msra.mxu0 %v1067
    %1297 = vmatprep.subr.bf16.mxu0 %v1072
    %1298 = vmatpush1.bf16.msra.mxu0 %v1071
    %1299 = vmatprep.mubr.bf16.mxu0 %v469
    %1300 = vmatmul.mubr.bf16.gmra.mrb[0].mxu0 %v468
    %v1301 = vpop.f32.mrb[0].mxu0
    %v1302 = vadd.f32 %v610, %v1301
    %v1303 = vpop.f32.mrb[0].mxu0
    %v1304 = vadd.f32 %v614, %v1303
    %v1305 = vpop.f32.mrb[0].mxu0
    %v1306 = vadd.f32 %v610, %v1305
    %v1307 = vpop.f32.mrb[0].mxu0
    %v1308 = vadd.f32 %v614, %v1307
    %1309 = vmatprep.mubr.bf16.mxu0 %v473
    %1310 = vmatmul.mubr.bf16.gmra.mrb[0].mxu0 %v472
    %v1311 = vpop.f32.mrb[0].mxu0
    %v1312 = vadd.f32 %v610, %v1311
    %v1313 = vpop.f32.mrb[0].mxu0
    %v1314 = vadd.f32 %v614, %v1313
    %v1315 = vpop.f32.mrb[0].mxu0
    %v1316 = vadd.f32 %v610, %v1315
    %v1317 = vpop.f32.mrb[0].mxu0
    %v1318 = vadd.f32 %v614, %v1317
    %1319 = vdwg.mxu0
    %1320 = vmatprep.subr.bf16.mxu0 %v1076
    %1321 = vmatpush1.bf16.msra.mxu0 %v1075
    %1322 = vmatprep.subr.bf16.mxu0 %v1080
    %1323 = vmatpush1.bf16.msra.mxu0 %v1079
    %1324 = vmatprep.subr.bf16.mxu0 %v1084
    %1325 = vmatpush1.bf16.msra.mxu0 %v1083
    %1326 = vmatprep.subr.bf16.mxu0 %v1088
    %1327 = vmatpush1.bf16.msra.mxu0 %v1087
    %1328 = vmatprep.subr.bf16.mxu0 %v1092
    %1329 = vmatpush1.bf16.msra.mxu0 %v1091
    %1330 = vmatprep.subr.bf16.mxu0 %v1096
    %1331 = vmatpush1.bf16.msra.mxu0 %v1095
    %1332 = vmatprep.subr.bf16.mxu0 %v1100
    %1333 = vmatpush1.bf16.msra.mxu0 %v1099
    %1334 = vmatprep.subr.bf16.mxu0 %v1104
    %1335 = vmatpush1.bf16.msra.mxu0 %v1103
    %1336 = vmatprep.subr.bf16.mxu0 %v1108
    %1337 = vmatpush1.bf16.msra.mxu0 %v1107
    %1338 = vmatprep.subr.bf16.mxu0 %v1112
    %1339 = vmatpush1.bf16.msra.mxu0 %v1111
    %1340 = vmatprep.subr.bf16.mxu0 %v1116
    %1341 = vmatpush1.bf16.msra.mxu0 %v1115
    %1342 = vmatprep.subr.bf16.mxu0 %v1120
    %1343 = vmatpush1.bf16.msra.mxu0 %v1119
    %1344 = vmatprep.subr.bf16.mxu0 %v1124
    %1345 = vmatpush1.bf16.msra.mxu0 %v1123
    %1346 = vmatprep.subr.bf16.mxu0 %v1128
    %1347 = vmatpush1.bf16.msra.mxu0 %v1127
    %1348 = vmatprep.subr.bf16.mxu0 %v1132
    %1349 = vmatpush1.bf16.msra.mxu0 %v1131
    %1350 = vmatprep.subr.bf16.mxu0 %v1136
    %1351 = vmatpush1.bf16.msra.mxu0 %v1135
    %1352 = vmatprep.mubr.bf16.mxu0 %v471
    %1353 = vmatmul.mubr.bf16.gmra.mrb[0].mxu0 %v470
    %v1354 = vpop.f32.mrb[0].mxu0
    %v1355 = vadd.f32 %v1302, %v1354
    %v1356 = vpop.f32.mrb[0].mxu0
    %v1357 = vadd.f32 %v1304, %v1356
    %v1358 = vpop.f32.mrb[0].mxu0
    %v1359 = vadd.f32 %v1306, %v1358
    %v1360 = vpop.f32.mrb[0].mxu0
    %v1361 = vadd.f32 %v1308, %v1360
    %1362 = vmatprep.mubr.bf16.mxu0 %v475
    %1363 = vmatmul.mubr.bf16.gmra.mrb[0].mxu0 %v474
    %v1364 = vpop.f32.mrb[0].mxu0
    %v1365 = vadd.f32 %v1312, %v1364
    %v1366 = vpop.f32.mrb[0].mxu0
    %v1367 = vadd.f32 %v1314, %v1366
    %v1368 = vpop.f32.mrb[0].mxu0
    %v1369 = vadd.f32 %v1316, %v1368
    %v1370 = vpop.f32.mrb[0].mxu0
    %v1371 = vadd.f32 %v1318, %v1370
    %1372 = vdwg.mxu0
    %1373 = vmatprep.subr.bf16.mxu0 %v1014
    %1374 = vmatpush1.bf16.msra.mxu0 %v1013
    %1375 = vmatprep.subr.bf16.mxu0 %v1018
    %1376 = vmatpush1.bf16.msra.mxu0 %v1017
    %1377 = vmatprep.subr.bf16.mxu0 %v1022
    %1378 = vmatpush1.bf16.msra.mxu0 %v1021
    %1379 = vmatprep.subr.bf16.mxu0 %v1026
    %1380 = vmatpush1.bf16.msra.mxu0 %v1025
    %1381 = vmatprep.subr.bf16.mxu0 %v1030
    %1382 = vmatpush1.bf16.msra.mxu0 %v1029
    %1383 = vmatprep.subr.bf16.mxu0 %v1034
    %1384 = vmatpush1.bf16.msra.mxu0 %v1033
    %1385 = vmatprep.subr.bf16.mxu0 %v1038
    %1386 = vmatpush1.bf16.msra.mxu0 %v1037
    %1387 = vmatprep.subr.bf16.mxu0 %v1042
    %1388 = vmatpush1.bf16.msra.mxu0 %v1041
    %1389 = vmatprep.subr.bf16.mxu0 %v1046
    %1390 = vmatpush1.bf16.msra.mxu0 %v1045
    %1391 = vmatprep.subr.bf16.mxu0 %v1050
    %1392 = vmatpush1.bf16.msra.mxu0 %v1049
    %1393 = vmatprep.subr.bf16.mxu0 %v1054
    %1394 = vmatpush1.bf16.msra.mxu0 %v1053
    %1395 = vmatprep.subr.bf16.mxu0 %v1058
    %1396 = vmatpush1.bf16.msra.mxu0 %v1057
    %1397 = vmatprep.subr.bf16.mxu0 %v1062
    %1398 = vmatpush1.bf16.msra.mxu0 %v1061
    %1399 = vmatprep.subr.bf16.mxu0 %v1066
    %1400 = vmatpush1.bf16.msra.mxu0 %v1065
    %1401 = vmatprep.subr.bf16.mxu0 %v1070
    %1402 = vmatpush1.bf16.msra.mxu0 %v1069
    %1403 = vmatprep.subr.bf16.mxu0 %v1074
    %1404 = vmatpush1.bf16.msra.mxu0 %v1073
    %1405 = vmatprep.mubr.bf16.mxu0 %v469
    %1406 = vmatmul.mubr.bf16.gmra.mrb[0].mxu0 %v468
    %v1407 = vpop.f32.mrb[0].mxu0
    %v1408 = vadd.f32 %v618, %v1407
    %v1409 = vpop.f32.mrb[0].mxu0
    %v1410 = vadd.f32 %v622, %v1409
    %v1411 = vpop.f32.mrb[0].mxu0
    %v1412 = vadd.f32 %v618, %v1411
    %v1413 = vpop.f32.mrb[0].mxu0
    %v1414 = vadd.f32 %v622, %v1413
    %1415 = vmatprep.mubr.bf16.mxu0 %v473
    %1416 = vmatmul.mubr.bf16.gmra.mrb[0].mxu0 %v472
    %v1417 = vpop.f32.mrb[0].mxu0
    %v1418 = vadd.f32 %v618, %v1417
    %v1419 = vpop.f32.mrb[0].mxu0
    %v1420 = vadd.f32 %v622, %v1419
    %v1421 = vpop.f32.mrb[0].mxu0
    %v1422 = vadd.f32 %v618, %v1421
    %v1423 = vpop.f32.mrb[0].mxu0
    %v1424 = vadd.f32 %v622, %v1423
    %1425 = vdwg.mxu0
    %1426 = vmatprep.subr.bf16.mxu0 %v1078
    %1427 = vmatpush1.bf16.msra.mxu0 %v1077
    %1428 = vmatprep.subr.bf16.mxu0 %v1082
    %1429 = vmatpush1.bf16.msra.mxu0 %v1081
    %1430 = vmatprep.subr.bf16.mxu0 %v1086
    %1431 = vmatpush1.bf16.msra.mxu0 %v1085
    %1432 = vmatprep.subr.bf16.mxu0 %v1090
    %1433 = vmatpush1.bf16.msra.mxu0 %v1089
    %1434 = vmatprep.subr.bf16.mxu0 %v1094
    %1435 = vmatpush1.bf16.msra.mxu0 %v1093
    %1436 = vmatprep.subr.bf16.mxu0 %v1098
    %1437 = vmatpush1.bf16.msra.mxu0 %v1097
    %1438 = vmatprep.subr.bf16.mxu0 %v1102
    %1439 = vmatpush1.bf16.msra.mxu0 %v1101
    %1440 = vmatprep.subr.bf16.mxu0 %v1106
    %1441 = vmatpush1.bf16.msra.mxu0 %v1105
    %1442 = vmatprep.subr.bf16.mxu0 %v1110
    %1443 = vmatpush1.bf16.msra.mxu0 %v1109
    %1444 = vmatprep.subr.bf16.mxu0 %v1114
    %1445 = vmatpush1.bf16.msra.mxu0 %v1113
    %1446 = vmatprep.subr.bf16.mxu0 %v1118
    %1447 = vmatpush1.bf16.msra.mxu0 %v1117
    %1448 = vmatprep.subr.bf16.mxu0 %v1122
    %1449 = vmatpush1.bf16.msra.mxu0 %v1121
    %1450 = vmatprep.subr.bf16.mxu0 %v1126
    %1451 = vmatpush1.bf16.msra.mxu0 %v1125
    %1452 = vmatprep.subr.bf16.mxu0 %v1130
    %1453 = vmatpush1.bf16.msra.mxu0 %v1129
    %1454 = vmatprep.subr.bf16.mxu0 %v1134
    %1455 = vmatpush1.bf16.msra.mxu0 %v1133
    %1456 = vmatprep.subr.bf16.mxu0 %v1138
    %1457 = vmatpush1.bf16.msra.mxu0 %v1137
    %1458 = vmatprep.mubr.bf16.mxu0 %v471
    %1459 = vmatmul.mubr.bf16.gmra.mrb[0].mxu0 %v470
    %v1460 = vpop.f32.mrb[0].mxu0
    %v1461 = vadd.f32 %v1408, %v1460
    %v1462 = vpop.f32.mrb[0].mxu0
    %v1463 = vadd.f32 %v1410, %v1462
    %v1464 = vpop.f32.mrb[0].mxu0
    %v1465 = vadd.f32 %v1412, %v1464
    %v1466 = vpop.f32.mrb[0].mxu0
    %v1467 = vadd.f32 %v1414, %v1466
    %1468 = vmatprep.mubr.bf16.mxu0 %v475
    %1469 = vmatmul.mubr.bf16.gmra.mrb[0].mxu0 %v474
    %v1470 = vpop.f32.mrb[0].mxu0
    %v1471 = vadd.f32 %v1418, %v1470
    %v1472 = vpop.f32.mrb[0].mxu0
    %v1473 = vadd.f32 %v1420, %v1472
    %v1474 = vpop.f32.mrb[0].mxu0
    %v1475 = vadd.f32 %v1422, %v1474
    %v1476 = vpop.f32.mrb[0].mxu0
    %v1477 = vadd.f32 %v1424, %v1476
    %1478 = vdwg.mxu0
    %v1479 = vmul.f32 %v1355, 0.5
    %v1480 = vmul.f32 %v1357, 0.5
    %v1481 = vmul.f32 %v1461, 0.5
    %v1482 = vmul.f32 %v1463, 0.5
    %v1483 = vmul.f32 %v1359, 0.5
    %v1484 = vmul.f32 %v1361, 0.5
    %v1485 = vmul.f32 %v1465, 0.5
    %v1486 = vmul.f32 %v1467, 0.5
    %v1487 = vmul.f32 %v1365, 0.5
    %v1488 = vmul.f32 %v1367, 0.5
    %v1489 = vmul.f32 %v1471, 0.5
    %v1490 = vmul.f32 %v1473, 0.5
    %v1491 = vmul.f32 %v1369, 0.5
    %v1492 = vmul.f32 %v1371, 0.5
    %v1493 = vmul.f32 %v1475, 0.5
    %v1494 = vmul.f32 %v1477, 0.5
    %v1495 = vtanh.pop %v1479
    %v1496 = vtanh.pop %v1480
    %v1497 = vtanh.pop %v1481
    %v1498 = vtanh.pop %v1482
    %v1499 = vtanh.pop %v1483
    %v1500 = vtanh.pop %v1484
    %v1501 = vtanh.pop %v1485
    %v1502 = vtanh.pop %v1486
    %v1503 = vtanh.pop %v1487
    %v1504 = vtanh.pop %v1488
    %v1505 = vtanh.pop %v1489
    %v1506 = vtanh.pop %v1490
    %v1507 = vtanh.pop %v1491
    %v1508 = vtanh.pop %v1492
    %v1509 = vtanh.pop %v1493
    %v1510 = vtanh.pop %v1494
    %v1511 = vadd.f32 %v1495, 1.0
    %v1512 = vadd.f32 %v1496, 1.0
    %v1513 = vadd.f32 %v1497, 1.0
    %v1514 = vadd.f32 %v1498, 1.0
    %v1515 = vadd.f32 %v1499, 1.0
    %v1516 = vadd.f32 %v1500, 1.0
    %v1517 = vadd.f32 %v1501, 1.0
    %v1518 = vadd.f32 %v1502, 1.0
    %v1519 = vadd.f32 %v1503, 1.0
    %v1520 = vadd.f32 %v1504, 1.0
    %v1521 = vadd.f32 %v1505, 1.0
    %v1522 = vadd.f32 %v1506, 1.0
    %v1523 = vadd.f32 %v1507, 1.0
    %v1524 = vadd.f32 %v1508, 1.0
    %v1525 = vadd.f32 %v1509, 1.0
    %v1526 = vadd.f32 %v1510, 1.0
    %v1527 = vmul.f32 %v1511, 0.5
    %v1528 = vmul.f32 %v1512, 0.5
    %v1529 = vmul.f32 %v1513, 0.5
    %v1530 = vmul.f32 %v1514, 0.5
    %v1531 = vmul.f32 %v1515, 0.5
    %v1532 = vmul.f32 %v1516, 0.5
    %v1533 = vmul.f32 %v1517, 0.5
    %v1534 = vmul.f32 %v1518, 0.5
    %v1535 = vmul.f32 %v1519, 0.5
    %v1536 = vmul.f32 %v1520, 0.5
    %v1537 = vmul.f32 %v1521, 0.5
    %v1538 = vmul.f32 %v1522, 0.5
    %v1539 = vmul.f32 %v1523, 0.5
    %v1540 = vmul.f32 %v1524, 0.5
    %v1541 = vmul.f32 %v1525, 0.5
    %v1542 = vmul.f32 %v1526, 0.5
    %v1543 = vmul.f32 %v1355, %v1527
    %v1544 = vmul.f32 %v1357, %v1528
    %v1545 = vmul.f32 %v1461, %v1529
    %v1546 = vmul.f32 %v1463, %v1530
    %v1547 = vmul.f32 %v1359, %v1531
    %v1548 = vmul.f32 %v1361, %v1532
    %v1549 = vmul.f32 %v1465, %v1533
    %v1550 = vmul.f32 %v1467, %v1534
    %v1551 = vmul.f32 %v1365, %v1535
    %v1552 = vmul.f32 %v1367, %v1536
    %v1553 = vmul.f32 %v1471, %v1537
    %v1554 = vmul.f32 %v1473, %v1538
    %v1555 = vmul.f32 %v1369, %v1539
    %v1556 = vmul.f32 %v1371, %v1540
    %v1557 = vmul.f32 %v1475, %v1541
    %v1558 = vmul.f32 %v1477, %v1542
    %v1559 = vpack.c.bf16 %v1547, %v1543
    %v1560 = vpack.c.bf16 %v1548, %v1544
    %v1561 = vpack.c.bf16 %v1549, %v1545
    %v1562 = vpack.c.bf16 %v1550, %v1546
    %v1563 = vpack.c.bf16 %v1555, %v1551
    %v1564 = vpack.c.bf16 %v1556, %v1552
    %v1565 = vpack.c.bf16 %v1557, %v1553
    %v1566 = vpack.c.bf16 %v1558, %v1554
    %v1567 = vld [vmem:[%s3] sm:$0xf]
    %v1568 = vld [vmem:[%s3 + $0x4] sm:$0xf]
    %v1569 = vld [vmem:[%s3 + $0x8] sm:$0xf]
    %v1570 = vld [vmem:[%s3 + $0xc] sm:$0xf]
    %v1571 = vld [vmem:[%s3 + $0x10] sm:$0xf]
    %v1572 = vld [vmem:[%s3 + $0x14] sm:$0xf]
    %v1573 = vld [vmem:[%s3 + $0x18] sm:$0xf]
    %v1574 = vld [vmem:[%s3 + $0x1c] sm:$0xf]
    %v1575 = vld [vmem:[%s3 + $0x20] sm:$0xf]
    %v1576 = vld [vmem:[%s3 + $0x24] sm:$0xf]
    %v1577 = vld [vmem:[%s3 + $0x28] sm:$0xf]
    %v1578 = vld [vmem:[%s3 + $0x2c] sm:$0xf]
    %v1579 = vld [vmem:[%s3 + $0x30] sm:$0xf]
    %v1580 = vld [vmem:[%s3 + $0x34] sm:$0xf]
    %v1581 = vld [vmem:[%s3 + $0x38] sm:$0xf]
    %v1582 = vld [vmem:[%s3 + $0x3c] sm:$0xf]
    %v1583 = vld [vmem:[%s3 + $0x40] sm:$0xf]
    %v1584 = vld [vmem:[%s3 + $0x44] sm:$0xf]
    %v1585 = vld [vmem:[%s3 + $0x48] sm:$0xf]
    %v1586 = vld [vmem:[%s3 + $0x4c] sm:$0xf]
    %v1587 = vld [vmem:[%s3 + $0x50] sm:$0xf]
    %v1588 = vld [vmem:[%s3 + $0x54] sm:$0xf]
    %v1589 = vld [vmem:[%s3 + $0x58] sm:$0xf]
    %v1590 = vld [vmem:[%s3 + $0x5c] sm:$0xf]
    %v1591 = vld [vmem:[%s3 + $0x60] sm:$0xf]
    %v1592 = vld [vmem:[%s3 + $0x64] sm:$0xf]
    %v1593 = vld [vmem:[%s3 + $0x68] sm:$0xf]
    %v1594 = vld [vmem:[%s3 + $0x6c] sm:$0xf]
    %v1595 = vld [vmem:[%s3 + $0x70] sm:$0xf]
    %v1596 = vld [vmem:[%s3 + $0x74] sm:$0xf]
    %v1597 = vld [vmem:[%s3 + $0x78] sm:$0xf]
    %v1598 = vld [vmem:[%s3 + $0x7c] sm:$0xf]
    %v1599 = vld [vmem:[%s3 + $0x80] sm:$0xf]
    %v1600 = vld [vmem:[%s3 + $0x84] sm:$0xf]
    %v1601 = vld [vmem:[%s3 + $0x88] sm:$0xf]
    %v1602 = vld [vmem:[%s3 + $0x8c] sm:$0xf]
    %v1603 = vld [vmem:[%s3 + $0x90] sm:$0xf]
    %v1604 = vld [vmem:[%s3 + $0x94] sm:$0xf]
    %v1605 = vld [vmem:[%s3 + $0x98] sm:$0xf]
    %v1606 = vld [vmem:[%s3 + $0x9c] sm:$0xf]
    %v1607 = vld [vmem:[%s3 + $0xa0] sm:$0xf]
    %v1608 = vld [vmem:[%s3 + $0xa4] sm:$0xf]
    %v1609 = vld [vmem:[%s3 + $0xa8] sm:$0xf]
    %v1610 = vld [vmem:[%s3 + $0xac] sm:$0xf]
    %v1611 = vld [vmem:[%s3 + $0xb0] sm:$0xf]
    %v1612 = vld [vmem:[%s3 + $0xb4] sm:$0xf]
    %v1613 = vld [vmem:[%s3 + $0xb8] sm:$0xf]
    %v1614 = vld [vmem:[%s3 + $0xbc] sm:$0xf]
    %v1615 = vld [vmem:[%s3 + $0xc0] sm:$0xf]
    %v1616 = vld [vmem:[%s3 + $0xc4] sm:$0xf]
    %v1617 = vld [vmem:[%s3 + $0xc8] sm:$0xf]
    %v1618 = vld [vmem:[%s3 + $0xcc] sm:$0xf]
    %v1619 = vld [vmem:[%s3 + $0xd0] sm:$0xf]
    %v1620 = vld [vmem:[%s3 + $0xd4] sm:$0xf]
    %v1621 = vld [vmem:[%s3 + $0xd8] sm:$0xf]
    %v1622 = vld [vmem:[%s3 + $0xdc] sm:$0xf]
    %v1623 = vld [vmem:[%s3 + $0xe0] sm:$0xf]
    %v1624 = vld [vmem:[%s3 + $0xe4] sm:$0xf]
    %v1625 = vld [vmem:[%s3 + $0xe8] sm:$0xf]
    %v1626 = vld [vmem:[%s3 + $0xec] sm:$0xf]
    %v1627 = vld [vmem:[%s3 + $0xf0] sm:$0xf]
    %v1628 = vld [vmem:[%s3 + $0xf4] sm:$0xf]
    %v1629 = vld [vmem:[%s3 + $0xf8] sm:$0xf]
    %v1630 = vld [vmem:[%s3 + $0xfc] sm:$0xf]
    %v1631 = vld [vmem:[#allocation4 + $0x2] ss:$0 sm:$0xff]
    %v1696 = vunpack.c.l.b16 %v1567
    %v1697 = vunpack.c.l.b16 %v1568
    %v1698 = vunpack.c.l.b16 %v1569
    %v1699 = vunpack.c.l.b16 %v1570
    %v1700 = vunpack.c.l.b16 %v1571
    %v1701 = vunpack.c.l.b16 %v1572
    %v1702 = vunpack.c.l.b16 %v1573
    %v1703 = vunpack.c.l.b16 %v1574
    %v1704 = vunpack.c.l.b16 %v1575
    %v1705 = vunpack.c.l.b16 %v1576
    %v1706 = vunpack.c.l.b16 %v1577
    %v1707 = vunpack.c.l.b16 %v1578
    %v1708 = vunpack.c.l.b16 %v1579
    %v1709 = vunpack.c.l.b16 %v1580
    %v1710 = vunpack.c.l.b16 %v1581
    %v1711 = vunpack.c.l.b16 %v1582
    %v1712 = vunpack.c.l.b16 %v1583
    %v1713 = vunpack.c.l.b16 %v1584
    %v1714 = vunpack.c.l.b16 %v1585
    %v1715 = vunpack.c.l.b16 %v1586
    %v1716 = vunpack.c.l.b16 %v1587
    %v1717 = vunpack.c.l.b16 %v1588
    %v1718 = vunpack.c.l.b16 %v1589
    %v1719 = vunpack.c.l.b16 %v1590
    %v1720 = vunpack.c.l.b16 %v1591
    %v1721 = vunpack.c.l.b16 %v1592
    %v1722 = vunpack.c.l.b16 %v1593
    %v1723 = vunpack.c.l.b16 %v1594
    %v1724 = vunpack.c.l.b16 %v1595
    %v1725 = vunpack.c.l.b16 %v1596
    %v1726 = vunpack.c.l.b16 %v1597
    %v1727 = vunpack.c.l.b16 %v1598
    %v1728 = vunpack.c.l.b16 %v1599
    %v1729 = vunpack.c.l.b16 %v1600
    %v1730 = vunpack.c.l.b16 %v1601
    %v1731 = vunpack.c.l.b16 %v1602
    %v1732 = vunpack.c.l.b16 %v1603
    %v1733 = vunpack.c.l.b16 %v1604
    %v1734 = vunpack.c.l.b16 %v1605
    %v1735 = vunpack.c.l.b16 %v1606
    %v1736 = vunpack.c.l.b16 %v1607
    %v1737 = vunpack.c.l.b16 %v1608
    %v1738 = vunpack.c.l.b16 %v1609
    %v1739 = vunpack.c.l.b16 %v1610
    %v1740 = vunpack.c.l.b16 %v1611
    %v1741 = vunpack.c.l.b16 %v1612
    %v1742 = vunpack.c.l.b16 %v1613
    %v1743 = vunpack.c.l.b16 %v1614
    %v1744 = vunpack.c.l.b16 %v1615
    %v1745 = vunpack.c.l.b16 %v1616
    %v1746 = vunpack.c.l.b16 %v1617
    %v1747 = vunpack.c.l.b16 %v1618
    %v1748 = vunpack.c.l.b16 %v1619
    %v1749 = vunpack.c.l.b16 %v1620
    %v1750 = vunpack.c.l.b16 %v1621
    %v1751 = vunpack.c.l.b16 %v1622
    %v1752 = vunpack.c.l.b16 %v1623
    %v1753 = vunpack.c.l.b16 %v1624
    %v1754 = vunpack.c.l.b16 %v1625
    %v1755 = vunpack.c.l.b16 %v1626
    %v1756 = vunpack.c.l.b16 %v1627
    %v1757 = vunpack.c.l.b16 %v1628
    %v1758 = vunpack.c.l.b16 %v1629
    %v1759 = vunpack.c.l.b16 %v1630
    %v1760 = vpack.c.b16 %v1697, %v1696
    %v1761 = vpack.c.b16 %v1699, %v1698
    %v1762 = vpack.c.b16 %v1701, %v1700
    %v1763 = vpack.c.b16 %v1703, %v1702
    %v1764 = vpack.c.b16 %v1705, %v1704
    %v1765 = vpack.c.b16 %v1707, %v1706
    %v1766 = vpack.c.b16 %v1709, %v1708
    %v1767 = vpack.c.b16 %v1711, %v1710
    %v1768 = vpack.c.b16 %v1713, %v1712
    %v1769 = vpack.c.b16 %v1715, %v1714
    %v1770 = vpack.c.b16 %v1717, %v1716
    %v1771 = vpack.c.b16 %v1719, %v1718
    %v1772 = vpack.c.b16 %v1721, %v1720
    %v1773 = vpack.c.b16 %v1723, %v1722
    %v1774 = vpack.c.b16 %v1725, %v1724
    %v1775 = vpack.c.b16 %v1727, %v1726
    %v1776 = vpack.c.b16 %v1729, %v1728
    %v1777 = vpack.c.b16 %v1731, %v1730
    %v1778 = vpack.c.b16 %v1733, %v1732
    %v1779 = vpack.c.b16 %v1735, %v1734
    %v1780 = vpack.c.b16 %v1737, %v1736
    %v1781 = vpack.c.b16 %v1739, %v1738
    %v1782 = vpack.c.b16 %v1741, %v1740
    %v1783 = vpack.c.b16 %v1743, %v1742
    %v1784 = vpack.c.b16 %v1745, %v1744
    %v1785 = vpack.c.b16 %v1747, %v1746
    %v1786 = vpack.c.b16 %v1749, %v1748
    %v1787 = vpack.c.b16 %v1751, %v1750
    %v1788 = vpack.c.b16 %v1753, %v1752
    %v1789 = vpack.c.b16 %v1755, %v1754
    %v1790 = vpack.c.b16 %v1757, %v1756
    %v1791 = vpack.c.b16 %v1759, %v1758
    %1824 = vmatprep.subr.bf16.mxu0 0
    %1825 = vmatpush1.bf16.msra.mxu0 %v1760
    %1826 = vmatprep.subr.bf16.mxu0 0
    %1827 = vmatpush1.bf16.msra.mxu0 %v1761
    %1828 = vmatprep.subr.bf16.mxu0 0
    %1829 = vmatpush1.bf16.msra.mxu0 %v1762
    %1830 = vmatprep.subr.bf16.mxu0 0
    %1831 = vmatpush1.bf16.msra.mxu0 %v1763
    %1832 = vmatprep.subr.bf16.mxu0 0
    %1833 = vmatpush1.bf16.msra.mxu0 %v1764
    %1834 = vmatprep.subr.bf16.mxu0 0
    %1835 = vmatpush1.bf16.msra.mxu0 %v1765
    %1836 = vmatprep.subr.bf16.mxu0 0
    %1837 = vmatpush1.bf16.msra.mxu0 %v1766
    %1838 = vmatprep.subr.bf16.mxu0 0
    %1839 = vmatpush1.bf16.msra.mxu0 %v1767
    %1840 = vmatprep.subr.bf16.mxu0 0
    %1841 = vmatpush1.bf16.msra.mxu0 %v1768
    %1842 = vmatprep.subr.bf16.mxu0 0
    %1843 = vmatpush1.bf16.msra.mxu0 %v1769
    %1844 = vmatprep.subr.bf16.mxu0 0
    %1845 = vmatpush1.bf16.msra.mxu0 %v1770
    %1846 = vmatprep.subr.bf16.mxu0 0
    %1847 = vmatpush1.bf16.msra.mxu0 %v1771
    %1848 = vmatprep.subr.bf16.mxu0 0
    %1849 = vmatpush1.bf16.msra.mxu0 %v1772
    %1850 = vmatprep.subr.bf16.mxu0 0
    %1851 = vmatpush1.bf16.msra.mxu0 %v1773
    %1852 = vmatprep.subr.bf16.mxu0 0
    %1853 = vmatpush1.bf16.msra.mxu0 %v1774
    %1854 = vmatprep.subr.bf16.mxu0 0
    %1855 = vmatpush1.bf16.msra.mxu0 %v1775
    %1856 = vmatprep.mubr.bf16.mxu0 %v1560
    %1857 = vmatmul.mubr.bf16.gmra.mrb[0].mxu0 %v1559
    %v1858 = vpop.f32.mrb[0].mxu0
    %v1859 = vadd.f32 %v1631, %v1858
    %v1860 = vpop.f32.mrb[0].mxu0
    %v1861 = vpop.f32.mrb[0].mxu0
    %v1862 = vadd.f32 %v1631, %v1861
    %v1863 = vpop.f32.mrb[0].mxu0
    %1864 = vmatprep.mubr.bf16.mxu0 %v1564
    %1865 = vmatmul.mubr.bf16.gmra.mrb[0].mxu0 %v1563
    %v1866 = vpop.f32.mrb[0].mxu0
    %v1867 = vadd.f32 %v1631, %v1866
    %v1868 = vpop.f32.mrb[0].mxu0
    %v1869 = vpop.f32.mrb[0].mxu0
    %v1870 = vadd.f32 %v1631, %v1869
    %v1871 = vpop.f32.mrb[0].mxu0
    %1872 = vdwg.mxu0
    %1873 = vmatprep.subr.bf16.mxu0 0
    %1874 = vmatpush1.bf16.msra.mxu0 %v1776
    %1875 = vmatprep.subr.bf16.mxu0 0
    %1876 = vmatpush1.bf16.msra.mxu0 %v1777
    %1877 = vmatprep.subr.bf16.mxu0 0
    %1878 = vmatpush1.bf16.msra.mxu0 %v1778
    %1879 = vmatprep.subr.bf16.mxu0 0
    %1880 = vmatpush1.bf16.msra.mxu0 %v1779
    %1881 = vmatprep.subr.bf16.mxu0 0
    %1882 = vmatpush1.bf16.msra.mxu0 %v1780
    %1883 = vmatprep.subr.bf16.mxu0 0
    %1884 = vmatpush1.bf16.msra.mxu0 %v1781
    %1885 = vmatprep.subr.bf16.mxu0 0
    %1886 = vmatpush1.bf16.msra.mxu0 %v1782
    %1887 = vmatprep.subr.bf16.mxu0 0
    %1888 = vmatpush1.bf16.msra.mxu0 %v1783
    %1889 = vmatprep.subr.bf16.mxu0 0
    %1890 = vmatpush1.bf16.msra.mxu0 %v1784
    %1891 = vmatprep.subr.bf16.mxu0 0
    %1892 = vmatpush1.bf16.msra.mxu0 %v1785
    %1893 = vmatprep.subr.bf16.mxu0 0
    %1894 = vmatpush1.bf16.msra.mxu0 %v1786
    %1895 = vmatprep.subr.bf16.mxu0 0
    %1896 = vmatpush1.bf16.msra.mxu0 %v1787
    %1897 = vmatprep.subr.bf16.mxu0 0
    %1898 = vmatpush1.bf16.msra.mxu0 %v1788
    %1899 = vmatprep.subr.bf16.mxu0 0
    %1900 = vmatpush1.bf16.msra.mxu0 %v1789
    %1901 = vmatprep.subr.bf16.mxu0 0
    %1902 = vmatpush1.bf16.msra.mxu0 %v1790
    %1903 = vmatprep.subr.bf16.mxu0 0
    %1904 = vmatpush1.bf16.msra.mxu0 %v1791
    %1905 = vmatprep.mubr.bf16.mxu0 %v1562
    %1906 = vmatmul.mubr.bf16.gmra.mrb[0].mxu0 %v1561
    %v1907 = vpop.f32.mrb[0].mxu0
    %v1908 = vadd.f32 %v1859, %v1907
    %v1909 = vpop.f32.mrb[0].mxu0
    %v1910 = vpop.f32.mrb[0].mxu0
    %v1911 = vadd.f32 %v1862, %v1910
    %v1912 = vpop.f32.mrb[0].mxu0
    %1913 = vmatprep.mubr.bf16.mxu0 %v1566
    %1914 = vmatmul.mubr.bf16.gmra.mrb[0].mxu0 %v1565
    %v1915 = vpop.f32.mrb[0].mxu0
    %v1916 = vadd.f32 %v1867, %v1915
    %v1917 = vpop.f32.mrb[0].mxu0
    %v1918 = vpop.f32.mrb[0].mxu0
    %v1919 = vadd.f32 %v1870, %v1918
    %v1920 = vpop.f32.mrb[0].mxu0
    %1921 = vdwg.mxu0
    %v1922 = vld [vmem:[%s1] sm:$0xff]
    %v1923 = vld [vmem:[%s1 + $0x8] sm:$0xff]
    %v1924 = vld [vmem:[%s1 + $0x10] sm:$0xff]
    %v1925 = vld [vmem:[%s1 + $0x18] sm:$0xff]
    %v1926 = vadd.f32 %v1908, %v1922
    %v1927 = vadd.f32 %v1911, %v1923
    %v1928 = vadd.f32 %v1916, %v1924
    %v1929 = vadd.f32 %v1919, %v1925
    %v1930 = vpack.c.bf16 %v1927, %v1926
    %v1931 = vpack.c.bf16 %v1929, %v1928
    %v1932 = vld [vmem:[%s3 + $0x100] sm:$0xf]
    %v1933 = vld [vmem:[%s3 + $0x104] sm:$0xf]
    %v1934 = vld [vmem:[%s3 + $0x108] sm:$0xf]
    %v1935 = vld [vmem:[%s3 + $0x10c] sm:$0xf]
    %v1936 = vld [vmem:[%s3 + $0x110] sm:$0xf]
    %v1937 = vld [vmem:[%s3 + $0x114] sm:$0xf]
    %v1938 = vld [vmem:[%s3 + $0x118] sm:$0xf]
    %v1939 = vld [vmem:[%s3 + $0x11c] sm:$0xf]
    %v1940 = vld [vmem:[#allocation4 + $0x3] ss:$0 sm:$0xff]
    %v1949 = vunpack.c.l.b16 %v1932
    %v1950 = vunpack.c.l.b16 %v1933
    %v1951 = vunpack.c.l.b16 %v1934
    %v1952 = vunpack.c.l.b16 %v1935
    %v1953 = vunpack.c.l.b16 %v1936
    %v1954 = vunpack.c.l.b16 %v1937
    %v1955 = vunpack.c.l.b16 %v1938
    %v1956 = vunpack.c.l.b16 %v1939
    %v1957 = vpack.c.b16 %v1950, %v1949
    %v1958 = vpack.c.b16 %v1952, %v1951
    %v1959 = vpack.c.b16 %v1954, %v1953
    %v1960 = vpack.c.b16 %v1956, %v1955
    %vm1965 = vcmask 523264
    %v1967 = vsel %vm1965, %v1930, 0
    %v1970 = vsel %vm1965, %v1931, 0
    %1972 = vmatprep.subr.bf16.mxu0 0
    %1973 = vmatpush1.bf16.msra.mxu0 %v1957
    %1974 = vmatprep.subr.bf16.mxu0 0
    %1975 = vmatpush1.bf16.msra.mxu0 %v1958
    %1976 = vmatprep.subr.bf16.mxu0 0
    %1977 = vmatpush1.bf16.msra.mxu0 %v1959
    %1978 = vmatprep.subr.bf16.mxu0 0
    %1979 = vmatpush1.bf16.msra.mxu0 %v1960
    %1980 = vmatprep.subr.bf16.mxu0 0
    %1981 = vmatpush1.bf16.msra.mxu0 0
    %1982 = vmatprep.subr.bf16.mxu0 0
    %1983 = vmatpush1.bf16.msra.mxu0 0
    %1984 = vmatprep.subr.bf16.mxu0 0
    %1985 = vmatpush1.bf16.msra.mxu0 0
    %1986 = vmatprep.subr.bf16.mxu0 0
    %1987 = vmatpush1.bf16.msra.mxu0 0
    %1988 = vmatprep.subr.bf16.mxu0 0
    %1989 = vmatpush1.bf16.msra.mxu0 0
    %1990 = vmatprep.subr.bf16.mxu0 0
    %1991 = vmatpush1.bf16.msra.mxu0 0
    %1992 = vmatprep.subr.bf16.mxu0 0
    %1993 = vmatpush1.bf16.msra.mxu0 0
    %1994 = vmatprep.subr.bf16.mxu0 0
    %1995 = vmatpush1.bf16.msra.mxu0 0
    %1996 = vmatprep.subr.bf16.mxu0 0
    %1997 = vmatpush1.bf16.msra.mxu0 0
    %1998 = vmatprep.subr.bf16.mxu0 0
    %1999 = vmatpush1.bf16.msra.mxu0 0
    %2000 = vmatprep.subr.bf16.mxu0 0
    %2001 = vmatpush1.bf16.msra.mxu0 0
    %2002 = vmatprep.subr.bf16.mxu0 0
    %2003 = vmatpush1.bf16.msra.mxu0 0
    %2004 = vmatprep.mubr.bf16.mxu0 0
    %2005 = vmatmul.mubr.bf16.gmra.mrb[0].mxu0 %v1967
    %v2006 = vpop.f32.mrb[0].mxu0
    %v2007 = vadd.f32 %v1940, %v2006
    %v2008 = vpop.f32.mrb[0].mxu0
    %v2009 = vpop.f32.mrb[0].mxu0
    %v2010 = vadd.f32 %v1940, %v2009
    %v2011 = vpop.f32.mrb[0].mxu0
    %2012 = vmatprep.mubr.bf16.mxu0 0
    %2013 = vmatmul.mubr.bf16.gmra.mrb[0].mxu0 %v1970
    %v2014 = vpop.f32.mrb[0].mxu0
    %v2015 = vadd.f32 %v1940, %v2014
    %v2016 = vpop.f32.mrb[0].mxu0
    %v2017 = vpop.f32.mrb[0].mxu0
    %v2018 = vadd.f32 %v1940, %v2017
    %v2019 = vpop.f32.mrb[0].mxu0
    %2020 = vdwg.mxu0
    %v2021 = vmax.f32 %v2007, 0.0
    %v2022 = vmax.f32 %v2010, 0.0
    %v2023 = vmax.f32 %v2015, 0.0
    %v2024 = vmax.f32 %v2018, 0.0
    %v2025 = vpack.c.bf16 %v2022, %v2021
    %v2026 = vpack.c.bf16 %v2024, %v2023
    %v2027 = vld [vmem:[%s3 + $0x120] sm:$0xf]
    %v2028 = vld [vmem:[%s3 + $0x124] sm:$0xf]
    %v2029 = vld [vmem:[%s3 + $0x128] sm:$0xf]
    %v2030 = vld [vmem:[%s3 + $0x12c] sm:$0xf]
    %v2031 = vld [vmem:[%s3 + $0x130] sm:$0xf]
    %v2032 = vld [vmem:[%s3 + $0x134] sm:$0xf]
    %v2033 = vld [vmem:[%s3 + $0x138] sm:$0xf]
    %v2034 = vld [vmem:[%s3 + $0x13c] sm:$0xf]
    %v2035 = vld [vmem:[#allocation4 + $0x4] ss:$0 sm:$0xff]
    %v2044 = vunpack.c.l.b16 %v2027
    %v2045 = vunpack.c.l.b16 %v2028
    %v2046 = vunpack.c.l.b16 %v2029
    %v2047 = vunpack.c.l.b16 %v2030
    %v2048 = vunpack.c.l.b16 %v2031
    %v2049 = vunpack.c.l.b16 %v2032
    %v2050 = vunpack.c.l.b16 %v2033
    %v2051 = vunpack.c.l.b16 %v2034
    %v2052 = vpack.c.b16 %v2045, %v2044
    %v2053 = vpack.c.b16 %v2047, %v2046
    %v2054 = vpack.c.b16 %v2049, %v2048
    %v2055 = vpack.c.b16 %v2051, %v2050
    %v2061 = vsel %vm1965, %v2025, 0
    %v2064 = vsel %vm1965, %v2026, 0
    %2066 = vmatprep.subr.bf16.mxu0 0
    %2067 = vmatpush1.bf16.msra.mxu0 %v2052
    %2068 = vmatprep.subr.bf16.mxu0 0
    %2069 = vmatpush1.bf16.msra.mxu0 %v2053
    %2070 = vmatprep.subr.bf16.mxu0 0
    %2071 = vmatpush1.bf16.msra.mxu0 %v2054
    %2072 = vmatprep.subr.bf16.mxu0 0
    %2073 = vmatpush1.bf16.msra.mxu0 %v2055
    %2074 = vmatprep.subr.bf16.mxu0 0
    %2075 = vmatpush1.bf16.msra.mxu0 0
    %2076 = vmatprep.subr.bf16.mxu0 0
    %2077 = vmatpush1.bf16.msra.mxu0 0
    %2078 = vmatprep.subr.bf16.mxu0 0
    %2079 = vmatpush1.bf16.msra.mxu0 0
    %2080 = vmatprep.subr.bf16.mxu0 0
    %2081 = vmatpush1.bf16.msra.mxu0 0
    %2082 = vmatprep.subr.bf16.mxu0 0
    %2083 = vmatpush1.bf16.msra.mxu0 0
    %2084 = vmatprep.subr.bf16.mxu0 0
    %2085 = vmatpush1.bf16.msra.mxu0 0
    %2086 = vmatprep.subr.bf16.mxu0 0
    %2087 = vmatpush1.bf16.msra.mxu0 0
    %2088 = vmatprep.subr.bf16.mxu0 0
    %2089 = vmatpush1.bf16.msra.mxu0 0
    %2090 = vmatprep.subr.bf16.mxu0 0
    %2091 = vmatpush1.bf16.msra.mxu0 0
    %2092 = vmatprep.subr.bf16.mxu0 0
    %2093 = vmatpush1.bf16.msra.mxu0 0
    %2094 = vmatprep.subr.bf16.mxu0 0
    %2095 = vmatpush1.bf16.msra.mxu0 0
    %2096 = vmatprep.subr.bf16.mxu0 0
    %2097 = vmatpush1.bf16.msra.mxu0 0
    %2098 = vmatprep.mubr.bf16.mxu0 0
    %2099 = vmatmul.mubr.bf16.gmra.mrb[0].mxu0 %v2061
    %v2100 = vpop.f32.mrb[0].mxu0
    %v2101 = vadd.f32 %v2035, %v2100
    %v2102 = vpop.f32.mrb[0].mxu0
    %v2103 = vpop.f32.mrb[0].mxu0
    %v2104 = vadd.f32 %v2035, %v2103
    %v2105 = vpop.f32.mrb[0].mxu0
    %2106 = vmatprep.mubr.bf16.mxu0 0
    %2107 = vmatmul.mubr.bf16.gmra.mrb[0].mxu0 %v2064
    %v2108 = vpop.f32.mrb[0].mxu0
    %v2109 = vadd.f32 %v2035, %v2108
    %v2110 = vpop.f32.mrb[0].mxu0
    %v2111 = vpop.f32.mrb[0].mxu0
    %v2112 = vadd.f32 %v2035, %v2111
    %v2113 = vpop.f32.mrb[0].mxu0
    %2114 = vdwg.mxu0
    %v2115 = vlaneseq
    %v2116 = vshrl.u32 %v2115, 7
    %v2117 = vadd.s32 %v2116, 8
    %v2118 = vadd.s32 %v2116, 16
    %v2119 = vadd.s32 %v2116, 24
    %v2120 = vlaneseq
    %v2121 = vand.u32 %v2120, 127
    %v2122 = vadd.s32 %v2116, 1
    %v2123 = vadd.s32 %v2117, 1
    %v2124 = vadd.s32 %v2118, 1
    %v2125 = vadd.s32 %v2119, 1
    %vm2126 = vcmp.lt.s32.totalorder %v2116, 0
    %v2127 = vsub.s32 0, %v2116
    %v2128 = vsel %vm2126, %v2127, %v2116
    %v2129 = vshrl.u32 %v2128, 1
    %v2130 = vand.u32 %v2128, 1
    %v2131 = vsub.s32 0, %v2130
    %v2132 = vsel %vm2126, %v2131, %v2130
    %vm2133 = vcmp.lt.s32.totalorder %v2117, 0
    %v2134 = vsub.s32 0, %v2117
    %v2135 = vsel %vm2133, %v2134, %v2117
    %v2136 = vshrl.u32 %v2135, 1
    %v2137 = vand.u32 %v2135, 1
    %v2138 = vsub.s32 0, %v2137
    %v2139 = vsel %vm2133, %v2138, %v2137
    %vm2140 = vcmp.lt.s32.totalorder %v2118, 0
    %v2141 = vsub.s32 0, %v2118
    %v2142 = vsel %vm2140, %v2141, %v2118
    %v2143 = vshrl.u32 %v2142, 1
    %v2144 = vand.u32 %v2142, 1
    %v2145 = vsub.s32 0, %v2144
    %v2146 = vsel %vm2140, %v2145, %v2144
    %vm2147 = vcmp.lt.s32.totalorder %v2119, 0
    %v2148 = vsub.s32 0, %v2119
    %v2149 = vsel %vm2147, %v2148, %v2119
    %v2150 = vshrl.u32 %v2149, 1
    %v2151 = vand.u32 %v2149, 1
    %v2152 = vsub.s32 0, %v2151
    %v2153 = vsel %vm2147, %v2152, %v2151
    %vm2154 = vcmp.ne.s32.totalorder %v2132, 0
    %vm2155 = vcmp.ne.s32.totalorder %v2139, 0
    %vm2156 = vcmp.ne.s32.totalorder %v2146, 0
    %vm2157 = vcmp.ne.s32.totalorder %v2153, 0
    %vm2158 = vcmp.lt.s32.totalorder %v2132, 0
    %vm2159 = vcmp.lt.s32.totalorder %v2139, 0
    %vm2160 = vcmp.lt.s32.totalorder %v2146, 0
    %vm2161 = vcmp.lt.s32.totalorder %v2153, 0
    %vm2162 = vmand %vm2158, %vm2154
    %vm2163 = vmand %vm2159, %vm2155
    %vm2164 = vmand %vm2160, %vm2156
    %vm2165 = vmand %vm2161, %vm2157
    %v2166 = vadd.s32 %v2132, 2
    %v2167 = vadd.s32 %v2139, 2
    %v2168 = vadd.s32 %v2146, 2
    %v2169 = vadd.s32 %v2153, 2
    %v2170 = vsel %vm2162, %v2166, %v2132
    %v2171 = vsel %vm2163, %v2167, %v2139
    %v2172 = vsel %vm2164, %v2168, %v2146
    %v2173 = vsel %vm2165, %v2169, %v2153
    %v2174 = vmul.u32 %v2170, 2
    %v2175 = vmul.u32 %v2171, 2
    %v2176 = vmul.u32 %v2172, 2
    %v2177 = vmul.u32 %v2173, 2
    %v2178 = vsub.s32 %v2122, %v2174
    %v2179 = vsub.s32 %v2123, %v2175
    %v2180 = vsub.s32 %v2124, %v2176
    %v2181 = vsub.s32 %v2125, %v2177
    %vm2182 = vcmp.eq.s32.totalorder %v2121, %v2178
    %vm2183 = vcmp.eq.s32.totalorder %v2121, %v2179
    %vm2184 = vcmp.eq.s32.totalorder %v2121, %v2180
    %vm2185 = vcmp.eq.s32.totalorder %v2121, %v2181
    %v2186 = vsel %vm2182, 1, 0
    %v2187 = vsel %vm2183, 1, 0
    %v2188 = vsel %vm2184, 1, 0
    %v2189 = vsel %vm2185, 1, 0
    %v2190 = vcvt.s32.f32 %v2186
    %v2191 = vcvt.s32.f32 %v2187
    %v2192 = vcvt.s32.f32 %v2188
    %v2193 = vcvt.s32.f32 %v2189
    %vm2194 = vcmask 261120
    %v2196 = vsel %vm2194, %v2190, 0
    %v2199 = vsel %vm2194, %v2191, 0
    %v2202 = vsel %vm2194, %v2192, 0
    %v2205 = vsel %vm2194, %v2193, 0
    %2207 = vmatprep.subr.mxu0 0.0
    %2208 = vmatpush1.msra.mxu0 %v2101
    %2209 = vmatprep.subr.mxu0 0.0
    %2210 = vmatpush1.msra.mxu0 %v2104
    %2211 = vmatprep.subr.mxu0 0.0
    %2212 = vmatpush1.msra.mxu0 %v2109
    %2213 = vmatprep.subr.mxu0 0.0
    %2214 = vmatpush1.msra.mxu0 %v2112
    %2215 = vmatprep.subr.mxu0 0.0
    %2216 = vmatpush1.msra.mxu0 0.0
    %2217 = vmatprep.subr.mxu0 0.0
    %2218 = vmatpush1.msra.mxu0 0.0
    %2219 = vmatprep.subr.mxu0 0.0
    %2220 = vmatpush1.msra.mxu0 0.0
    %2221 = vmatprep.subr.mxu0 0.0
    %2222 = vmatpush1.msra.mxu0 0.0
    %2223 = vmatprep.subr.mxu0 0.0
    %2224 = vmatpush1.msra.mxu0 0.0
    %2225 = vmatprep.subr.mxu0 0.0
    %2226 = vmatpush1.msra.mxu0 0.0
    %2227 = vmatprep.subr.mxu0 0.0
    %2228 = vmatpush1.msra.mxu0 0.0
    %2229 = vmatprep.subr.mxu0 0.0
    %2230 = vmatpush1.msra.mxu0 0.0
    %2231 = vmatprep.subr.mxu0 0.0
    %2232 = vmatpush1.msra.mxu0 0.0
    %2233 = vmatprep.subr.mxu0 0.0
    %2234 = vmatpush1.msra.mxu0 0.0
    %2235 = vmatprep.subr.mxu0 0.0
    %2236 = vmatpush1.msra.mxu0 0.0
    %2237 = vmatprep.subr.mxu0 0.0
    %2238 = vmatpush1.msra.mxu0 0.0
    %2239 = vmatprep.subr.mxu0 0.0
    %2240 = vmatpush1.msra.mxu0 0.0
    %2241 = vmatprep.subr.mxu0 0.0
    %2242 = vmatpush1.msra.mxu0 0.0
    %2243 = vmatprep.subr.mxu0 0.0
    %2244 = vmatpush1.msra.mxu0 0.0
    %2245 = vmatprep.subr.mxu0 0.0
    %2246 = vmatpush1.msra.mxu0 0.0
    %2247 = vmatprep.subr.mxu0 0.0
    %2248 = vmatpush1.msra.mxu0 0.0
    %2249 = vmatprep.subr.mxu0 0.0
    %2250 = vmatpush1.msra.mxu0 0.0
    %2251 = vmatprep.subr.mxu0 0.0
    %2252 = vmatpush1.msra.mxu0 0.0
    %2253 = vmatprep.subr.mxu0 0.0
    %2254 = vmatpush1.msra.mxu0 0.0
    %2255 = vmatprep.subr.mxu0 0.0
    %2256 = vmatpush1.msra.mxu0 0.0
    %2257 = vmatprep.subr.mxu0 0.0
    %2258 = vmatpush1.msra.mxu0 0.0
    %2259 = vmatprep.subr.mxu0 0.0
    %2260 = vmatpush1.msra.mxu0 0.0
    %2261 = vmatprep.subr.mxu0 0.0
    %2262 = vmatpush1.msra.mxu0 0.0
    %2263 = vmatprep.subr.mxu0 0.0
    %2264 = vmatpush1.msra.mxu0 0.0
    %2265 = vmatprep.subr.mxu0 0.0
    %2266 = vmatpush1.msra.mxu0 0.0
    %2267 = vmatprep.subr.mxu0 0.0
    %2268 = vmatpush1.msra.mxu0 0.0
    %2269 = vmatprep.subr.mxu0 0.0
    %2270 = vmatpush1.msra.mxu0 0.0
    %2271 = vmatprep.mubr.f32.mxu0 0.0
    %2272 = vmatmul.mubr.f32.gmra.mrb[0].mxu0 %v2196
    %v2273 = vpop.f32.mrb[0].mxu0
    %v2274 = vadd.f32 0.0, %v2273
    %v2275 = vpop.f32.mrb[0].mxu0
    %2276 = vmatprep.mubr.f32.mxu0 0.0
    %2277 = vmatmul.mubr.f32.gmra.mrb[0].mxu0 %v2199
    %v2278 = vpop.f32.mrb[0].mxu0
    %v2279 = vadd.f32 0.0, %v2278
    %v2280 = vpop.f32.mrb[0].mxu0
    %2281 = vmatprep.mubr.f32.mxu0 0.0
    %2282 = vmatmul.mubr.f32.gmra.mrb[0].mxu0 %v2202
    %v2283 = vpop.f32.mrb[0].mxu0
    %v2284 = vadd.f32 0.0, %v2283
    %v2285 = vpop.f32.mrb[0].mxu0
    %2286 = vmatprep.mubr.f32.mxu0 0.0
    %2287 = vmatmul.mubr.f32.gmra.mrb[0].mxu0 %v2205
    %v2288 = vpop.f32.mrb[0].mxu0
    %v2289 = vadd.f32 0.0, %v2288
    %v2290 = vpop.f32.mrb[0].mxu0
    %2291 = vdwg.mxu0
    %vm2292 = vcmp.eq.s32.totalorder %v2170, 1
    %vm2293 = vcmp.eq.s32.totalorder %v2171, 1
    %vm2294 = vcmp.eq.s32.totalorder %v2172, 1
    %vm2295 = vcmp.eq.s32.totalorder %v2173, 1
    %2300 = vrot.lane.b32.xlu0 %v2274, 1
    %v2301 = vpop.permute.xlu0 %2300
    %2302 = vrot.lane.b32.xlu0 %v2279, 1
    %v2303 = vpop.permute.xlu0 %2302
    %2304 = vrot.lane.b32.xlu0 %v2284, 1
    %v2305 = vpop.permute.xlu0 %2304
    %2306 = vrot.lane.b32.xlu0 %v2289, 1
    %v2307 = vpop.permute.xlu0 %2306
    %v2312 = vsel %vm2292, %v2101, %v2301
    %v2313 = vsel %vm2293, %v2104, %v2303
    %v2314 = vsel %vm2294, %v2109, %v2305
    %v2315 = vsel %vm2295, %v2112, %v2307
    %2320 = vrot.lane.b32.xlu0 %v2101, 1
    %v2321 = vpop.permute.xlu0 %2320
    %2322 = vrot.lane.b32.xlu0 %v2104, 1
    %v2323 = vpop.permute.xlu0 %2322
    %2324 = vrot.lane.b32.xlu0 %v2109, 1
    %v2325 = vpop.permute.xlu0 %2324
    %2326 = vrot.lane.b32.xlu0 %v2112, 1
    %v2327 = vpop.permute.xlu0 %2326
    %v2332 = vsel %vm2292, %v2274, %v2321
    %v2333 = vsel %vm2293, %v2279, %v2323
    %v2334 = vsel %vm2294, %v2284, %v2325
    %v2335 = vsel %vm2295, %v2289, %v2327
    %vm2336 = vcmp.gt.f32.partialorder %v2312, %v2332
    %vm2337 = vcmp.gt.f32.partialorder %v2313, %v2333
    %vm2338 = vcmp.gt.f32.partialorder %v2314, %v2334
    %vm2339 = vcmp.gt.f32.partialorder %v2315, %v2335
    %v2340 = vsel %vm2336, 1, 0
    %v2341 = vsel %vm2337, 1, 0
    %v2342 = vsel %vm2338, 1, 0
    %v2343 = vsel %vm2339, 1, 0
    %2344 = vset.pattern.permute.xlu0 1
    %2345 = vperm.xlu0 %2344, %v2340
    %v2346 = vpop.permute.xlu0 %2345
    %2347 = vset.pattern.permute.xlu0 1
    %2348 = vperm.xlu0 %2347, %v2341
    %v2349 = vpop.permute.xlu0 %2348
    %2350 = vset.pattern.permute.xlu0 1
    %2351 = vperm.xlu0 %2350, %v2342
    %v2352 = vpop.permute.xlu0 %2351
    %2353 = vset.pattern.permute.xlu0 1
    %2354 = vperm.xlu0 %2353, %v2343
    %v2355 = vpop.permute.xlu0 %2354
    %vm2356 = vcmp.eq.s32.totalorder %v2346, 1
    %vm2357 = vcmp.eq.s32.totalorder %v2349, 1
    %vm2358 = vcmp.eq.s32.totalorder %v2352, 1
    %vm2359 = vcmp.eq.s32.totalorder %v2355, 1
    %v2360 = vsel %vm2356, %v50, %v49
    %v2361 = vsel %vm2357, %v50, %v49
    %v2362 = vsel %vm2358, %v50, %v49
    %v2363 = vsel %vm2359, %v50, %v49
    %v2364 = vadd.f32 %v1926, %v2360
    %v2365 = vadd.f32 %v1927, %v2361
    %v2366 = vadd.f32 %v1928, %v2362
    %v2367 = vadd.f32 %v1929, %v2363
    %2368 = vst.msk [vmem:[%s5] sm:$0xff] %vm1965, %v2364
    %2369 = vst.msk [vmem:[%s5 + $0x8] sm:$0xff] %vm1965, %v2365
    %2370 = vst.msk [vmem:[%s5 + $0x10] sm:$0xff] %vm1965, %v2366
    %2371 = vst.msk [vmem:[%s5 + $0x18] sm:$0xff] %vm1965, %v2367
    %v2372 = vld [vmem:[%s0 + $0x10] sm:$0xf]
    %v2373 = vld [vmem:[%s0 + $0x14] sm:$0xf]
    %v2374 = vld [vmem:[#allocation2 + $0x500] sm:$0xff]
    %v2375 = vld [vmem:[#allocation2 + $0x508] sm:$0xff]
    %v2376 = vld [vmem:[#allocation2 + $0x510] sm:$0xff]
    %v2377 = vld [vmem:[#allocation2 + $0x518] sm:$0xff]
    %v2378 = vld [vmem:[#allocation2 + $0x520] sm:$0xff]
    %v2379 = vld [vmem:[#allocation2 + $0x528] sm:$0xff]
    %v2380 = vld [vmem:[#allocation2 + $0x530] sm:$0xff]
    %v2381 = vld [vmem:[#allocation2 + $0x538] sm:$0xff]
    %v2382 = vld [vmem:[#allocation2 + $0x540] sm:$0xff]
    %v2383 = vld [vmem:[#allocation2 + $0x548] sm:$0xff]
    %v2384 = vld [vmem:[#allocation2 + $0x550] sm:$0xff]
    %v2385 = vld [vmem:[#allocation2 + $0x558] sm:$0xff]
    %v2386 = vld [vmem:[#allocation2 + $0x560] sm:$0xff]
    %v2387 = vld [vmem:[#allocation2 + $0x568] sm:$0xff]
    %v2388 = vld [vmem:[#allocation2 + $0x570] sm:$0xff]
    %v2389 = vld [vmem:[#allocation2 + $0x578] sm:$0xff]
    %v2390 = vld [vmem:[#allocation2 + $0x580] sm:$0xff]
    %v2391 = vld [vmem:[#allocation2 + $0x588] sm:$0xff]
    %v2392 = vld [vmem:[#allocation2 + $0x590] sm:$0xff]
    %v2393 = vld [vmem:[#allocation2 + $0x598] sm:$0xff]
    %v2394 = vld [vmem:[#allocation2 + $0x5a0] sm:$0xff]
    %v2395 = vld [vmem:[#allocation2 + $0x5a8] sm:$0xff]
    %v2396 = vld [vmem:[#allocation2 + $0x5b0] sm:$0xff]
    %v2397 = vld [vmem:[#allocation2 + $0x5b8] sm:$0xff]
    %v2398 = vld [vmem:[#allocation2 + $0x5c0] sm:$0xff]
    %v2399 = vld [vmem:[#allocation2 + $0x5c8] sm:$0xff]
    %v2400 = vld [vmem:[#allocation2 + $0x5d0] sm:$0xff]
    %v2401 = vld [vmem:[#allocation2 + $0x5d8] sm:$0xff]
    %v2402 = vld [vmem:[#allocation2 + $0x5e0] sm:$0xff]
    %v2403 = vld [vmem:[#allocation2 + $0x5e8] sm:$0xff]
    %v2404 = vld [vmem:[#allocation2 + $0x5f0] sm:$0xff]
    %v2405 = vld [vmem:[#allocation2 + $0x5f8] sm:$0xff]
    %s2406 = scalar_lea.vmem [#allocation4], 5
    %v2407 = vld [vmem:[%s2406] ss:$8 sm:$0xf]
    %v2409 = vlaneseq
    %v2410 = vshrl.u32 %v2409, 7
    %v2411 = vsub.s32 0, %v2410
    %v2412 = vrot.slane %v2407, %v2411
    %v2413 = vlaneseq
    %v2414 = vshrl.u32 %v2413, 7
    %v2415 = vsub.s32 1, %v2414
    %v2416 = vrot.slane %v2407, %v2415
    %v2417 = vlaneseq
    %v2418 = vshrl.u32 %v2417, 7
    %v2419 = vsub.s32 2, %v2418
    %v2420 = vrot.slane %v2407, %v2419
    %v2421 = vlaneseq
    %v2422 = vshrl.u32 %v2421, 7
    %v2423 = vsub.s32 3, %v2422
    %v2424 = vrot.slane %v2407, %v2423
    %v2431 = vunpack.c.l.b16 %v2372
    %v2432 = vunpack.c.l.b16 %v2373
    %v2433 = vpack.c.b16 %v2432, %v2431
    %v2467 = vunpack.c.l.b16 %v2374
    %v2468 = vunpack.c.h.b16 %v2374
    %v2469 = vunpack.c.l.b16 %v2375
    %v2470 = vunpack.c.h.b16 %v2375
    %v2471 = vunpack.c.l.b16 %v2376
    %v2472 = vunpack.c.h.b16 %v2376
    %v2473 = vunpack.c.l.b16 %v2377
    %v2474 = vunpack.c.h.b16 %v2377
    %v2475 = vunpack.c.l.b16 %v2378
    %v2476 = vunpack.c.h.b16 %v2378
    %v2477 = vunpack.c.l.b16 %v2379
    %v2478 = vunpack.c.h.b16 %v2379
    %v2479 = vunpack.c.l.b16 %v2380
    %v2480 = vunpack.c.h.b16 %v2380
    %v2481 = vunpack.c.l.b16 %v2381
    %v2482 = vunpack.c.h.b16 %v2381
    %v2483 = vunpack.c.l.b16 %v2382
    %v2484 = vunpack.c.h.b16 %v2382
    %v2485 = vunpack.c.l.b16 %v2383
    %v2486 = vunpack.c.h.b16 %v2383
    %v2487 = vunpack.c.l.b16 %v2384
    %v2488 = vunpack.c.h.b16 %v2384
    %v2489 = vunpack.c.l.b16 %v2385
    %v2490 = vunpack.c.h.b16 %v2385
    %v2491 = vunpack.c.l.b16 %v2386
    %v2492 = vunpack.c.h.b16 %v2386
    %v2493 = vunpack.c.l.b16 %v2387
    %v2494 = vunpack.c.h.b16 %v2387
    %v2495 = vunpack.c.l.b16 %v2388
    %v2496 = vunpack.c.h.b16 %v2388
    %v2497 = vunpack.c.l.b16 %v2389
    %v2498 = vunpack.c.h.b16 %v2389
    %v2499 = vunpack.c.l.b16 %v2390
    %v2500 = vunpack.c.h.b16 %v2390
    %v2501 = vunpack.c.l.b16 %v2391
    %v2502 = vunpack.c.h.b16 %v2391
    %v2503 = vunpack.c.l.b16 %v2392
    %v2504 = vunpack.c.h.b16 %v2392
    %v2505 = vunpack.c.l.b16 %v2393
    %v2506 = vunpack.c.h.b16 %v2393
    %v2507 = vunpack.c.l.b16 %v2394
    %v2508 = vunpack.c.h.b16 %v2394
    %v2509 = vunpack.c.l.b16 %v2395
    %v2510 = vunpack.c.h.b16 %v2395
    %v2511 = vunpack.c.l.b16 %v2396
    %v2512 = vunpack.c.h.b16 %v2396
    %v2513 = vunpack.c.l.b16 %v2397
    %v2514 = vunpack.c.h.b16 %v2397
    %v2515 = vunpack.c.l.b16 %v2398
    %v2516 = vunpack.c.h.b16 %v2398
    %v2517 = vunpack.c.l.b16 %v2399
    %v2518 = vunpack.c.h.b16 %v2399
    %v2519 = vunpack.c.l.b16 %v2400
    %v2520 = vunpack.c.h.b16 %v2400
    %v2521 = vunpack.c.l.b16 %v2401
    %v2522 = vunpack.c.h.b16 %v2401
    %v2523 = vunpack.c.l.b16 %v2402
    %v2524 = vunpack.c.h.b16 %v2402
    %v2525 = vunpack.c.l.b16 %v2403
    %v2526 = vunpack.c.h.b16 %v2403
    %v2527 = vunpack.c.l.b16 %v2404
    %v2528 = vunpack.c.h.b16 %v2404
    %v2529 = vunpack.c.l.b16 %v2405
    %v2530 = vunpack.c.h.b16 %v2405
    %v2531 = vpack.c.b16 %v2471, %v2467
    %v2532 = vpack.c.b16 %v2472, %v2468
    %v2533 = vpack.c.b16 %v2473, %v2469
    %v2534 = vpack.c.b16 %v2474, %v2470
    %v2535 = vpack.c.b16 %v2479, %v2475
    %v2536 = vpack.c.b16 %v2480, %v2476
    %v2537 = vpack.c.b16 %v2481, %v2477
    %v2538 = vpack.c.b16 %v2482, %v2478
    %v2539 = vpack.c.b16 %v2487, %v2483
    %v2540 = vpack.c.b16 %v2488, %v2484
    %v2541 = vpack.c.b16 %v2489, %v2485
    %v2542 = vpack.c.b16 %v2490, %v2486
    %v2543 = vpack.c.b16 %v2495, %v2491
    %v2544 = vpack.c.b16 %v2496, %v2492
    %v2545 = vpack.c.b16 %v2497, %v2493
    %v2546 = vpack.c.b16 %v2498, %v2494
    %v2547 = vpack.c.b16 %v2503, %v2499
    %v2548 = vpack.c.b16 %v2504, %v2500
    %v2549 = vpack.c.b16 %v2505, %v2501
    %v2550 = vpack.c.b16 %v2506, %v2502
    %v2551 = vpack.c.b16 %v2511, %v2507
    %v2552 = vpack.c.b16 %v2512, %v2508
    %v2553 = vpack.c.b16 %v2513, %v2509
    %v2554 = vpack.c.b16 %v2514, %v2510
    %v2555 = vpack.c.b16 %v2519, %v2515
    %v2556 = vpack.c.b16 %v2520, %v2516
    %v2557 = vpack.c.b16 %v2521, %v2517
    %v2558 = vpack.c.b16 %v2522, %v2518
    %v2559 = vpack.c.b16 %v2527, %v2523
    %v2560 = vpack.c.b16 %v2528, %v2524
    %v2561 = vpack.c.b16 %v2529, %v2525
    %v2562 = vpack.c.b16 %v2530, %v2526
    %2595 = vmatprep.subr.bf16.mxu0 %v2532
    %2596 = vmatpush1.bf16.msra.mxu0 %v2531
    %2597 = vmatprep.subr.bf16.mxu0 %v2536
    %2598 = vmatpush1.bf16.msra.mxu0 %v2535
    %2599 = vmatprep.subr.bf16.mxu0 %v2540
    %2600 = vmatpush1.bf16.msra.mxu0 %v2539
    %2601 = vmatprep.subr.bf16.mxu0 %v2544
    %2602 = vmatpush1.bf16.msra.mxu0 %v2543
    %2603 = vmatprep.subr.bf16.mxu0 %v2548
    %2604 = vmatpush1.bf16.msra.mxu0 %v2547
    %2605 = vmatprep.subr.bf16.mxu0 %v2552
    %2606 = vmatpush1.bf16.msra.mxu0 %v2551
    %2607 = vmatprep.subr.bf16.mxu0 %v2556
    %2608 = vmatpush1.bf16.msra.mxu0 %v2555
    %2609 = vmatprep.subr.bf16.mxu0 %v2560
    %2610 = vmatpush1.bf16.msra.mxu0 %v2559
    %2611 = vmatprep.subr.bf16.mxu0 0
    %2612 = vmatpush1.bf16.msra.mxu0 0
    %2613 = vmatprep.subr.bf16.mxu0 0
    %2614 = vmatpush1.bf16.msra.mxu0 0
    %2615 = vmatprep.subr.bf16.mxu0 0
    %2616 = vmatpush1.bf16.msra.mxu0 0
    %2617 = vmatprep.subr.bf16.mxu0 0
    %2618 = vmatpush1.bf16.msra.mxu0 0
    %2619 = vmatprep.subr.bf16.mxu0 0
    %2620 = vmatpush1.bf16.msra.mxu0 0
    %2621 = vmatprep.subr.bf16.mxu0 0
    %2622 = vmatpush1.bf16.msra.mxu0 0
    %2623 = vmatprep.subr.bf16.mxu0 0
    %2624 = vmatpush1.bf16.msra.mxu0 0
    %2625 = vmatprep.subr.bf16.mxu0 0
    %2626 = vmatpush1.bf16.msra.mxu0 0
    %2627 = vmatprep.mubr.bf16.mxu0 0
    %2628 = vmatmul.mubr.bf16.gmra.mrb[0].mxu0 %v2433
    %v2629 = vpop.f32.mrb[0].mxu0
    %v2630 = vadd.f32 %v2412, %v2629
    %v2631 = vpop.f32.mrb[0].mxu0
    %v2632 = vadd.f32 %v2416, %v2631
    %v2633 = vpop.f32.mrb[0].mxu0
    %v2634 = vadd.f32 %v2412, %v2633
    %v2635 = vpop.f32.mrb[0].mxu0
    %v2636 = vadd.f32 %v2416, %v2635
    %2637 = vdwg.mxu0
    %2638 = vmatprep.subr.bf16.mxu0 %v2534
    %2639 = vmatpush1.bf16.msra.mxu0 %v2533
    %2640 = vmatprep.subr.bf16.mxu0 %v2538
    %2641 = vmatpush1.bf16.msra.mxu0 %v2537
    %2642 = vmatprep.subr.bf16.mxu0 %v2542
    %2643 = vmatpush1.bf16.msra.mxu0 %v2541
    %2644 = vmatprep.subr.bf16.mxu0 %v2546
    %2645 = vmatpush1.bf16.msra.mxu0 %v2545
    %2646 = vmatprep.subr.bf16.mxu0 %v2550
    %2647 = vmatpush1.bf16.msra.mxu0 %v2549
    %2648 = vmatprep.subr.bf16.mxu0 %v2554
    %2649 = vmatpush1.bf16.msra.mxu0 %v2553
    %2650 = vmatprep.subr.bf16.mxu0 %v2558
    %2651 = vmatpush1.bf16.msra.mxu0 %v2557
    %2652 = vmatprep.subr.bf16.mxu0 %v2562
    %2653 = vmatpush1.bf16.msra.mxu0 %v2561
    %2654 = vmatprep.subr.bf16.mxu0 0
    %2655 = vmatpush1.bf16.msra.mxu0 0
    %2656 = vmatprep.subr.bf16.mxu0 0
    %2657 = vmatpush1.bf16.msra.mxu0 0
    %2658 = vmatprep.subr.bf16.mxu0 0
    %2659 = vmatpush1.bf16.msra.mxu0 0
    %2660 = vmatprep.subr.bf16.mxu0 0
    %2661 = vmatpush1.bf16.msra.mxu0 0
    %2662 = vmatprep.subr.bf16.mxu0 0
    %2663 = vmatpush1.bf16.msra.mxu0 0
    %2664 = vmatprep.subr.bf16.mxu0 0
    %2665 = vmatpush1.bf16.msra.mxu0 0
    %2666 = vmatprep.subr.bf16.mxu0 0
    %2667 = vmatpush1.bf16.msra.mxu0 0
    %2668 = vmatprep.subr.bf16.mxu0 0
    %2669 = vmatpush1.bf16.msra.mxu0 0
    %2670 = vmatprep.mubr.bf16.mxu0 0
    %2671 = vmatmul.mubr.bf16.gmra.mrb[0].mxu0 %v2433
    %v2672 = vpop.f32.mrb[0].mxu0
    %v2673 = vadd.f32 %v2420, %v2672
    %v2674 = vpop.f32.mrb[0].mxu0
    %v2675 = vadd.f32 %v2424, %v2674
    %v2676 = vpop.f32.mrb[0].mxu0
    %v2677 = vadd.f32 %v2420, %v2676
    %v2678 = vpop.f32.mrb[0].mxu0
    %v2679 = vadd.f32 %v2424, %v2678
    %2680 = vdwg.mxu0
    %v2681 = vmul.f32 %v2630, 0.5
    %v2682 = vmul.f32 %v2632, 0.5
    %v2683 = vmul.f32 %v2673, 0.5
    %v2684 = vmul.f32 %v2675, 0.5
    %v2685 = vmul.f32 %v2634, 0.5
    %v2686 = vmul.f32 %v2636, 0.5
    %v2687 = vmul.f32 %v2677, 0.5
    %v2688 = vmul.f32 %v2679, 0.5
    %v2689 = vtanh.pop %v2681
    %v2690 = vtanh.pop %v2682
    %v2691 = vtanh.pop %v2683
    %v2692 = vtanh.pop %v2684
    %v2693 = vtanh.pop %v2685
    %v2694 = vtanh.pop %v2686
    %v2695 = vtanh.pop %v2687
    %v2696 = vtanh.pop %v2688
    %v2697 = vadd.f32 %v2689, 1.0
    %v2698 = vadd.f32 %v2690, 1.0
    %v2699 = vadd.f32 %v2691, 1.0
    %v2700 = vadd.f32 %v2692, 1.0
    %v2701 = vadd.f32 %v2693, 1.0
    %v2702 = vadd.f32 %v2694, 1.0
    %v2703 = vadd.f32 %v2695, 1.0
    %v2704 = vadd.f32 %v2696, 1.0
    %v2705 = vmul.f32 %v2697, 0.5
    %v2706 = vmul.f32 %v2698, 0.5
    %v2707 = vmul.f32 %v2699, 0.5
    %v2708 = vmul.f32 %v2700, 0.5
    %v2709 = vmul.f32 %v2701, 0.5
    %v2710 = vmul.f32 %v2702, 0.5
    %v2711 = vmul.f32 %v2703, 0.5
    %v2712 = vmul.f32 %v2704, 0.5
    %v2713 = vmul.f32 %v2630, %v2705
    %v2714 = vmul.f32 %v2632, %v2706
    %v2715 = vmul.f32 %v2673, %v2707
    %v2716 = vmul.f32 %v2675, %v2708
    %v2717 = vmul.f32 %v2634, %v2709
    %v2718 = vmul.f32 %v2636, %v2710
    %v2719 = vmul.f32 %v2677, %v2711
    %v2720 = vmul.f32 %v2679, %v2712
    %v2721 = vpack.c.bf16 %v2717, %v2713
    %v2722 = vpack.c.bf16 %v2718, %v2714
    %v2723 = vpack.c.bf16 %v2719, %v2715
    %v2724 = vpack.c.bf16 %v2720, %v2716
    %v2725 = vld [vmem:[#allocation2 + $0x600] sm:$0xff]
    %v2726 = vld [vmem:[#allocation2 + $0x608] sm:$0xff]
    %v2727 = vld [vmem:[#allocation2 + $0x610] sm:$0xff]
    %v2728 = vld [vmem:[#allocation2 + $0x618] sm:$0xff]
    %v2729 = vld [vmem:[#allocation2 + $0x620] sm:$0xff]
    %v2730 = vld [vmem:[#allocation2 + $0x628] sm:$0xff]
    %v2731 = vld [vmem:[#allocation2 + $0x630] sm:$0xff]
    %v2732 = vld [vmem:[#allocation2 + $0x638] sm:$0xff]
    %v2733 = vld [vmem:[#allocation2 + $0x640] sm:$0xff]
    %v2734 = vld [vmem:[#allocation2 + $0x648] sm:$0xff]
    %v2735 = vld [vmem:[#allocation2 + $0x650] sm:$0xff]
    %v2736 = vld [vmem:[#allocation2 + $0x658] sm:$0xff]
    %v2737 = vld [vmem:[#allocation2 + $0x660] sm:$0xff]
    %v2738 = vld [vmem:[#allocation2 + $0x668] sm:$0xff]
    %v2739 = vld [vmem:[#allocation2 + $0x670] sm:$0xff]
    %v2740 = vld [vmem:[#allocation2 + $0x678] sm:$0xff]
    %v2741 = vld [vmem:[#allocation2 + $0x680] sm:$0xff]
    %v2742 = vld [vmem:[#allocation2 + $0x688] sm:$0xff]
    %v2743 = vld [vmem:[#allocation2 + $0x690] sm:$0xff]
    %v2744 = vld [vmem:[#allocation2 + $0x698] sm:$0xff]
    %v2745 = vld [vmem:[#allocation2 + $0x6a0] sm:$0xff]
    %v2746 = vld [vmem:[#allocation2 + $0x6a8] sm:$0xff]
    %v2747 = vld [vmem:[#allocation2 + $0x6b0] sm:$0xff]
    %v2748 = vld [vmem:[#allocation2 + $0x6b8] sm:$0xff]
    %v2749 = vld [vmem:[#allocation2 + $0x6c0] sm:$0xff]
    %v2750 = vld [vmem:[#allocation2 + $0x6c8] sm:$0xff]
    %v2751 = vld [vmem:[#allocation2 + $0x6d0] sm:$0xff]
    %v2752 = vld [vmem:[#allocation2 + $0x6d8] sm:$0xff]
    %v2753 = vld [vmem:[#allocation2 + $0x6e0] sm:$0xff]
    %v2754 = vld [vmem:[#allocation2 + $0x6e8] sm:$0xff]
    %v2755 = vld [vmem:[#allocation2 + $0x6f0] sm:$0xff]
    %v2756 = vld [vmem:[#allocation2 + $0x6f8] sm:$0xff]
    %v2757 = vld [vmem:[#allocation2 + $0x700] sm:$0xff]
    %v2758 = vld [vmem:[#allocation2 + $0x708] sm:$0xff]
    %v2759 = vld [vmem:[#allocation2 + $0x710] sm:$0xff]
    %v2760 = vld [vmem:[#allocation2 + $0x718] sm:$0xff]
    %v2761 = vld [vmem:[#allocation2 + $0x720] sm:$0xff]
    %v2762 = vld [vmem:[#allocation2 + $0x728] sm:$0xff]
    %v2763 = vld [vmem:[#allocation2 + $0x730] sm:$0xff]
    %v2764 = vld [vmem:[#allocation2 + $0x738] sm:$0xff]
    %v2765 = vld [vmem:[#allocation2 + $0x740] sm:$0xff]
    %v2766 = vld [vmem:[#allocation2 + $0x748] sm:$0xff]
    %v2767 = vld [vmem:[#allocation2 + $0x750] sm:$0xff]
    %v2768 = vld [vmem:[#allocation2 + $0x758] sm:$0xff]
    %v2769 = vld [vmem:[#allocation2 + $0x760] sm:$0xff]
    %v2770 = vld [vmem:[#allocation2 + $0x768] sm:$0xff]
    %v2771 = vld [vmem:[#allocation2 + $0x770] sm:$0xff]
    %v2772 = vld [vmem:[#allocation2 + $0x778] sm:$0xff]
    %v2773 = vld [vmem:[#allocation2 + $0x780] sm:$0xff]
    %v2774 = vld [vmem:[#allocation2 + $0x788] sm:$0xff]
    %v2775 = vld [vmem:[#allocation2 + $0x790] sm:$0xff]
    %v2776 = vld [vmem:[#allocation2 + $0x798] sm:$0xff]
    %v2777 = vld [vmem:[#allocation2 + $0x7a0] sm:$0xff]
    %v2778 = vld [vmem:[#allocation2 + $0x7a8] sm:$0xff]
    %v2779 = vld [vmem:[#allocation2 + $0x7b0] sm:$0xff]
    %v2780 = vld [vmem:[#allocation2 + $0x7b8] sm:$0xff]
    %v2781 = vld [vmem:[#allocation2 + $0x7c0] sm:$0xff]
    %v2782 = vld [vmem:[#allocation2 + $0x7c8] sm:$0xff]
    %v2783 = vld [vmem:[#allocation2 + $0x7d0] sm:$0xff]
    %v2784 = vld [vmem:[#allocation2 + $0x7d8] sm:$0xff]
    %v2785 = vld [vmem:[#allocation2 + $0x7e0] sm:$0xff]
    %v2786 = vld [vmem:[#allocation2 + $0x7e8] sm:$0xff]
    %v2787 = vld [vmem:[#allocation2 + $0x7f0] sm:$0xff]
    %v2788 = vld [vmem:[#allocation2 + $0x7f8] sm:$0xff]
    %v2789 = vld [vmem:[#allocation2 + $0x800] sm:$0xff]
    %v2790 = vld [vmem:[#allocation2 + $0x808] sm:$0xff]
    %v2791 = vld [vmem:[#allocation2 + $0x810] sm:$0xff]
    %v2792 = vld [vmem:[#allocation2 + $0x818] sm:$0xff]
    %v2793 = vld [vmem:[#allocation2 + $0x820] sm:$0xff]
    %v2794 = vld [vmem:[#allocation2 + $0x828] sm:$0xff]
    %v2795 = vld [vmem:[#allocation2 + $0x830] sm:$0xff]
    %v2796 = vld [vmem:[#allocation2 + $0x838] sm:$0xff]
    %v2797 = vld [vmem:[#allocation2 + $0x840] sm:$0xff]
    %v2798 = vld [vmem:[#allocation2 + $0x848] sm:$0xff]
    %v2799 = vld [vmem:[#allocation2 + $0x850] sm:$0xff]
    %v2800 = vld [vmem:[#allocation2 + $0x858] sm:$0xff]
    %v2801 = vld [vmem:[#allocation2 + $0x860] sm:$0xff]
    %v2802 = vld [vmem:[#allocation2 + $0x868] sm:$0xff]
    %v2803 = vld [vmem:[#allocation2 + $0x870] sm:$0xff]
    %v2804 = vld [vmem:[#allocation2 + $0x878] sm:$0xff]
    %v2805 = vld [vmem:[#allocation2 + $0x880] sm:$0xff]
    %v2806 = vld [vmem:[#allocation2 + $0x888] sm:$0xff]
    %v2807 = vld [vmem:[#allocation2 + $0x890] sm:$0xff]
    %v2808 = vld [vmem:[#allocation2 + $0x898] sm:$0xff]
    %v2809 = vld [vmem:[#allocation2 + $0x8a0] sm:$0xff]
    %v2810 = vld [vmem:[#allocation2 + $0x8a8] sm:$0xff]
    %v2811 = vld [vmem:[#allocation2 + $0x8b0] sm:$0xff]
    %v2812 = vld [vmem:[#allocation2 + $0x8b8] sm:$0xff]
    %v2813 = vld [vmem:[#allocation2 + $0x8c0] sm:$0xff]
    %v2814 = vld [vmem:[#allocation2 + $0x8c8] sm:$0xff]
    %v2815 = vld [vmem:[#allocation2 + $0x8d0] sm:$0xff]
    %v2816 = vld [vmem:[#allocation2 + $0x8d8] sm:$0xff]
    %v2817 = vld [vmem:[#allocation2 + $0x8e0] sm:$0xff]
    %v2818 = vld [vmem:[#allocation2 + $0x8e8] sm:$0xff]
    %v2819 = vld [vmem:[#allocation2 + $0x8f0] sm:$0xff]
    %v2820 = vld [vmem:[#allocation2 + $0x8f8] sm:$0xff]
    %v2821 = vld [vmem:[#allocation2 + $0x900] sm:$0xff]
    %v2822 = vld [vmem:[#allocation2 + $0x908] sm:$0xff]
    %v2823 = vld [vmem:[#allocation2 + $0x910] sm:$0xff]
    %v2824 = vld [vmem:[#allocation2 + $0x918] sm:$0xff]
    %v2825 = vld [vmem:[#allocation2 + $0x920] sm:$0xff]
    %v2826 = vld [vmem:[#allocation2 + $0x928] sm:$0xff]
    %v2827 = vld [vmem:[#allocation2 + $0x930] sm:$0xff]
    %v2828 = vld [vmem:[#allocation2 + $0x938] sm:$0xff]
    %v2829 = vld [vmem:[#allocation2 + $0x940] sm:$0xff]
    %v2830 = vld [vmem:[#allocation2 + $0x948] sm:$0xff]
    %v2831 = vld [vmem:[#allocation2 + $0x950] sm:$0xff]
    %v2832 = vld [vmem:[#allocation2 + $0x958] sm:$0xff]
    %v2833 = vld [vmem:[#allocation2 + $0x960] sm:$0xff]
    %v2834 = vld [vmem:[#allocation2 + $0x968] sm:$0xff]
    %v2835 = vld [vmem:[#allocation2 + $0x970] sm:$0xff]
    %v2836 = vld [vmem:[#allocation2 + $0x978] sm:$0xff]
    %v2837 = vld [vmem:[#allocation2 + $0x980] sm:$0xff]
    %v2838 = vld [vmem:[#allocation2 + $0x988] sm:$0xff]
    %v2839 = vld [vmem:[#allocation2 + $0x990] sm:$0xff]
    %v2840 = vld [vmem:[#allocation2 + $0x998] sm:$0xff]
    %v2841 = vld [vmem:[#allocation2 + $0x9a0] sm:$0xff]
    %v2842 = vld [vmem:[#allocation2 + $0x9a8] sm:$0xff]
    %v2843 = vld [vmem:[#allocation2 + $0x9b0] sm:$0xff]
    %v2844 = vld [vmem:[#allocation2 + $0x9b8] sm:$0xff]
    %v2845 = vld [vmem:[#allocation2 + $0x9c0] sm:$0xff]
    %v2846 = vld [vmem:[#allocation2 + $0x9c8] sm:$0xff]
    %v2847 = vld [vmem:[#allocation2 + $0x9d0] sm:$0xff]
    %v2848 = vld [vmem:[#allocation2 + $0x9d8] sm:$0xff]
    %v2849 = vld [vmem:[#allocation2 + $0x9e0] sm:$0xff]
    %v2850 = vld [vmem:[#allocation2 + $0x9e8] sm:$0xff]
    %v2851 = vld [vmem:[#allocation2 + $0x9f0] sm:$0xff]
    %v2852 = vld [vmem:[#allocation2 + $0x9f8] sm:$0xff]
    %s2853 = scalar_lea.vmem [#allocation4], 6
    %v2854 = vld [vmem:[%s2853] ss:$8 sm:$0xf]
    %v2856 = vlaneseq
    %v2857 = vshrl.u32 %v2856, 7
    %v2858 = vsub.s32 0, %v2857
    %v2859 = vrot.slane %v2854, %v2858
    %v2860 = vlaneseq
    %v2861 = vshrl.u32 %v2860, 7
    %v2862 = vsub.s32 1, %v2861
    %v2863 = vrot.slane %v2854, %v2862
    %v2864 = vlaneseq
    %v2865 = vshrl.u32 %v2864, 7
    %v2866 = vsub.s32 2, %v2865
    %v2867 = vrot.slane %v2854, %v2866
    %v2868 = vlaneseq
    %v2869 = vshrl.u32 %v2868, 7
    %v2870 = vsub.s32 3, %v2869
    %v2871 = vrot.slane %v2854, %v2870
    %v3004 = vunpack.c.l.b16 %v2725
    %v3005 = vunpack.c.h.b16 %v2725
    %v3006 = vunpack.c.l.b16 %v2726
    %v3007 = vunpack.c.h.b16 %v2726
    %v3008 = vunpack.c.l.b16 %v2727
    %v3009 = vunpack.c.h.b16 %v2727
    %v3010 = vunpack.c.l.b16 %v2728
    %v3011 = vunpack.c.h.b16 %v2728
    %v3012 = vunpack.c.l.b16 %v2729
    %v3013 = vunpack.c.h.b16 %v2729
    %v3014 = vunpack.c.l.b16 %v2730
    %v3015 = vunpack.c.h.b16 %v2730
    %v3016 = vunpack.c.l.b16 %v2731
    %v3017 = vunpack.c.h.b16 %v2731
    %v3018 = vunpack.c.l.b16 %v2732
    %v3019 = vunpack.c.h.b16 %v2732
    %v3020 = vunpack.c.l.b16 %v2733
    %v3021 = vunpack.c.h.b16 %v2733
    %v3022 = vunpack.c.l.b16 %v2734
    %v3023 = vunpack.c.h.b16 %v2734
    %v3024 = vunpack.c.l.b16 %v2735
    %v3025 = vunpack.c.h.b16 %v2735
    %v3026 = vunpack.c.l.b16 %v2736
    %v3027 = vunpack.c.h.b16 %v2736
    %v3028 = vunpack.c.l.b16 %v2737
    %v3029 = vunpack.c.h.b16 %v2737
    %v3030 = vunpack.c.l.b16 %v2738
    %v3031 = vunpack.c.h.b16 %v2738
    %v3032 = vunpack.c.l.b16 %v2739
    %v3033 = vunpack.c.h.b16 %v2739
    %v3034 = vunpack.c.l.b16 %v2740
    %v3035 = vunpack.c.h.b16 %v2740
    %v3036 = vunpack.c.l.b16 %v2741
    %v3037 = vunpack.c.h.b16 %v2741
    %v3038 = vunpack.c.l.b16 %v2742
    %v3039 = vunpack.c.h.b16 %v2742
    %v3040 = vunpack.c.l.b16 %v2743
    %v3041 = vunpack.c.h.b16 %v2743
    %v3042 = vunpack.c.l.b16 %v2744
    %v3043 = vunpack.c.h.b16 %v2744
    %v3044 = vunpack.c.l.b16 %v2745
    %v3045 = vunpack.c.h.b16 %v2745
    %v3046 = vunpack.c.l.b16 %v2746
    %v3047 = vunpack.c.h.b16 %v2746
    %v3048 = vunpack.c.l.b16 %v2747
    %v3049 = vunpack.c.h.b16 %v2747
    %v3050 = vunpack.c.l.b16 %v2748
    %v3051 = vunpack.c.h.b16 %v2748
    %v3052 = vunpack.c.l.b16 %v2749
    %v3053 = vunpack.c.h.b16 %v2749
    %v3054 = vunpack.c.l.b16 %v2750
    %v3055 = vunpack.c.h.b16 %v2750
    %v3056 = vunpack.c.l.b16 %v2751
    %v3057 = vunpack.c.h.b16 %v2751
    %v3058 = vunpack.c.l.b16 %v2752
    %v3059 = vunpack.c.h.b16 %v2752
    %v3060 = vunpack.c.l.b16 %v2753
    %v3061 = vunpack.c.h.b16 %v2753
    %v3062 = vunpack.c.l.b16 %v2754
    %v3063 = vunpack.c.h.b16 %v2754
    %v3064 = vunpack.c.l.b16 %v2755
    %v3065 = vunpack.c.h.b16 %v2755
    %v3066 = vunpack.c.l.b16 %v2756
    %v3067 = vunpack.c.h.b16 %v2756
    %v3068 = vunpack.c.l.b16 %v2757
    %v3069 = vunpack.c.h.b16 %v2757
    %v3070 = vunpack.c.l.b16 %v2758
    %v3071 = vunpack.c.h.b16 %v2758
    %v3072 = vunpack.c.l.b16 %v2759
    %v3073 = vunpack.c.h.b16 %v2759
    %v3074 = vunpack.c.l.b16 %v2760
    %v3075 = vunpack.c.h.b16 %v2760
    %v3076 = vunpack.c.l.b16 %v2761
    %v3077 = vunpack.c.h.b16 %v2761
    %v3078 = vunpack.c.l.b16 %v2762
    %v3079 = vunpack.c.h.b16 %v2762
    %v3080 = vunpack.c.l.b16 %v2763
    %v3081 = vunpack.c.h.b16 %v2763
    %v3082 = vunpack.c.l.b16 %v2764
    %v3083 = vunpack.c.h.b16 %v2764
    %v3084 = vunpack.c.l.b16 %v2765
    %v3085 = vunpack.c.h.b16 %v2765
    %v3086 = vunpack.c.l.b16 %v2766
    %v3087 = vunpack.c.h.b16 %v2766
    %v3088 = vunpack.c.l.b16 %v2767
    %v3089 = vunpack.c.h.b16 %v2767
    %v3090 = vunpack.c.l.b16 %v2768
    %v3091 = vunpack.c.h.b16 %v2768
    %v3092 = vunpack.c.l.b16 %v2769
    %v3093 = vunpack.c.h.b16 %v2769
    %v3094 = vunpack.c.l.b16 %v2770
    %v3095 = vunpack.c.h.b16 %v2770
    %v3096 = vunpack.c.l.b16 %v2771
    %v3097 = vunpack.c.h.b16 %v2771
    %v3098 = vunpack.c.l.b16 %v2772
    %v3099 = vunpack.c.h.b16 %v2772
    %v3100 = vunpack.c.l.b16 %v2773
    %v3101 = vunpack.c.h.b16 %v2773
    %v3102 = vunpack.c.l.b16 %v2774
    %v3103 = vunpack.c.h.b16 %v2774
    %v3104 = vunpack.c.l.b16 %v2775
    %v3105 = vunpack.c.h.b16 %v2775
    %v3106 = vunpack.c.l.b16 %v2776
    %v3107 = vunpack.c.h.b16 %v2776
    %v3108 = vunpack.c.l.b16 %v2777
    %v3109 = vunpack.c.h.b16 %v2777
    %v3110 = vunpack.c.l.b16 %v2778
    %v3111 = vunpack.c.h.b16 %v2778
    %v3112 = vunpack.c.l.b16 %v2779
    %v3113 = vunpack.c.h.b16 %v2779
    %v3114 = vunpack.c.l.b16 %v2780
    %v3115 = vunpack.c.h.b16 %v2780
    %v3116 = vunpack.c.l.b16 %v2781
    %v3117 = vunpack.c.h.b16 %v2781
    %v3118 = vunpack.c.l.b16 %v2782
    %v3119 = vunpack.c.h.b16 %v2782
    %v3120 = vunpack.c.l.b16 %v2783
    %v3121 = vunpack.c.h.b16 %v2783
    %v3122 = vunpack.c.l.b16 %v2784
    %v3123 = vunpack.c.h.b16 %v2784
    %v3124 = vunpack.c.l.b16 %v2785
    %v3125 = vunpack.c.h.b16 %v2785
    %v3126 = vunpack.c.l.b16 %v2786
    %v3127 = vunpack.c.h.b16 %v2786
    %v3128 = vunpack.c.l.b16 %v2787
    %v3129 = vunpack.c.h.b16 %v2787
    %v3130 = vunpack.c.l.b16 %v2788
    %v3131 = vunpack.c.h.b16 %v2788
    %v3132 = vunpack.c.l.b16 %v2789
    %v3133 = vunpack.c.h.b16 %v2789
    %v3134 = vunpack.c.l.b16 %v2790
    %v3135 = vunpack.c.h.b16 %v2790
    %v3136 = vunpack.c.l.b16 %v2791
    %v3137 = vunpack.c.h.b16 %v2791
    %v3138 = vunpack.c.l.b16 %v2792
    %v3139 = vunpack.c.h.b16 %v2792
    %v3140 = vunpack.c.l.b16 %v2793
    %v3141 = vunpack.c.h.b16 %v2793
    %v3142 = vunpack.c.l.b16 %v2794
    %v3143 = vunpack.c.h.b16 %v2794
    %v3144 = vunpack.c.l.b16 %v2795
    %v3145 = vunpack.c.h.b16 %v2795
    %v3146 = vunpack.c.l.b16 %v2796
    %v3147 = vunpack.c.h.b16 %v2796
    %v3148 = vunpack.c.l.b16 %v2797
    %v3149 = vunpack.c.h.b16 %v2797
    %v3150 = vunpack.c.l.b16 %v2798
    %v3151 = vunpack.c.h.b16 %v2798
    %v3152 = vunpack.c.l.b16 %v2799
    %v3153 = vunpack.c.h.b16 %v2799
    %v3154 = vunpack.c.l.b16 %v2800
    %v3155 = vunpack.c.h.b16 %v2800
    %v3156 = vunpack.c.l.b16 %v2801
    %v3157 = vunpack.c.h.b16 %v2801
    %v3158 = vunpack.c.l.b16 %v2802
    %v3159 = vunpack.c.h.b16 %v2802
    %v3160 = vunpack.c.l.b16 %v2803
    %v3161 = vunpack.c.h.b16 %v2803
    %v3162 = vunpack.c.l.b16 %v2804
    %v3163 = vunpack.c.h.b16 %v2804
    %v3164 = vunpack.c.l.b16 %v2805
    %v3165 = vunpack.c.h.b16 %v2805
    %v3166 = vunpack.c.l.b16 %v2806
    %v3167 = vunpack.c.h.b16 %v2806
    %v3168 = vunpack.c.l.b16 %v2807
    %v3169 = vunpack.c.h.b16 %v2807
    %v3170 = vunpack.c.l.b16 %v2808
    %v3171 = vunpack.c.h.b16 %v2808
    %v3172 = vunpack.c.l.b16 %v2809
    %v3173 = vunpack.c.h.b16 %v2809
    %v3174 = vunpack.c.l.b16 %v2810
    %v3175 = vunpack.c.h.b16 %v2810
    %v3176 = vunpack.c.l.b16 %v2811
    %v3177 = vunpack.c.h.b16 %v2811
    %v3178 = vunpack.c.l.b16 %v2812
    %v3179 = vunpack.c.h.b16 %v2812
    %v3180 = vunpack.c.l.b16 %v2813
    %v3181 = vunpack.c.h.b16 %v2813
    %v3182 = vunpack.c.l.b16 %v2814
    %v3183 = vunpack.c.h.b16 %v2814
    %v3184 = vunpack.c.l.b16 %v2815
    %v3185 = vunpack.c.h.b16 %v2815
    %v3186 = vunpack.c.l.b16 %v2816
    %v3187 = vunpack.c.h.b16 %v2816
    %v3188 = vunpack.c.l.b16 %v2817
    %v3189 = vunpack.c.h.b16 %v2817
    %v3190 = vunpack.c.l.b16 %v2818
    %v3191 = vunpack.c.h.b16 %v2818
    %v3192 = vunpack.c.l.b16 %v2819
    %v3193 = vunpack.c.h.b16 %v2819
    %v3194 = vunpack.c.l.b16 %v2820
    %v3195 = vunpack.c.h.b16 %v2820
    %v3196 = vunpack.c.l.b16 %v2821
    %v3197 = vunpack.c.h.b16 %v2821
    %v3198 = vunpack.c.l.b16 %v2822
    %v3199 = vunpack.c.h.b16 %v2822
    %v3200 = vunpack.c.l.b16 %v2823
    %v3201 = vunpack.c.h.b16 %v2823
    %v3202 = vunpack.c.l.b16 %v2824
    %v3203 = vunpack.c.h.b16 %v2824
    %v3204 = vunpack.c.l.b16 %v2825
    %v3205 = vunpack.c.h.b16 %v2825
    %v3206 = vunpack.c.l.b16 %v2826
    %v3207 = vunpack.c.h.b16 %v2826
    %v3208 = vunpack.c.l.b16 %v2827
    %v3209 = vunpack.c.h.b16 %v2827
    %v3210 = vunpack.c.l.b16 %v2828
    %v3211 = vunpack.c.h.b16 %v2828
    %v3212 = vunpack.c.l.b16 %v2829
    %v3213 = vunpack.c.h.b16 %v2829
    %v3214 = vunpack.c.l.b16 %v2830
    %v3215 = vunpack.c.h.b16 %v2830
    %v3216 = vunpack.c.l.b16 %v2831
    %v3217 = vunpack.c.h.b16 %v2831
    %v3218 = vunpack.c.l.b16 %v2832
    %v3219 = vunpack.c.h.b16 %v2832
    %v3220 = vunpack.c.l.b16 %v2833
    %v3221 = vunpack.c.h.b16 %v2833
    %v3222 = vunpack.c.l.b16 %v2834
    %v3223 = vunpack.c.h.b16 %v2834
    %v3224 = vunpack.c.l.b16 %v2835
    %v3225 = vunpack.c.h.b16 %v2835
    %v3226 = vunpack.c.l.b16 %v2836
    %v3227 = vunpack.c.h.b16 %v2836
    %v3228 = vunpack.c.l.b16 %v2837
    %v3229 = vunpack.c.h.b16 %v2837
    %v3230 = vunpack.c.l.b16 %v2838
    %v3231 = vunpack.c.h.b16 %v2838
    %v3232 = vunpack.c.l.b16 %v2839
    %v3233 = vunpack.c.h.b16 %v2839
    %v3234 = vunpack.c.l.b16 %v2840
    %v3235 = vunpack.c.h.b16 %v2840
    %v3236 = vunpack.c.l.b16 %v2841
    %v3237 = vunpack.c.h.b16 %v2841
    %v3238 = vunpack.c.l.b16 %v2842
    %v3239 = vunpack.c.h.b16 %v2842
    %v3240 = vunpack.c.l.b16 %v2843
    %v3241 = vunpack.c.h.b16 %v2843
    %v3242 = vunpack.c.l.b16 %v2844
    %v3243 = vunpack.c.h.b16 %v2844
    %v3244 = vunpack.c.l.b16 %v2845
    %v3245 = vunpack.c.h.b16 %v2845
    %v3246 = vunpack.c.l.b16 %v2846
    %v3247 = vunpack.c.h.b16 %v2846
    %v3248 = vunpack.c.l.b16 %v2847
    %v3249 = vunpack.c.h.b16 %v2847
    %v3250 = vunpack.c.l.b16 %v2848
    %v3251 = vunpack.c.h.b16 %v2848
    %v3252 = vunpack.c.l.b16 %v2849
    %v3253 = vunpack.c.h.b16 %v2849
    %v3254 = vunpack.c.l.b16 %v2850
    %v3255 = vunpack.c.h.b16 %v2850
    %v3256 = vunpack.c.l.b16 %v2851
    %v3257 = vunpack.c.h.b16 %v2851
    %v3258 = vunpack.c.l.b16 %v2852
    %v3259 = vunpack.c.h.b16 %v2852
    %v3260 = vpack.c.b16 %v3008, %v3004
    %v3261 = vpack.c.b16 %v3009, %v3005
    %v3262 = vpack.c.b16 %v3010, %v3006
    %v3263 = vpack.c.b16 %v3011, %v3007
    %v3264 = vpack.c.b16 %v3016, %v3012
    %v3265 = vpack.c.b16 %v3017, %v3013
    %v3266 = vpack.c.b16 %v3018, %v3014
    %v3267 = vpack.c.b16 %v3019, %v3015
    %v3268 = vpack.c.b16 %v3024, %v3020
    %v3269 = vpack.c.b16 %v3025, %v3021
    %v3270 = vpack.c.b16 %v3026, %v3022
    %v3271 = vpack.c.b16 %v3027, %v3023
    %v3272 = vpack.c.b16 %v3032, %v3028
    %v3273 = vpack.c.b16 %v3033, %v3029
    %v3274 = vpack.c.b16 %v3034, %v3030
    %v3275 = vpack.c.b16 %v3035, %v3031
    %v3276 = vpack.c.b16 %v3040, %v3036
    %v3277 = vpack.c.b16 %v3041, %v3037
    %v3278 = vpack.c.b16 %v3042, %v3038
    %v3279 = vpack.c.b16 %v3043, %v3039
    %v3280 = vpack.c.b16 %v3048, %v3044
    %v3281 = vpack.c.b16 %v3049, %v3045
    %v3282 = vpack.c.b16 %v3050, %v3046
    %v3283 = vpack.c.b16 %v3051, %v3047
    %v3284 = vpack.c.b16 %v3056, %v3052
    %v3285 = vpack.c.b16 %v3057, %v3053
    %v3286 = vpack.c.b16 %v3058, %v3054
    %v3287 = vpack.c.b16 %v3059, %v3055
    %v3288 = vpack.c.b16 %v3064, %v3060
    %v3289 = vpack.c.b16 %v3065, %v3061
    %v3290 = vpack.c.b16 %v3066, %v3062
    %v3291 = vpack.c.b16 %v3067, %v3063
    %v3292 = vpack.c.b16 %v3072, %v3068
    %v3293 = vpack.c.b16 %v3073, %v3069
    %v3294 = vpack.c.b16 %v3074, %v3070
    %v3295 = vpack.c.b16 %v3075, %v3071
    %v3296 = vpack.c.b16 %v3080, %v3076
    %v3297 = vpack.c.b16 %v3081, %v3077
    %v3298 = vpack.c.b16 %v3082, %v3078
    %v3299 = vpack.c.b16 %v3083, %v3079
    %v3300 = vpack.c.b16 %v3088, %v3084
    %v3301 = vpack.c.b16 %v3089, %v3085
    %v3302 = vpack.c.b16 %v3090, %v3086
    %v3303 = vpack.c.b16 %v3091, %v3087
    %v3304 = vpack.c.b16 %v3096, %v3092
    %v3305 = vpack.c.b16 %v3097, %v3093
    %v3306 = vpack.c.b16 %v3098, %v3094
    %v3307 = vpack.c.b16 %v3099, %v3095
    %v3308 = vpack.c.b16 %v3104, %v3100
    %v3309 = vpack.c.b16 %v3105, %v3101
    %v3310 = vpack.c.b16 %v3106, %v3102
    %v3311 = vpack.c.b16 %v3107, %v3103
    %v3312 = vpack.c.b16 %v3112, %v3108
    %v3313 = vpack.c.b16 %v3113, %v3109
    %v3314 = vpack.c.b16 %v3114, %v3110
    %v3315 = vpack.c.b16 %v3115, %v3111
    %v3316 = vpack.c.b16 %v3120, %v3116
    %v3317 = vpack.c.b16 %v3121, %v3117
    %v3318 = vpack.c.b16 %v3122, %v3118
    %v3319 = vpack.c.b16 %v3123, %v3119
    %v3320 = vpack.c.b16 %v3128, %v3124
    %v3321 = vpack.c.b16 %v3129, %v3125
    %v3322 = vpack.c.b16 %v3130, %v3126
    %v3323 = vpack.c.b16 %v3131, %v3127
    %v3324 = vpack.c.b16 %v3136, %v3132
    %v3325 = vpack.c.b16 %v3137, %v3133
    %v3326 = vpack.c.b16 %v3138, %v3134
    %v3327 = vpack.c.b16 %v3139, %v3135
    %v3328 = vpack.c.b16 %v3144, %v3140
    %v3329 = vpack.c.b16 %v3145, %v3141
    %v3330 = vpack.c.b16 %v3146, %v3142
    %v3331 = vpack.c.b16 %v3147, %v3143
    %v3332 = vpack.c.b16 %v3152, %v3148
    %v3333 = vpack.c.b16 %v3153, %v3149
    %v3334 = vpack.c.b16 %v3154, %v3150
    %v3335 = vpack.c.b16 %v3155, %v3151
    %v3336 = vpack.c.b16 %v3160, %v3156
    %v3337 = vpack.c.b16 %v3161, %v3157
    %v3338 = vpack.c.b16 %v3162, %v3158
    %v3339 = vpack.c.b16 %v3163, %v3159
    %v3340 = vpack.c.b16 %v3168, %v3164
    %v3341 = vpack.c.b16 %v3169, %v3165
    %v3342 = vpack.c.b16 %v3170, %v3166
    %v3343 = vpack.c.b16 %v3171, %v3167
    %v3344 = vpack.c.b16 %v3176, %v3172
    %v3345 = vpack.c.b16 %v3177, %v3173
    %v3346 = vpack.c.b16 %v3178, %v3174
    %v3347 = vpack.c.b16 %v3179, %v3175
    %v3348 = vpack.c.b16 %v3184, %v3180
    %v3349 = vpack.c.b16 %v3185, %v3181
    %v3350 = vpack.c.b16 %v3186, %v3182
    %v3351 = vpack.c.b16 %v3187, %v3183
    %v3352 = vpack.c.b16 %v3192, %v3188
    %v3353 = vpack.c.b16 %v3193, %v3189
    %v3354 = vpack.c.b16 %v3194, %v3190
    %v3355 = vpack.c.b16 %v3195, %v3191
    %v3356 = vpack.c.b16 %v3200, %v3196
    %v3357 = vpack.c.b16 %v3201, %v3197
    %v3358 = vpack.c.b16 %v3202, %v3198
    %v3359 = vpack.c.b16 %v3203, %v3199
    %v3360 = vpack.c.b16 %v3208, %v3204
    %v3361 = vpack.c.b16 %v3209, %v3205
    %v3362 = vpack.c.b16 %v3210, %v3206
    %v3363 = vpack.c.b16 %v3211, %v3207
    %v3364 = vpack.c.b16 %v3216, %v3212
    %v3365 = vpack.c.b16 %v3217, %v3213
    %v3366 = vpack.c.b16 %v3218, %v3214
    %v3367 = vpack.c.b16 %v3219, %v3215
    %v3368 = vpack.c.b16 %v3224, %v3220
    %v3369 = vpack.c.b16 %v3225, %v3221
    %v3370 = vpack.c.b16 %v3226, %v3222
    %v3371 = vpack.c.b16 %v3227, %v3223
    %v3372 = vpack.c.b16 %v3232, %v3228
    %v3373 = vpack.c.b16 %v3233, %v3229
    %v3374 = vpack.c.b16 %v3234, %v3230
    %v3375 = vpack.c.b16 %v3235, %v3231
    %v3376 = vpack.c.b16 %v3240, %v3236
    %v3377 = vpack.c.b16 %v3241, %v3237
    %v3378 = vpack.c.b16 %v3242, %v3238
    %v3379 = vpack.c.b16 %v3243, %v3239
    %v3380 = vpack.c.b16 %v3248, %v3244
    %v3381 = vpack.c.b16 %v3249, %v3245
    %v3382 = vpack.c.b16 %v3250, %v3246
    %v3383 = vpack.c.b16 %v3251, %v3247
    %v3384 = vpack.c.b16 %v3256, %v3252
    %v3385 = vpack.c.b16 %v3257, %v3253
    %v3386 = vpack.c.b16 %v3258, %v3254
    %v3387 = vpack.c.b16 %v3259, %v3255
    %3516 = vmatprep.subr.bf16.mxu0 %v3261
    %3517 = vmatpush1.bf16.msra.mxu0 %v3260
    %3518 = vmatprep.subr.bf16.mxu0 %v3265
    %3519 = vmatpush1.bf16.msra.mxu0 %v3264
    %3520 = vmatprep.subr.bf16.mxu0 %v3269
    %3521 = vmatpush1.bf16.msra.mxu0 %v3268
    %3522 = vmatprep.subr.bf16.mxu0 %v3273
    %3523 = vmatpush1.bf16.msra.mxu0 %v3272
    %3524 = vmatprep.subr.bf16.mxu0 %v3277
    %3525 = vmatpush1.bf16.msra.mxu0 %v3276
    %3526 = vmatprep.subr.bf16.mxu0 %v3281
    %3527 = vmatpush1.bf16.msra.mxu0 %v3280
    %3528 = vmatprep.subr.bf16.mxu0 %v3285
    %3529 = vmatpush1.bf16.msra.mxu0 %v3284
    %3530 = vmatprep.subr.bf16.mxu0 %v3289
    %3531 = vmatpush1.bf16.msra.mxu0 %v3288
    %3532 = vmatprep.subr.bf16.mxu0 %v3293
    %3533 = vmatpush1.bf16.msra.mxu0 %v3292
    %3534 = vmatprep.subr.bf16.mxu0 %v3297
    %3535 = vmatpush1.bf16.msra.mxu0 %v3296
    %3536 = vmatprep.subr.bf16.mxu0 %v3301
    %3537 = vmatpush1.bf16.msra.mxu0 %v3300
    %3538 = vmatprep.subr.bf16.mxu0 %v3305
    %3539 = vmatpush1.bf16.msra.mxu0 %v3304
    %3540 = vmatprep.subr.bf16.mxu0 %v3309
    %3541 = vmatpush1.bf16.msra.mxu0 %v3308
    %3542 = vmatprep.subr.bf16.mxu0 %v3313
    %3543 = vmatpush1.bf16.msra.mxu0 %v3312
    %3544 = vmatprep.subr.bf16.mxu0 %v3317
    %3545 = vmatpush1.bf16.msra.mxu0 %v3316
    %3546 = vmatprep.subr.bf16.mxu0 %v3321
    %3547 = vmatpush1.bf16.msra.mxu0 %v3320
    %3548 = vmatprep.mubr.bf16.mxu0 %v2722
    %3549 = vmatmul.mubr.bf16.gmra.mrb[0].mxu0 %v2721
    %v3550 = vpop.f32.mrb[0].mxu0
    %v3551 = vadd.f32 %v2859, %v3550
    %v3552 = vpop.f32.mrb[0].mxu0
    %v3553 = vadd.f32 %v2863, %v3552
    %v3554 = vpop.f32.mrb[0].mxu0
    %v3555 = vadd.f32 %v2859, %v3554
    %v3556 = vpop.f32.mrb[0].mxu0
    %v3557 = vadd.f32 %v2863, %v3556
    %3558 = vdwg.mxu0
    %3559 = vmatprep.subr.bf16.mxu0 %v3325
    %3560 = vmatpush1.bf16.msra.mxu0 %v3324
    %3561 = vmatprep.subr.bf16.mxu0 %v3329
    %3562 = vmatpush1.bf16.msra.mxu0 %v3328
    %3563 = vmatprep.subr.bf16.mxu0 %v3333
    %3564 = vmatpush1.bf16.msra.mxu0 %v3332
    %3565 = vmatprep.subr.bf16.mxu0 %v3337
    %3566 = vmatpush1.bf16.msra.mxu0 %v3336
    %3567 = vmatprep.subr.bf16.mxu0 %v3341
    %3568 = vmatpush1.bf16.msra.mxu0 %v3340
    %3569 = vmatprep.subr.bf16.mxu0 %v3345
    %3570 = vmatpush1.bf16.msra.mxu0 %v3344
    %3571 = vmatprep.subr.bf16.mxu0 %v3349
    %3572 = vmatpush1.bf16.msra.mxu0 %v3348
    %3573 = vmatprep.subr.bf16.mxu0 %v3353
    %3574 = vmatpush1.bf16.msra.mxu0 %v3352
    %3575 = vmatprep.subr.bf16.mxu0 %v3357
    %3576 = vmatpush1.bf16.msra.mxu0 %v3356
    %3577 = vmatprep.subr.bf16.mxu0 %v3361
    %3578 = vmatpush1.bf16.msra.mxu0 %v3360
    %3579 = vmatprep.subr.bf16.mxu0 %v3365
    %3580 = vmatpush1.bf16.msra.mxu0 %v3364
    %3581 = vmatprep.subr.bf16.mxu0 %v3369
    %3582 = vmatpush1.bf16.msra.mxu0 %v3368
    %3583 = vmatprep.subr.bf16.mxu0 %v3373
    %3584 = vmatpush1.bf16.msra.mxu0 %v3372
    %3585 = vmatprep.subr.bf16.mxu0 %v3377
    %3586 = vmatpush1.bf16.msra.mxu0 %v3376
    %3587 = vmatprep.subr.bf16.mxu0 %v3381
    %3588 = vmatpush1.bf16.msra.mxu0 %v3380
    %3589 = vmatprep.subr.bf16.mxu0 %v3385
    %3590 = vmatpush1.bf16.msra.mxu0 %v3384
    %3591 = vmatprep.mubr.bf16.mxu0 %v2724
    %3592 = vmatmul.mubr.bf16.gmra.mrb[0].mxu0 %v2723
    %v3593 = vpop.f32.mrb[0].mxu0
    %v3594 = vadd.f32 %v3551, %v3593
    %v3595 = vpop.f32.mrb[0].mxu0
    %v3596 = vadd.f32 %v3553, %v3595
    %v3597 = vpop.f32.mrb[0].mxu0
    %v3598 = vadd.f32 %v3555, %v3597
    %v3599 = vpop.f32.mrb[0].mxu0
    %v3600 = vadd.f32 %v3557, %v3599
    %3601 = vdwg.mxu0
    %3602 = vmatprep.subr.bf16.mxu0 %v3263
    %3603 = vmatpush1.bf16.msra.mxu0 %v3262
    %3604 = vmatprep.subr.bf16.mxu0 %v3267
    %3605 = vmatpush1.bf16.msra.mxu0 %v3266
    %3606 = vmatprep.subr.bf16.mxu0 %v3271
    %3607 = vmatpush1.bf16.msra.mxu0 %v3270
    %3608 = vmatprep.subr.bf16.mxu0 %v3275
    %3609 = vmatpush1.bf16.msra.mxu0 %v3274
    %3610 = vmatprep.subr.bf16.mxu0 %v3279
    %3611 = vmatpush1.bf16.msra.mxu0 %v3278
    %3612 = vmatprep.subr.bf16.mxu0 %v3283
    %3613 = vmatpush1.bf16.msra.mxu0 %v3282
    %3614 = vmatprep.subr.bf16.mxu0 %v3287
    %3615 = vmatpush1.bf16.msra.mxu0 %v3286
    %3616 = vmatprep.subr.bf16.mxu0 %v3291
    %3617 = vmatpush1.bf16.msra.mxu0 %v3290
    %3618 = vmatprep.subr.bf16.mxu0 %v3295
    %3619 = vmatpush1.bf16.msra.mxu0 %v3294
    %3620 = vmatprep.subr.bf16.mxu0 %v3299
    %3621 = vmatpush1.bf16.msra.mxu0 %v3298
    %3622 = vmatprep.subr.bf16.mxu0 %v3303
    %3623 = vmatpush1.bf16.msra.mxu0 %v3302
    %3624 = vmatprep.subr.bf16.mxu0 %v3307
    %3625 = vmatpush1.bf16.msra.mxu0 %v3306
    %3626 = vmatprep.subr.bf16.mxu0 %v3311
    %3627 = vmatpush1.bf16.msra.mxu0 %v3310
    %3628 = vmatprep.subr.bf16.mxu0 %v3315
    %3629 = vmatpush1.bf16.msra.mxu0 %v3314
    %3630 = vmatprep.subr.bf16.mxu0 %v3319
    %3631 = vmatpush1.bf16.msra.mxu0 %v3318
    %3632 = vmatprep.subr.bf16.mxu0 %v3323
    %3633 = vmatpush1.bf16.msra.mxu0 %v3322
    %3634 = vmatprep.mubr.bf16.mxu0 %v2722
    %3635 = vmatmul.mubr.bf16.gmra.mrb[0].mxu0 %v2721
    %v3636 = vpop.f32.mrb[0].mxu0
    %v3637 = vadd.f32 %v2867, %v3636
    %v3638 = vpop.f32.mrb[0].mxu0
    %v3639 = vadd.f32 %v2871, %v3638
    %v3640 = vpop.f32.mrb[0].mxu0
    %v3641 = vadd.f32 %v2867, %v3640
    %v3642 = vpop.f32.mrb[0].mxu0
    %v3643 = vadd.f32 %v2871, %v3642
    %3644 = vdwg.mxu0
    %3645 = vmatprep.subr.bf16.mxu0 %v3327
    %3646 = vmatpush1.bf16.msra.mxu0 %v3326
    %3647 = vmatprep.subr.bf16.mxu0 %v3331
    %3648 = vmatpush1.bf16.msra.mxu0 %v3330
    %3649 = vmatprep.subr.bf16.mxu0 %v3335
    %3650 = vmatpush1.bf16.msra.mxu0 %v3334
    %3651 = vmatprep.subr.bf16.mxu0 %v3339
    %3652 = vmatpush1.bf16.msra.mxu0 %v3338
    %3653 = vmatprep.subr.bf16.mxu0 %v3343
    %3654 = vmatpush1.bf16.msra.mxu0 %v3342
    %3655 = vmatprep.subr.bf16.mxu0 %v3347
    %3656 = vmatpush1.bf16.msra.mxu0 %v3346
    %3657 = vmatprep.subr.bf16.mxu0 %v3351
    %3658 = vmatpush1.bf16.msra.mxu0 %v3350
    %3659 = vmatprep.subr.bf16.mxu0 %v3355
    %3660 = vmatpush1.bf16.msra.mxu0 %v3354
    %3661 = vmatprep.subr.bf16.mxu0 %v3359
    %3662 = vmatpush1.bf16.msra.mxu0 %v3358
    %3663 = vmatprep.subr.bf16.mxu0 %v3363
    %3664 = vmatpush1.bf16.msra.mxu0 %v3362
    %3665 = vmatprep.subr.bf16.mxu0 %v3367
    %3666 = vmatpush1.bf16.msra.mxu0 %v3366
    %3667 = vmatprep.subr.bf16.mxu0 %v3371
    %3668 = vmatpush1.bf16.msra.mxu0 %v3370
    %3669 = vmatprep.subr.bf16.mxu0 %v3375
    %3670 = vmatpush1.bf16.msra.mxu0 %v3374
    %3671 = vmatprep.subr.bf16.mxu0 %v3379
    %3672 = vmatpush1.bf16.msra.mxu0 %v3378
    %3673 = vmatprep.subr.bf16.mxu0 %v3383
    %3674 = vmatpush1.bf16.msra.mxu0 %v3382
    %3675 = vmatprep.subr.bf16.mxu0 %v3387
    %3676 = vmatpush1.bf16.msra.mxu0 %v3386
    %3677 = vmatprep.mubr.bf16.mxu0 %v2724
    %3678 = vmatmul.mubr.bf16.gmra.mrb[0].mxu0 %v2723
    %v3679 = vpop.f32.mrb[0].mxu0
    %v3680 = vadd.f32 %v3637, %v3679
    %v3681 = vpop.f32.mrb[0].mxu0
    %v3682 = vadd.f32 %v3639, %v3681
    %v3683 = vpop.f32.mrb[0].mxu0
    %v3684 = vadd.f32 %v3641, %v3683
    %v3685 = vpop.f32.mrb[0].mxu0
    %v3686 = vadd.f32 %v3643, %v3685
    %3687 = vdwg.mxu0
    %v3688 = vmul.f32 %v3594, 0.5
    %v3689 = vmul.f32 %v3596, 0.5
    %v3690 = vmul.f32 %v3680, 0.5
    %v3691 = vmul.f32 %v3682, 0.5
    %v3692 = vmul.f32 %v3598, 0.5
    %v3693 = vmul.f32 %v3600, 0.5
    %v3694 = vmul.f32 %v3684, 0.5
    %v3695 = vmul.f32 %v3686, 0.5
    %v3696 = vtanh.pop %v3688
    %v3697 = vtanh.pop %v3689
    %v3698 = vtanh.pop %v3690
    %v3699 = vtanh.pop %v3691
    %v3700 = vtanh.pop %v3692
    %v3701 = vtanh.pop %v3693
    %v3702 = vtanh.pop %v3694
    %v3703 = vtanh.pop %v3695
    %v3704 = vadd.f32 %v3696, 1.0
    %v3705 = vadd.f32 %v3697, 1.0
    %v3706 = vadd.f32 %v3698, 1.0
    %v3707 = vadd.f32 %v3699, 1.0
    %v3708 = vadd.f32 %v3700, 1.0
    %v3709 = vadd.f32 %v3701, 1.0
    %v3710 = vadd.f32 %v3702, 1.0
    %v3711 = vadd.f32 %v3703, 1.0
    %v3712 = vmul.f32 %v3704, 0.5
    %v3713 = vmul.f32 %v3705, 0.5
    %v3714 = vmul.f32 %v3706, 0.5
    %v3715 = vmul.f32 %v3707, 0.5
    %v3716 = vmul.f32 %v3708, 0.5
    %v3717 = vmul.f32 %v3709, 0.5
    %v3718 = vmul.f32 %v3710, 0.5
    %v3719 = vmul.f32 %v3711, 0.5
    %v3720 = vmul.f32 %v3594, %v3712
    %v3721 = vmul.f32 %v3596, %v3713
    %v3722 = vmul.f32 %v3680, %v3714
    %v3723 = vmul.f32 %v3682, %v3715
    %v3724 = vmul.f32 %v3598, %v3716
    %v3725 = vmul.f32 %v3600, %v3717
    %v3726 = vmul.f32 %v3684, %v3718
    %v3727 = vmul.f32 %v3686, %v3719
    %v3728 = vpack.c.bf16 %v3724, %v3720
    %v3729 = vpack.c.bf16 %v3725, %v3721
    %v3730 = vpack.c.bf16 %v3726, %v3722
    %v3731 = vpack.c.bf16 %v3727, %v3723
    %v3732 = vld [vmem:[%s3 + $0x140] sm:$0xf]
    %v3733 = vld [vmem:[%s3 + $0x144] sm:$0xf]
    %v3734 = vld [vmem:[%s3 + $0x148] sm:$0xf]
    %v3735 = vld [vmem:[%s3 + $0x14c] sm:$0xf]
    %v3736 = vld [vmem:[%s3 + $0x150] sm:$0xf]
    %v3737 = vld [vmem:[%s3 + $0x154] sm:$0xf]
    %v3738 = vld [vmem:[%s3 + $0x158] sm:$0xf]
    %v3739 = vld [vmem:[%s3 + $0x15c] sm:$0xf]
    %v3740 = vld [vmem:[%s3 + $0x160] sm:$0xf]
    %v3741 = vld [vmem:[%s3 + $0x164] sm:$0xf]
    %v3742 = vld [vmem:[%s3 + $0x168] sm:$0xf]
    %v3743 = vld [vmem:[%s3 + $0x16c] sm:$0xf]
    %v3744 = vld [vmem:[%s3 + $0x170] sm:$0xf]
    %v3745 = vld [vmem:[%s3 + $0x174] sm:$0xf]
    %v3746 = vld [vmem:[%s3 + $0x178] sm:$0xf]
    %v3747 = vld [vmem:[%s3 + $0x17c] sm:$0xf]
    %v3748 = vld [vmem:[%s3 + $0x180] sm:$0xf]
    %v3749 = vld [vmem:[%s3 + $0x184] sm:$0xf]
    %v3750 = vld [vmem:[%s3 + $0x188] sm:$0xf]
    %v3751 = vld [vmem:[%s3 + $0x18c] sm:$0xf]
    %v3752 = vld [vmem:[%s3 + $0x190] sm:$0xf]
    %v3753 = vld [vmem:[%s3 + $0x194] sm:$0xf]
    %v3754 = vld [vmem:[%s3 + $0x198] sm:$0xf]
    %v3755 = vld [vmem:[%s3 + $0x19c] sm:$0xf]
    %v3756 = vld [vmem:[%s3 + $0x1a0] sm:$0xf]
    %v3757 = vld [vmem:[%s3 + $0x1a4] sm:$0xf]
    %v3758 = vld [vmem:[%s3 + $0x1a8] sm:$0xf]
    %v3759 = vld [vmem:[%s3 + $0x1ac] sm:$0xf]
    %v3760 = vld [vmem:[%s3 + $0x1b0] sm:$0xf]
    %v3761 = vld [vmem:[%s3 + $0x1b4] sm:$0xf]
    %v3762 = vld [vmem:[%s3 + $0x1b8] sm:$0xf]
    %v3763 = vld [vmem:[%s3 + $0x1bc] sm:$0xf]
    %v3764 = vld [vmem:[%s3 + $0x1c0] sm:$0xf]
    %v3765 = vld [vmem:[%s3 + $0x1c4] sm:$0xf]
    %v3766 = vld [vmem:[%s3 + $0x1c8] sm:$0xf]
    %v3767 = vld [vmem:[%s3 + $0x1cc] sm:$0xf]
    %v3768 = vld [vmem:[%s3 + $0x1d0] sm:$0xf]
    %v3769 = vld [vmem:[%s3 + $0x1d4] sm:$0xf]
    %v3770 = vld [vmem:[%s3 + $0x1d8] sm:$0xf]
    %v3771 = vld [vmem:[%s3 + $0x1dc] sm:$0xf]
    %v3772 = vld [vmem:[%s3 + $0x1e0] sm:$0xf]
    %v3773 = vld [vmem:[%s3 + $0x1e4] sm:$0xf]
    %v3774 = vld [vmem:[%s3 + $0x1e8] sm:$0xf]
    %v3775 = vld [vmem:[%s3 + $0x1ec] sm:$0xf]
    %v3776 = vld [vmem:[%s3 + $0x1f0] sm:$0xf]
    %v3777 = vld [vmem:[%s3 + $0x1f4] sm:$0xf]
    %v3778 = vld [vmem:[%s3 + $0x1f8] sm:$0xf]
    %v3779 = vld [vmem:[%s3 + $0x1fc] sm:$0xf]
    %v3780 = vld [vmem:[%s3 + $0x200] sm:$0xf]
    %v3781 = vld [vmem:[%s3 + $0x204] sm:$0xf]
    %v3782 = vld [vmem:[%s3 + $0x208] sm:$0xf]
    %v3783 = vld [vmem:[%s3 + $0x20c] sm:$0xf]
    %v3784 = vld [vmem:[%s3 + $0x210] sm:$0xf]
    %v3785 = vld [vmem:[%s3 + $0x214] sm:$0xf]
    %v3786 = vld [vmem:[%s3 + $0x218] sm:$0xf]
    %v3787 = vld [vmem:[%s3 + $0x21c] sm:$0xf]
    %v3788 = vld [vmem:[%s3 + $0x220] sm:$0xf]
    %v3789 = vld [vmem:[%s3 + $0x224] sm:$0xf]
    %v3790 = vld [vmem:[%s3 + $0x228] sm:$0xf]
    %v3791 = vld [vmem:[%s3 + $0x22c] sm:$0xf]
    %v3792 = vld [vmem:[%s3 + $0x230] sm:$0xf]
    %v3793 = vld [vmem:[%s3 + $0x234] sm:$0xf]
    %v3794 = vld [vmem:[%s3 + $0x238] sm:$0xf]
    %v3795 = vld [vmem:[%s3 + $0x23c] sm:$0xf]
    %v3796 = vld [vmem:[#allocation4 + $0x7] ss:$0 sm:$0xff]
    %v3861 = vunpack.c.l.b16 %v3732
    %v3862 = vunpack.c.l.b16 %v3733
    %v3863 = vunpack.c.l.b16 %v3734
    %v3864 = vunpack.c.l.b16 %v3735
    %v3865 = vunpack.c.l.b16 %v3736
    %v3866 = vunpack.c.l.b16 %v3737
    %v3867 = vunpack.c.l.b16 %v3738
    %v3868 = vunpack.c.l.b16 %v3739
    %v3869 = vunpack.c.l.b16 %v3740
    %v3870 = vunpack.c.l.b16 %v3741
    %v3871 = vunpack.c.l.b16 %v3742
    %v3872 = vunpack.c.l.b16 %v3743
    %v3873 = vunpack.c.l.b16 %v3744
    %v3874 = vunpack.c.l.b16 %v3745
    %v3875 = vunpack.c.l.b16 %v3746
    %v3876 = vunpack.c.l.b16 %v3747
    %v3877 = vunpack.c.l.b16 %v3748
    %v3878 = vunpack.c.l.b16 %v3749
    %v3879 = vunpack.c.l.b16 %v3750
    %v3880 = vunpack.c.l.b16 %v3751
    %v3881 = vunpack.c.l.b16 %v3752
    %v3882 = vunpack.c.l.b16 %v3753
    %v3883 = vunpack.c.l.b16 %v3754
    %v3884 = vunpack.c.l.b16 %v3755
    %v3885 = vunpack.c.l.b16 %v3756
    %v3886 = vunpack.c.l.b16 %v3757
    %v3887 = vunpack.c.l.b16 %v3758
    %v3888 = vunpack.c.l.b16 %v3759
    %v3889 = vunpack.c.l.b16 %v3760
    %v3890 = vunpack.c.l.b16 %v3761
    %v3891 = vunpack.c.l.b16 %v3762
    %v3892 = vunpack.c.l.b16 %v3763
    %v3893 = vunpack.c.l.b16 %v3764
    %v3894 = vunpack.c.l.b16 %v3765
    %v3895 = vunpack.c.l.b16 %v3766
    %v3896 = vunpack.c.l.b16 %v3767
    %v3897 = vunpack.c.l.b16 %v3768
    %v3898 = vunpack.c.l.b16 %v3769
    %v3899 = vunpack.c.l.b16 %v3770
    %v3900 = vunpack.c.l.b16 %v3771
    %v3901 = vunpack.c.l.b16 %v3772
    %v3902 = vunpack.c.l.b16 %v3773
    %v3903 = vunpack.c.l.b16 %v3774
    %v3904 = vunpack.c.l.b16 %v3775
    %v3905 = vunpack.c.l.b16 %v3776
    %v3906 = vunpack.c.l.b16 %v3777
    %v3907 = vunpack.c.l.b16 %v3778
    %v3908 = vunpack.c.l.b16 %v3779
    %v3909 = vunpack.c.l.b16 %v3780
    %v3910 = vunpack.c.l.b16 %v3781
    %v3911 = vunpack.c.l.b16 %v3782
    %v3912 = vunpack.c.l.b16 %v3783
    %v3913 = vunpack.c.l.b16 %v3784
    %v3914 = vunpack.c.l.b16 %v3785
    %v3915 = vunpack.c.l.b16 %v3786
    %v3916 = vunpack.c.l.b16 %v3787
    %v3917 = vunpack.c.l.b16 %v3788
    %v3918 = vunpack.c.l.b16 %v3789
    %v3919 = vunpack.c.l.b16 %v3790
    %v3920 = vunpack.c.l.b16 %v3791
    %v3921 = vunpack.c.l.b16 %v3792
    %v3922 = vunpack.c.l.b16 %v3793
    %v3923 = vunpack.c.l.b16 %v3794
    %v3924 = vunpack.c.l.b16 %v3795
    %v3925 = vpack.c.b16 %v3862, %v3861
    %v3926 = vpack.c.b16 %v3864, %v3863
    %v3927 = vpack.c.b16 %v3866, %v3865
    %v3928 = vpack.c.b16 %v3868, %v3867
    %v3929 = vpack.c.b16 %v3870, %v3869
    %v3930 = vpack.c.b16 %v3872, %v3871
    %v3931 = vpack.c.b16 %v3874, %v3873
    %v3932 = vpack.c.b16 %v3876, %v3875
    %v3933 = vpack.c.b16 %v3878, %v3877
    %v3934 = vpack.c.b16 %v3880, %v3879
    %v3935 = vpack.c.b16 %v3882, %v3881
    %v3936 = vpack.c.b16 %v3884, %v3883
    %v3937 = vpack.c.b16 %v3886, %v3885
    %v3938 = vpack.c.b16 %v3888, %v3887
    %v3939 = vpack.c.b16 %v3890, %v3889
    %v3940 = vpack.c.b16 %v3892, %v3891
    %v3941 = vpack.c.b16 %v3894, %v3893
    %v3942 = vpack.c.b16 %v3896, %v3895
    %v3943 = vpack.c.b16 %v3898, %v3897
    %v3944 = vpack.c.b16 %v3900, %v3899
    %v3945 = vpack.c.b16 %v3902, %v3901
    %v3946 = vpack.c.b16 %v3904, %v3903
    %v3947 = vpack.c.b16 %v3906, %v3905
    %v3948 = vpack.c.b16 %v3908, %v3907
    %v3949 = vpack.c.b16 %v3910, %v3909
    %v3950 = vpack.c.b16 %v3912, %v3911
    %v3951 = vpack.c.b16 %v3914, %v3913
    %v3952 = vpack.c.b16 %v3916, %v3915
    %v3953 = vpack.c.b16 %v3918, %v3917
    %v3954 = vpack.c.b16 %v3920, %v3919
    %v3955 = vpack.c.b16 %v3922, %v3921
    %v3956 = vpack.c.b16 %v3924, %v3923
    %3989 = vmatprep.subr.bf16.mxu0 0
    %3990 = vmatpush1.bf16.msra.mxu0 %v3925
    %3991 = vmatprep.subr.bf16.mxu0 0
    %3992 = vmatpush1.bf16.msra.mxu0 %v3926
    %3993 = vmatprep.subr.bf16.mxu0 0
    %3994 = vmatpush1.bf16.msra.mxu0 %v3927
    %3995 = vmatprep.subr.bf16.mxu0 0
    %3996 = vmatpush1.bf16.msra.mxu0 %v3928
    %3997 = vmatprep.subr.bf16.mxu0 0
    %3998 = vmatpush1.bf16.msra.mxu0 %v3929
    %3999 = vmatprep.subr.bf16.mxu0 0
    %4000 = vmatpush1.bf16.msra.mxu0 %v3930
    %4001 = vmatprep.subr.bf16.mxu0 0
    %4002 = vmatpush1.bf16.msra.mxu0 %v3931
    %4003 = vmatprep.subr.bf16.mxu0 0
    %4004 = vmatpush1.bf16.msra.mxu0 %v3932
    %4005 = vmatprep.subr.bf16.mxu0 0
    %4006 = vmatpush1.bf16.msra.mxu0 %v3933
    %4007 = vmatprep.subr.bf16.mxu0 0
    %4008 = vmatpush1.bf16.msra.mxu0 %v3934
    %4009 = vmatprep.subr.bf16.mxu0 0
    %4010 = vmatpush1.bf16.msra.mxu0 %v3935
    %4011 = vmatprep.subr.bf16.mxu0 0
    %4012 = vmatpush1.bf16.msra.mxu0 %v3936
    %4013 = vmatprep.subr.bf16.mxu0 0
    %4014 = vmatpush1.bf16.msra.mxu0 %v3937
    %4015 = vmatprep.subr.bf16.mxu0 0
    %4016 = vmatpush1.bf16.msra.mxu0 %v3938
    %4017 = vmatprep.subr.bf16.mxu0 0
    %4018 = vmatpush1.bf16.msra.mxu0 %v3939
    %4019 = vmatprep.subr.bf16.mxu0 0
    %4020 = vmatpush1.bf16.msra.mxu0 %v3940
    %4021 = vmatprep.mubr.bf16.mxu0 %v3729
    %4022 = vmatmul.mubr.bf16.gmra.mrb[0].mxu0 %v3728
    %v4023 = vpop.f32.mrb[0].mxu0
    %v4024 = vadd.f32 %v3796, %v4023
    %v4025 = vpop.f32.mrb[0].mxu0
    %v4026 = vpop.f32.mrb[0].mxu0
    %v4027 = vadd.f32 %v3796, %v4026
    %v4028 = vpop.f32.mrb[0].mxu0
    %4029 = vdwg.mxu0
    %4030 = vmatprep.subr.bf16.mxu0 0
    %4031 = vmatpush1.bf16.msra.mxu0 %v3941
    %4032 = vmatprep.subr.bf16.mxu0 0
    %4033 = vmatpush1.bf16.msra.mxu0 %v3942
    %4034 = vmatprep.subr.bf16.mxu0 0
    %4035 = vmatpush1.bf16.msra.mxu0 %v3943
    %4036 = vmatprep.subr.bf16.mxu0 0
    %4037 = vmatpush1.bf16.msra.mxu0 %v3944
    %4038 = vmatprep.subr.bf16.mxu0 0
    %4039 = vmatpush1.bf16.msra.mxu0 %v3945
    %4040 = vmatprep.subr.bf16.mxu0 0
    %4041 = vmatpush1.bf16.msra.mxu0 %v3946
    %4042 = vmatprep.subr.bf16.mxu0 0
    %4043 = vmatpush1.bf16.msra.mxu0 %v3947
    %4044 = vmatprep.subr.bf16.mxu0 0
    %4045 = vmatpush1.bf16.msra.mxu0 %v3948
    %4046 = vmatprep.subr.bf16.mxu0 0
    %4047 = vmatpush1.bf16.msra.mxu0 %v3949
    %4048 = vmatprep.subr.bf16.mxu0 0
    %4049 = vmatpush1.bf16.msra.mxu0 %v3950
    %4050 = vmatprep.subr.bf16.mxu0 0
    %4051 = vmatpush1.bf16.msra.mxu0 %v3951
    %4052 = vmatprep.subr.bf16.mxu0 0
    %4053 = vmatpush1.bf16.msra.mxu0 %v3952
    %4054 = vmatprep.subr.bf16.mxu0 0
    %4055 = vmatpush1.bf16.msra.mxu0 %v3953
    %4056 = vmatprep.subr.bf16.mxu0 0
    %4057 = vmatpush1.bf16.msra.mxu0 %v3954
    %4058 = vmatprep.subr.bf16.mxu0 0
    %4059 = vmatpush1.bf16.msra.mxu0 %v3955
    %4060 = vmatprep.subr.bf16.mxu0 0
    %4061 = vmatpush1.bf16.msra.mxu0 %v3956
    %4062 = vmatprep.mubr.bf16.mxu0 %v3731
    %4063 = vmatmul.mubr.bf16.gmra.mrb[0].mxu0 %v3730
    %v4064 = vpop.f32.mrb[0].mxu0
    %v4065 = vadd.f32 %v4024, %v4064
    %v4066 = vpop.f32.mrb[0].mxu0
    %v4067 = vpop.f32.mrb[0].mxu0
    %v4068 = vadd.f32 %v4027, %v4067
    %v4069 = vpop.f32.mrb[0].mxu0
    %4070 = vdwg.mxu0
    %v4071 = vld [vmem:[%s1 + $0x20] sm:$0xff]
    %v4072 = vld [vmem:[%s1 + $0x28] sm:$0xff]
    %v4073 = vadd.f32 %v4065, %v4071
    %v4074 = vadd.f32 %v4068, %v4072
    %v4075 = vadd.f32 %v4073, %v51
    %v4076 = vadd.f32 %v4074, %v51
    %4077 = vst.msk [vmem:[%s5 + $0x20] sm:$0xff] %vm1965, %v4075
    %4078 = vst.msk [vmem:[%s5 + $0x28] sm:$0xff] %vm1965, %v4076
    // Predicated region
    $region30: #{hoi_position_net_v5.1} parent=1 // pred_check
      _
    $region31: #{hoi_position_net_v5.1} parent=1 // pred_check_branch
      %4080 = sbr.rel (0) target = $region33
    $region32: #{hoi_position_net_v5.1} parent=1 // pred_region
      _
    $region33: #{hoi_position_net_v5.1} parent=1 // pred_fallthru
      _
    // Predicated region
    $region34: #{hoi_position_net_v5.1} parent=1 // pred_check
      _
    $region35: #{hoi_position_net_v5.1} parent=1 // pred_check_branch
      %4082 = sbr.rel (0) target = $region37
    $region36: #{hoi_position_net_v5.1} parent=1 // pred_region
      _
    $region37: #{hoi_position_net_v5.1} parent=1 // pred_fallthru
      _
    %4083 = vsyncpa [#allocation3], 1
    %4084 = vsyncpa [#allocation5], 1

</llo_original>
